<compile_context>
chip_gen: v7x
topology: tpu7x:2x2x1
jax: 0.10.0
libtpu: 0.0.40
codegen_flags: <defaults>
</compile_context>

<pallas_src>
import math
import warnings
from functools import partial

import jax
import jax.numpy as jnp
from jax.experimental import pallas as pl
from jax.experimental.pallas import tpu as pltpu


_MASK_VALUE = -1e30  # finite: exp(mask - rowmax) underflows to 0 with no NaN risk


def _single_buffer_mode():
    """Probe once (at import) for BlockSpec(pipeline_mode=pl.Buffered(1))."""
    if not hasattr(pl, "Buffered"):
        return None
    for make in (lambda: pl.Buffered(buffer_count=1), lambda: pl.Buffered(1)):
        try:
            mode = make()
            pl.BlockSpec((8, 128), lambda i: (0, 0), pipeline_mode=mode)
            return mode
        except (TypeError, ValueError):
            continue
    return None


_WEIGHT_PIPELINE_MODE = _single_buffer_mode()


def _layernorm(v, gamma, beta, eps=1e-5):
    # Two-pass (centered) variance: robust against E[x^2]-E[x]^2 cancellation.
    mu = jnp.mean(v, axis=-1, keepdims=True)
    c = v - mu
    var = jnp.mean(c * c, axis=-1, keepdims=True)
    return c * jax.lax.rsqrt(var + eps) * gamma + beta


def block_kernel(x_ref, g1_ref, be1_ref, wqkv_ref, wproj_ref, bproj_ref,
                 g2_ref, be2_ref, w1_ref, b1_ref, w2_ref, b2_ref, o_ref,
                 *, num_heads, n_valid):
    x = x_ref[...]                                   # (Np, C) f32 (batch squeezed)
    n_pad, C = x.shape
    hd = C // num_heads

    # ---------------- attention branch ----------------
    xn = _layernorm(x, g1_ref[0], be1_ref[0])        # f32
    # bf16 operands, f32 MXU accumulation; result cast to bf16 immediately so
    # no f32 (N, 3C) copy stays live next to the bf16 one.  The softmax scale
    # 1/sqrt(hd) is pre-folded into the Q columns of wqkv (prepare_block_params).
    qkv = jnp.dot(xn.astype(jnp.bfloat16), wqkv_ref[...],
                  preferred_element_type=jnp.float32).astype(jnp.bfloat16)

    # One heads-major relayout per operand (only C-aligned lane slices) instead
    # of 3*num_heads sub-128 lane slices inside an unrolled head loop.
    def to_heads(a):                                 # (Np, C) -> (H, Np, hd)
        return jnp.transpose(a.reshape(n_pad, num_heads, hd), (1, 0, 2))

    q = to_heads(qkv[:, :C])
    k = to_heads(qkv[:, C:2 * C])
    v = to_heads(qkv[:, 2 * C:])

    # Batched-over-heads attention (flash-style einsum layout), scores in f32.
    s = jnp.einsum("hqd,hkd->hqk", q, k,
                   preferred_element_type=jnp.float32)          # (H, Np, Np)
    if n_valid != n_pad:                             # mask padded key columns
        kv_idx = jax.lax.broadcasted_iota(jnp.int32, s.shape, 2)
        s = jnp.where(kv_idx < n_valid, s, _MASK_VALUE)
    s = s - jnp.max(s, axis=-1, keepdims=True)
    p = jnp.exp(s)
    # Approx EUP reciprocal: not bit-identical to jax.nn.softmax, but well
    # inside this kernel's bf16-matmul tolerance.
    p = p * pl.reciprocal(jnp.sum(p, axis=-1, keepdims=True), approx=True)

    o_h = jnp.einsum("hqk,hkd->hqd", p.astype(jnp.bfloat16), v,
                     preferred_element_type=jnp.float32)        # (H, Np, hd)
    # Recombine heads once, then ONE full-C-deep output projection matmul.
    o_cat = jnp.transpose(o_h.astype(jnp.bfloat16), (1, 0, 2)).reshape(n_pad, C)
    attn = jnp.dot(o_cat, wproj_ref[...],
                   preferred_element_type=jnp.float32) + bproj_ref[0]
    x1 = x + attn                                    # first residual (f32)

    # ---------------- MLP branch ----------------
    xn2 = _layernorm(x1, g2_ref[0], be2_ref[0])
    h1 = jnp.dot(xn2.astype(jnp.bfloat16), w1_ref[...],
                 preferred_element_type=jnp.float32) + b1_ref[0]
    # Exact erf GELU in f32 (matches nn.GELU default numerics).
    h1 = 0.5 * h1 * (1.0 + jax.lax.erf(h1 * (1.0 / math.sqrt(2.0))))
    h2 = jnp.dot(h1.astype(jnp.bfloat16), w2_ref[...],
                 preferred_element_type=jnp.float32) + b2_ref[0]

    o_ref[...] = (x1 + h2).astype(o_ref.dtype)       # second residual


def _build_specs(n_pad, C, F, weight_mode):
    def const_spec(shape):
        if weight_mode is None:
            return pl.BlockSpec(shape, lambda b: (0, 0))
        return pl.BlockSpec(shape, lambda b: (0, 0), pipeline_mode=weight_mode)

    x_spec = pl.BlockSpec((None, n_pad, C), lambda b: (b, 0, 0))   # batch dim squeezed
    in_specs = [
        x_spec,
        const_spec((1, C)), const_spec((1, C)),          # ln1 gamma / beta
        const_spec((C, 3 * C)),                          # qkv weight (pre-transposed, Q pre-scaled)
        const_spec((C, C)), const_spec((1, C)),          # proj weight / bias
        const_spec((1, C)), const_spec((1, C)),          # ln2 gamma / beta
        const_spec((C, F)), const_spec((1, F)),          # fc1 weight / bias
        const_spec((F, C)), const_spec((1, C)),          # fc2 weight / bias
    ]
    out_specs = pl.BlockSpec((None, n_pad, C), lambda b: (b, 0, 0))
    return in_specs, out_specs


def _vmem_limit_bytes(n_pad, C, F, num_heads):
    # Generation-aware cap with ~20% headroom below physical VMEM:
    # v7x (64 MiB) -> ~51 MiB; v5e/v6e (128 MiB) -> ~102 MiB.
    physical = None
    get_info = getattr(pltpu, "get_tpu_info", None)
    if get_info is not None:
        try:
            physical = int(getattr(get_info(), "vmem_capacity_bytes", 0)) or None
        except Exception:
            physical = None
    if physical is None:
        physical = 64 * 2 ** 20                     # conservative fallback (v7x-sized)
    cap = int(physical * 0.8)

    w_bytes = 2 * (3 * C * C + C * C + 2 * C * F) + 4 * (6 * C + 2 * F)  # bf16 weights (1 buf) + f32 biases
    io_bytes = 2 * 2 * n_pad * C * 4                                     # double-buffered f32 x / out blocks
    work_bytes = 4 * (num_heads * n_pad * n_pad                          # scores / probs
                      + 2 * n_pad * F                                    # MLP hidden
                      + 9 * n_pad * C)                                   # qkv + residuals + temporaries
    need = 2 * (w_bytes + io_bytes + work_bytes)                         # 2x headroom
    return int(min(cap, max(need, 32 * 2 ** 20)))


def prepare_block_params(params, num_heads):
    """One-time weight preprocessing — call once at model init, not per step.
    Folds the softmax 1/sqrt(head_dim) scale into the Q columns of the QKV
    weight and casts matmul weights to bf16 (the kernel still accumulates in
    f32); LayerNorm params and biases stay f32."""
    C = params["wqkv"].shape[0]
    scale = (C // num_heads) ** (-0.5)
    f32 = lambda a: jnp.asarray(a, jnp.float32)
    wqkv = jnp.asarray(params["wqkv"], jnp.float32)
    wqkv = wqkv.at[:, :C].multiply(scale).astype(jnp.bfloat16)
    return {
        "g1": f32(params["g1"]), "be1": f32(params["be1"]),
        "wqkv": wqkv,
        "wproj": jnp.asarray(params["wproj"], jnp.bfloat16),
        "bproj": f32(params["bproj"]),
        "g2": f32(params["g2"]), "be2": f32(params["be2"]),
        "w1": jnp.asarray(params["w1"], jnp.bfloat16), "b1": f32(params["b1"]),
        "w2": jnp.asarray(params["w2"], jnp.bfloat16), "b2": f32(params["b2"]),
    }


def vit_block(x, prepped, num_heads, *, donate_x=False):
    """Fused pre-norm ViT block forward.  `prepped` must come from
    prepare_block_params().  If donate_x=True the input buffer is aliased into
    the output — do not reuse x afterwards."""
    B, N, C = x.shape
    F = prepped["w1"].shape[1]
    assert C % num_heads == 0, "dim must be divisible by num_heads"

    n_pad = -(-N // 8) * 8                     # sublane-align the token axis
    if n_pad != N:
        x_in = jnp.pad(x, ((0, 0), (0, n_pad - N), (0, 0)))
        alias = True                           # padded copy is private: safe to donate
    else:
        x_in = x
        alias = donate_x

    args = (x_in, prepped["g1"], prepped["be1"], prepped["wqkv"],
            prepped["wproj"], prepped["bproj"], prepped["g2"], prepped["be2"],
            prepped["w1"], prepped["b1"], prepped["w2"], prepped["b2"])

    kernel = partial(block_kernel, num_heads=num_heads, n_valid=N)
    cparams = pltpu.CompilerParams(
        dimension_semantics=("parallel",),
        vmem_limit_bytes=_vmem_limit_bytes(n_pad, C, F, num_heads))

    def run(weight_mode):
        in_specs, out_specs = _build_specs(n_pad, C, F, weight_mode)
        return pl.pallas_call(
            kernel,
            out_shape=jax.ShapeDtypeStruct((B, n_pad, C), x.dtype),
            grid_spec=pltpu.PrefetchScalarGridSpec(
                num_scalar_prefetch=0,
                grid=(B,),
                in_specs=in_specs,
                out_specs=out_specs),
            input_output_aliases={0: 0} if alias else {},
            compiler_params=cparams,
        )(*args)

    out = None
    if _WEIGHT_PIPELINE_MODE is not None:
        try:
            out = run(_WEIGHT_PIPELINE_MODE)
        except Exception as e:  # narrow fallback: loud, never silent
            warnings.warn(
                "single-buffered weight BlockSpecs (pl.Buffered(1)) failed to "
                f"lower ({type(e).__name__}); falling back to default "
                "double-buffered weights (2x weight VMEM).", RuntimeWarning)
    if out is None:
        out = run(None)
    return out[:, :N, :] if n_pad != N else out


def reference_block(x, p, num_heads):
    # Pure-JAX f32 reference (mirrors the PyTorch Block forward).
    B, N, C = x.shape
    hd = C // num_heads
    scale = hd ** (-0.5)

    def ln(v, g, b, eps=1e-5):
        mu = jnp.mean(v, axis=-1, keepdims=True)
        var = jnp.mean((v - mu) ** 2, axis=-1, keepdims=True)
        return (v - mu) * jax.lax.rsqrt(var + eps) * g + b

    xn = ln(x, p["g1"][0], p["be1"][0])
    qkv = xn @ p["wqkv"]                                   # (B, N, 3C)
    qkv = qkv.reshape(B, N, 3, num_heads, hd).transpose(2, 0, 3, 1, 4)
    q, k, v = qkv[0], qkv[1], qkv[2]                       # (B, h, N, hd)
    s = jnp.einsum("bhqd,bhkd->bhqk", q, k) * scale
    a = jax.nn.softmax(s, axis=-1)
    o = jnp.einsum("bhqk,bhkd->bhqd", a, v).transpose(0, 2, 1, 3).reshape(B, N, C)
    x1 = x + (o @ p["wproj"] + p["bproj"][0])
    xn2 = ln(x1, p["g2"][0], p["be2"][0])
    h = xn2 @ p["w1"] + p["b1"][0]
    h = 0.5 * h * (1.0 + jax.lax.erf(h / jnp.sqrt(2.0)))
    return x1 + (h @ p["w2"] + p["b2"][0])


if __name__ == "__main__":
    # Small but lane-friendly shapes: C multiple of 128, N multiple of 8.
    B, N, C = 2, 8, 128
    num_heads = 4
    mlp_ratio = 4.0
    F = int(C * mlp_ratio)

    key = jax.random.PRNGKey(0)
    keys = jax.random.split(key, 12)
    x = jax.random.normal(keys[0], (B, N, C), dtype=jnp.float32)

    # Deterministic synthetic parameters (qkv_bias=False per module default).
    # PyTorch nn.Linear computes y = x @ W.T + b; weights stored pre-transposed.
    params = {
        "g1": 1.0 + 0.1 * jax.random.normal(keys[1], (1, C), jnp.float32),
        "be1": 0.05 * jax.random.normal(keys[2], (1, C), jnp.float32),
        "wqkv": 0.05 * jax.random.normal(keys[3], (C, 3 * C), jnp.float32),
        "wproj": 0.05 * jax.random.normal(keys[4], (C, C), jnp.float32),
        "bproj": 0.01 * jax.random.normal(keys[5], (1, C), jnp.float32),
        "g2": 1.0 + 0.1 * jax.random.normal(keys[6], (1, C), jnp.float32),
        "be2": 0.05 * jax.random.normal(keys[7], (1, C), jnp.float32),
        "w1": 0.05 * jax.random.normal(keys[8], (C, F), jnp.float32),
        "b1": 0.01 * jax.random.normal(keys[9], (1, F), jnp.float32),
        "w2": 0.05 * jax.random.normal(keys[10], (F, C), jnp.float32),
        "b2": 0.01 * jax.random.normal(keys[11], (1, C), jnp.float32),
    }
    prepped = prepare_block_params(params, num_heads)   # once, at "model init"

    # Case 1: aligned N.  Reference computed first since x is donated here.
    ref = reference_block(x, params, num_heads)
    out = jax.block_until_ready(vit_block(x, prepped, num_heads, donate_x=True))
    assert out.shape == (B, N, C)
    max_err = float(jnp.max(jnp.abs(out - ref)))
    assert jnp.allclose(out, ref, atol=5e-2, rtol=5e-2), max_err

    # Case 2: unaligned N (exercises sublane padding + softmax key masking).
    N2 = 12
    x2 = jax.random.normal(jax.random.PRNGKey(1), (B, N2, C), dtype=jnp.float32)
    ref2 = reference_block(x2, params, num_heads)
    out2 = jax.block_until_ready(vit_block(x2, prepped, num_heads))
    assert out2.shape == (B, N2, C)
    max_err2 = float(jnp.max(jnp.abs(out2 - ref2)))
    assert jnp.allclose(out2, ref2, atol=5e-2, rtol=5e-2), max_err2

    print("KERNEL_OK")
</pallas_src>

<mosaic_0001>
module attributes {stable_mosaic.version = 11 : i64} {
  func.func @block_kernel(%arg0: i32, %arg1: memref<1x8x128xf32, #tpu.memory_space<vmem>>, %arg2: memref<1x128xf32, #tpu.memory_space<vmem>>, %arg3: memref<1x128xf32, #tpu.memory_space<vmem>>, %arg4: memref<128x384xbf16, #tpu.memory_space<vmem>>, %arg5: memref<128x128xbf16, #tpu.memory_space<vmem>>, %arg6: memref<1x128xf32, #tpu.memory_space<vmem>>, %arg7: memref<1x128xf32, #tpu.memory_space<vmem>>, %arg8: memref<1x128xf32, #tpu.memory_space<vmem>>, %arg9: memref<128x512xbf16, #tpu.memory_space<vmem>>, %arg10: memref<1x512xf32, #tpu.memory_space<vmem>>, %arg11: memref<512x128xbf16, #tpu.memory_space<vmem>>, %arg12: memref<1x128xf32, #tpu.memory_space<vmem>>, %arg13: memref<1x8x128xf32, #tpu.memory_space<vmem>>) attributes {dimension_semantics = [#tpu.dimension_semantics<parallel>], iteration_bounds = array<i64: 2>, scalar_prefetch = 0 : i64, scratch_operands = 0 : i64, tpu.core_type = #tpu.core_type<tc>, window_params = [{transform_indices = @transform_0, window_bounds = array<i64: 1, 8, 128>}, {pipeline_mode = #tpu.pipeline_mode<synchronous>, transform_indices = @transform_1, window_bounds = array<i64: 1, 128>}, {pipeline_mode = #tpu.pipeline_mode<synchronous>, transform_indices = @transform_2, window_bounds = array<i64: 1, 128>}, {pipeline_mode = #tpu.pipeline_mode<synchronous>, transform_indices = @transform_3, window_bounds = array<i64: 128, 384>}, {pipeline_mode = #tpu.pipeline_mode<synchronous>, transform_indices = @transform_4, window_bounds = array<i64: 128, 128>}, {pipeline_mode = #tpu.pipeline_mode<synchronous>, transform_indices = @transform_5, window_bounds = array<i64: 1, 128>}, {pipeline_mode = #tpu.pipeline_mode<synchronous>, transform_indices = @transform_6, window_bounds = array<i64: 1, 128>}, {pipeline_mode = #tpu.pipeline_mode<synchronous>, transform_indices = @transform_7, window_bounds = array<i64: 1, 128>}, {pipeline_mode = #tpu.pipeline_mode<synchronous>, transform_indices = @transform_8, window_bounds = array<i64: 128, 512>}, {pipeline_mode = #tpu.pipeline_mode<synchronous>, transform_indices = @transform_9, window_bounds = array<i64: 1, 512>}, {pipeline_mode = #tpu.pipeline_mode<synchronous>, transform_indices = @transform_10, window_bounds = array<i64: 512, 128>}, {pipeline_mode = #tpu.pipeline_mode<synchronous>, transform_indices = @transform_11, window_bounds = array<i64: 1, 128>}, {transform_indices = @transform_12, window_bounds = array<i64: 1, 8, 128>}]} {
    %c0 = arith.constant 0 : index
    %c0_0 = arith.constant 0 : index
    %c0_1 = arith.constant 0 : index
    %0 = vector.load %arg1[%c0, %c0_0, %c0_1] : memref<1x8x128xf32, #tpu.memory_space<vmem>>, vector<1x8x128xf32>
    %1 = vector.shape_cast %0 : vector<1x8x128xf32> to vector<8x128xf32>
    %c0_2 = arith.constant 0 : index
    %c0_3 = arith.constant 0 : index
    %2 = vector.load %arg2[%c0_2, %c0_3] : memref<1x128xf32, #tpu.memory_space<vmem>>, vector<1x128xf32>
    %3 = vector.shape_cast %2 : vector<1x128xf32> to vector<128xf32>
    %c0_4 = arith.constant 0 : index
    %c0_5 = arith.constant 0 : index
    %4 = vector.load %arg3[%c0_4, %c0_5] : memref<1x128xf32, #tpu.memory_space<vmem>>, vector<1x128xf32>
    %5 = vector.shape_cast %4 : vector<1x128xf32> to vector<128xf32>
    %cst = arith.constant dense<0.000000e+00> : vector<8xf32>
    %6 = vector.multi_reduction <add>, %1, %cst [1] : vector<8x128xf32> to vector<8xf32>
    %7 = vector.shape_cast %6 : vector<8xf32> to vector<8x1xf32>
    %cst_6 = arith.constant 1.280000e+02 : f32
    %8 = vector.broadcast %cst_6 : f32 to vector<8x1xf32>
    %9 = arith.divf %7, %8 : vector<8x1xf32>
    %10 = vector.broadcast %9 : vector<8x1xf32> to vector<8x128xf32>
    %11 = arith.subf %1, %10 : vector<8x128xf32>
    %12 = arith.mulf %11, %11 : vector<8x128xf32>
    %cst_7 = arith.constant dense<0.000000e+00> : vector<8xf32>
    %13 = vector.multi_reduction <add>, %12, %cst_7 [1] : vector<8x128xf32> to vector<8xf32>
    %14 = vector.shape_cast %13 : vector<8xf32> to vector<8x1xf32>
    %cst_8 = arith.constant 1.280000e+02 : f32
    %15 = vector.broadcast %cst_8 : f32 to vector<8x1xf32>
    %16 = arith.divf %14, %15 : vector<8x1xf32>
    %cst_9 = arith.constant 9.99999974E-6 : f32
    %17 = vector.broadcast %cst_9 : f32 to vector<8x1xf32>
    %18 = arith.addf %16, %17 : vector<8x1xf32>
    %19 = math.rsqrt %18 : vector<8x1xf32>
    %20 = vector.broadcast %19 : vector<8x1xf32> to vector<8x128xf32>
    %21 = arith.mulf %11, %20 : vector<8x128xf32>
    %22 = vector.shape_cast %3 : vector<128xf32> to vector<1x128xf32>
    %23 = vector.broadcast %22 : vector<1x128xf32> to vector<8x128xf32>
    %24 = arith.mulf %21, %23 : vector<8x128xf32>
    %25 = vector.shape_cast %5 : vector<128xf32> to vector<1x128xf32>
    %26 = vector.broadcast %25 : vector<1x128xf32> to vector<8x128xf32>
    %27 = arith.addf %24, %26 : vector<8x128xf32>
    %28 = arith.truncf %27 : vector<8x128xf32> to vector<8x128xbf16>
    %c0_10 = arith.constant 0 : index
    %c0_11 = arith.constant 0 : index
    %29 = vector.load %arg4[%c0_10, %c0_11] : memref<128x384xbf16, #tpu.memory_space<vmem>>, vector<128x384xbf16>
    %cst_12 = arith.constant dense<0.000000e+00> : vector<8x384xf32>
    %30 = tpu.matmul %28, %29, %cst_12 {dimension_numbers = #tpu.dot_dimension_numbers<[1], [0], [0], [1], [0, 0, 1, 1], [], []>} : vector<8x128xbf16>, vector<128x384xbf16>, vector<8x384xf32> -> vector<8x384xf32>
    %31 = arith.truncf %30 : vector<8x384xf32> to vector<8x384xbf16>
    %32 = vector.extract_strided_slice %31 {offsets = [0, 0], sizes = [8, 128], strides = [1, 1]} : vector<8x384xbf16> to vector<8x128xbf16>
    %33 = vector.shape_cast %32 : vector<8x128xbf16> to vector<8x4x32xbf16>
    %34 = tpu.transpose %33, [1, 0, 2] : vector<8x4x32xbf16> -> vector<4x8x32xbf16>
    %35 = vector.extract_strided_slice %31 {offsets = [0, 128], sizes = [8, 128], strides = [1, 1]} : vector<8x384xbf16> to vector<8x128xbf16>
    %36 = vector.shape_cast %35 : vector<8x128xbf16> to vector<8x4x32xbf16>
    %37 = tpu.transpose %36, [1, 0, 2] : vector<8x4x32xbf16> -> vector<4x8x32xbf16>
    %38 = vector.extract_strided_slice %31 {offsets = [0, 256], sizes = [8, 128], strides = [1, 1]} : vector<8x384xbf16> to vector<8x128xbf16>
    %39 = vector.shape_cast %38 : vector<8x128xbf16> to vector<8x4x32xbf16>
    %40 = tpu.transpose %39, [1, 0, 2] : vector<8x4x32xbf16> -> vector<4x8x32xbf16>
    "tpu.trace_start"() <{level = 10 : i32, message = "hqd,hkd->hqk"}> : () -> ()
    %cst_13 = arith.constant dense<0.000000e+00> : vector<4x8x8xf32>
    %41 = tpu.matmul %34, %37, %cst_13 {dimension_numbers = #tpu.dot_dimension_numbers<[2], [2], [1], [1], [0, 0, 0, 1, 1, 1], [0], [0]>} : vector<4x8x32xbf16>, vector<4x8x32xbf16>, vector<4x8x8xf32> -> vector<4x8x8xf32>
    "tpu.trace_stop"() : () -> ()
    %cst_14 = arith.constant dense<0xFF800000> : vector<4x8xf32>
    %42 = vector.multi_reduction <maximumf>, %41, %cst_14 [2] : vector<4x8x8xf32> to vector<4x8xf32>
    %43 = vector.shape_cast %42 : vector<4x8xf32> to vector<4x8x1xf32>
    %44 = vector.broadcast %43 : vector<4x8x1xf32> to vector<4x8x8xf32>
    %45 = arith.subf %41, %44 : vector<4x8x8xf32>
    %46 = math.exp %45 : vector<4x8x8xf32>
    %cst_15 = arith.constant dense<0.000000e+00> : vector<4x8xf32>
    %47 = vector.multi_reduction <add>, %46, %cst_15 [2] : vector<4x8x8xf32> to vector<4x8xf32>
    %48 = vector.shape_cast %47 : vector<4x8xf32> to vector<4x8x1xf32>
    %49 = tpu.reciprocal %48 {approx = true} : vector<4x8x1xf32> -> vector<4x8x1xf32>
    %50 = vector.broadcast %49 : vector<4x8x1xf32> to vector<4x8x8xf32>
    %51 = arith.mulf %46, %50 : vector<4x8x8xf32>
    %52 = arith.truncf %51 : vector<4x8x8xf32> to vector<4x8x8xbf16>
    "tpu.trace_start"() <{level = 10 : i32, message = "hqk,hkd->hqd"}> : () -> ()
    %cst_16 = arith.constant dense<0.000000e+00> : vector<4x8x32xf32>
    %53 = tpu.matmul %52, %40, %cst_16 {dimension_numbers = #tpu.dot_dimension_numbers<[2], [1], [1], [2], [0, 0, 0, 1, 1, 2], [0], [0]>} : vector<4x8x8xbf16>, vector<4x8x32xbf16>, vector<4x8x32xf32> -> vector<4x8x32xf32>
    "tpu.trace_stop"() : () -> ()
    %54 = arith.truncf %53 : vector<4x8x32xf32> to vector<4x8x32xbf16>
    %55 = tpu.transpose %54, [1, 0, 2] : vector<4x8x32xbf16> -> vector<8x4x32xbf16>
    %56 = vector.shape_cast %55 : vector<8x4x32xbf16> to vector<8x128xbf16>
    %c0_17 = arith.constant 0 : index
    %c0_18 = arith.constant 0 : index
    %57 = vector.load %arg5[%c0_17, %c0_18] : memref<128x128xbf16, #tpu.memory_space<vmem>>, vector<128x128xbf16>
    %cst_19 = arith.constant dense<0.000000e+00> : vector<8x128xf32>
    %58 = tpu.matmul %56, %57, %cst_19 {dimension_numbers = #tpu.dot_dimension_numbers<[1], [0], [0], [1], [0, 0, 1, 1], [], []>} : vector<8x128xbf16>, vector<128x128xbf16>, vector<8x128xf32> -> vector<8x128xf32>
    %c0_20 = arith.constant 0 : index
    %c0_21 = arith.constant 0 : index
    %59 = vector.load %arg6[%c0_20, %c0_21] : memref<1x128xf32, #tpu.memory_space<vmem>>, vector<1x128xf32>
    %60 = vector.shape_cast %59 : vector<1x128xf32> to vector<128xf32>
    %61 = vector.shape_cast %60 : vector<128xf32> to vector<1x128xf32>
    %62 = vector.broadcast %61 : vector<1x128xf32> to vector<8x128xf32>
    %63 = arith.addf %58, %62 : vector<8x128xf32>
    %64 = arith.addf %1, %63 : vector<8x128xf32>
    %c0_22 = arith.constant 0 : index
    %c0_23 = arith.constant 0 : index
    %65 = vector.load %arg7[%c0_22, %c0_23] : memref<1x128xf32, #tpu.memory_space<vmem>>, vector<1x128xf32>
    %66 = vector.shape_cast %65 : vector<1x128xf32> to vector<128xf32>
    %c0_24 = arith.constant 0 : index
    %c0_25 = arith.constant 0 : index
    %67 = vector.load %arg8[%c0_24, %c0_25] : memref<1x128xf32, #tpu.memory_space<vmem>>, vector<1x128xf32>
    %68 = vector.shape_cast %67 : vector<1x128xf32> to vector<128xf32>
    %cst_26 = arith.constant dense<0.000000e+00> : vector<8xf32>
    %69 = vector.multi_reduction <add>, %64, %cst_26 [1] : vector<8x128xf32> to vector<8xf32>
    %70 = vector.shape_cast %69 : vector<8xf32> to vector<8x1xf32>
    %cst_27 = arith.constant 1.280000e+02 : f32
    %71 = vector.broadcast %cst_27 : f32 to vector<8x1xf32>
    %72 = arith.divf %70, %71 : vector<8x1xf32>
    %73 = vector.broadcast %72 : vector<8x1xf32> to vector<8x128xf32>
    %74 = arith.subf %64, %73 : vector<8x128xf32>
    %75 = arith.mulf %74, %74 : vector<8x128xf32>
    %cst_28 = arith.constant dense<0.000000e+00> : vector<8xf32>
    %76 = vector.multi_reduction <add>, %75, %cst_28 [1] : vector<8x128xf32> to vector<8xf32>
    %77 = vector.shape_cast %76 : vector<8xf32> to vector<8x1xf32>
    %cst_29 = arith.constant 1.280000e+02 : f32
    %78 = vector.broadcast %cst_29 : f32 to vector<8x1xf32>
    %79 = arith.divf %77, %78 : vector<8x1xf32>
    %cst_30 = arith.constant 9.99999974E-6 : f32
    %80 = vector.broadcast %cst_30 : f32 to vector<8x1xf32>
    %81 = arith.addf %79, %80 : vector<8x1xf32>
    %82 = math.rsqrt %81 : vector<8x1xf32>
    %83 = vector.broadcast %82 : vector<8x1xf32> to vector<8x128xf32>
    %84 = arith.mulf %74, %83 : vector<8x128xf32>
    %85 = vector.shape_cast %66 : vector<128xf32> to vector<1x128xf32>
    %86 = vector.broadcast %85 : vector<1x128xf32> to vector<8x128xf32>
    %87 = arith.mulf %84, %86 : vector<8x128xf32>
    %88 = vector.shape_cast %68 : vector<128xf32> to vector<1x128xf32>
    %89 = vector.broadcast %88 : vector<1x128xf32> to vector<8x128xf32>
    %90 = arith.addf %87, %89 : vector<8x128xf32>
    %91 = arith.truncf %90 : vector<8x128xf32> to vector<8x128xbf16>
    %c0_31 = arith.constant 0 : index
    %c0_32 = arith.constant 0 : index
    %92 = vector.load %arg9[%c0_31, %c0_32] : memref<128x512xbf16, #tpu.memory_space<vmem>>, vector<128x512xbf16>
    %cst_33 = arith.constant dense<0.000000e+00> : vector<8x512xf32>
    %93 = tpu.matmul %91, %92, %cst_33 {dimension_numbers = #tpu.dot_dimension_numbers<[1], [0], [0], [1], [0, 0, 1, 1], [], []>} : vector<8x128xbf16>, vector<128x512xbf16>, vector<8x512xf32> -> vector<8x512xf32>
    %c0_34 = arith.constant 0 : index
    %c0_35 = arith.constant 0 : index
    %94 = vector.load %arg10[%c0_34, %c0_35] : memref<1x512xf32, #tpu.memory_space<vmem>>, vector<1x512xf32>
    %95 = vector.shape_cast %94 : vector<1x512xf32> to vector<512xf32>
    %96 = vector.shape_cast %95 : vector<512xf32> to vector<1x512xf32>
    %97 = vector.broadcast %96 : vector<1x512xf32> to vector<8x512xf32>
    %98 = arith.addf %93, %97 : vector<8x512xf32>
    %cst_36 = arith.constant 5.000000e-01 : f32
    %99 = vector.broadcast %cst_36 : f32 to vector<8x512xf32>
    %100 = arith.mulf %99, %98 : vector<8x512xf32>
    %cst_37 = arith.constant 0.707106769 : f32
    %101 = vector.broadcast %cst_37 : f32 to vector<8x512xf32>
    %102 = arith.mulf %98, %101 : vector<8x512xf32>
    %103 = math.erf %102 : vector<8x512xf32>
    %cst_38 = arith.constant 1.000000e+00 : f32
    %104 = vector.broadcast %cst_38 : f32 to vector<8x512xf32>
    %105 = arith.addf %104, %103 : vector<8x512xf32>
    %106 = arith.mulf %100, %105 : vector<8x512xf32>
    %107 = arith.truncf %106 : vector<8x512xf32> to vector<8x512xbf16>
    %c0_39 = arith.constant 0 : index
    %c0_40 = arith.constant 0 : index
    %108 = vector.load %arg11[%c0_39, %c0_40] : memref<512x128xbf16, #tpu.memory_space<vmem>>, vector<512x128xbf16>
    %cst_41 = arith.constant dense<0.000000e+00> : vector<8x128xf32>
    %109 = tpu.matmul %107, %108, %cst_41 {dimension_numbers = #tpu.dot_dimension_numbers<[1], [0], [0], [1], [0, 0, 1, 1], [], []>} : vector<8x512xbf16>, vector<512x128xbf16>, vector<8x128xf32> -> vector<8x128xf32>
    %c0_42 = arith.constant 0 : index
    %c0_43 = arith.constant 0 : index
    %110 = vector.load %arg12[%c0_42, %c0_43] : memref<1x128xf32, #tpu.memory_space<vmem>>, vector<1x128xf32>
    %111 = vector.shape_cast %110 : vector<1x128xf32> to vector<128xf32>
    %112 = vector.shape_cast %111 : vector<128xf32> to vector<1x128xf32>
    %113 = vector.broadcast %112 : vector<1x128xf32> to vector<8x128xf32>
    %114 = arith.addf %109, %113 : vector<8x128xf32>
    %115 = arith.addf %64, %114 : vector<8x128xf32>
    %c0_44 = arith.constant 0 : index
    %c0_45 = arith.constant 0 : index
    %c0_46 = arith.constant 0 : index
    %116 = vector.load %arg13[%c0_44, %c0_45, %c0_46] : memref<1x8x128xf32, #tpu.memory_space<vmem>>, vector<1x8x128xf32>
    %117 = vector.shape_cast %116 : vector<1x8x128xf32> to vector<8x128xf32>
    %118 = vector.shape_cast %115 : vector<8x128xf32> to vector<1x8x128xf32>
    tpu.vector_store %arg13[%c0_44, %c0_45, %c0_46], %118 {strides = array<i32>} : memref<1x8x128xf32, #tpu.memory_space<vmem>>, vector<1x8x128xf32>,
    return
  }
  func.func @transform_0(%arg0: i32) -> (i32, i32, i32) {
    %c0_i32 = arith.constant 0 : i32
    %c0_i32_0 = arith.constant 0 : i32
    %c0_i32_1 = arith.constant 0 : i32
    return %arg0, %c0_i32, %c0_i32_0 : i32, i32, i32
  }
  func.func @transform_1(%arg0: i32) -> (i32, i32) {
    %c0_i32 = arith.constant 0 : i32
    %c0_i32_0 = arith.constant 0 : i32
    %c0_i32_1 = arith.constant 0 : i32
    return %c0_i32, %c0_i32_0 : i32, i32
  }
  func.func @transform_2(%arg0: i32) -> (i32, i32) {
    %c0_i32 = arith.constant 0 : i32
    %c0_i32_0 = arith.constant 0 : i32
    %c0_i32_1 = arith.constant 0 : i32
    return %c0_i32, %c0_i32_0 : i32, i32
  }
  func.func @transform_3(%arg0: i32) -> (i32, i32) {
    %c0_i32 = arith.constant 0 : i32
    %c0_i32_0 = arith.constant 0 : i32
    %c0_i32_1 = arith.constant 0 : i32
    return %c0_i32, %c0_i32_0 : i32, i32
  }
  func.func @transform_4(%arg0: i32) -> (i32, i32) {
    %c0_i32 = arith.constant 0 : i32
    %c0_i32_0 = arith.constant 0 : i32
    %c0_i32_1 = arith.constant 0 : i32
    return %c0_i32, %c0_i32_0 : i32, i32
  }
  func.func @transform_5(%arg0: i32) -> (i32, i32) {
    %c0_i32 = arith.constant 0 : i32
    %c0_i32_0 = arith.constant 0 : i32
    %c0_i32_1 = arith.constant 0 : i32
    return %c0_i32, %c0_i32_0 : i32, i32
  }
  func.func @transform_6(%arg0: i32) -> (i32, i32) {
    %c0_i32 = arith.constant 0 : i32
    %c0_i32_0 = arith.constant 0 : i32
    %c0_i32_1 = arith.constant 0 : i32
    return %c0_i32, %c0_i32_0 : i32, i32
  }
  func.func @transform_7(%arg0: i32) -> (i32, i32) {
    %c0_i32 = arith.constant 0 : i32
    %c0_i32_0 = arith.constant 0 : i32
    %c0_i32_1 = arith.constant 0 : i32
    return %c0_i32, %c0_i32_0 : i32, i32
  }
  func.func @transform_8(%arg0: i32) -> (i32, i32) {
    %c0_i32 = arith.constant 0 : i32
    %c0_i32_0 = arith.constant 0 : i32
    %c0_i32_1 = arith.constant 0 : i32
    return %c0_i32, %c0_i32_0 : i32, i32
  }
  func.func @transform_9(%arg0: i32) -> (i32, i32) {
    %c0_i32 = arith.constant 0 : i32
    %c0_i32_0 = arith.constant 0 : i32
    %c0_i32_1 = arith.constant 0 : i32
    return %c0_i32, %c0_i32_0 : i32, i32
  }
  func.func @transform_10(%arg0: i32) -> (i32, i32) {
    %c0_i32 = arith.constant 0 : i32
    %c0_i32_0 = arith.constant 0 : i32
    %c0_i32_1 = arith.constant 0 : i32
    return %c0_i32, %c0_i32_0 : i32, i32
  }
  func.func @transform_11(%arg0: i32) -> (i32, i32) {
    %c0_i32 = arith.constant 0 : i32
    %c0_i32_0 = arith.constant 0 : i32
    %c0_i32_1 = arith.constant 0 : i32
    return %c0_i32, %c0_i32_0 : i32, i32
  }
  func.func @transform_12(%arg0: i32) -> (i32, i32, i32) {
    %c0_i32 = arith.constant 0 : i32
    %c0_i32_0 = arith.constant 0 : i32
    %c0_i32_1 = arith.constant 0 : i32
    return %arg0, %c0_i32, %c0_i32_0 : i32, i32, i32
  }
}

module attributes {stable_mosaic.version = 11 : i64} {
  func.func @block_kernel(%arg0: i32, %arg1: memref<1x8x128xf32, #tpu.memory_space<vmem>>, %arg2: memref<1x128xf32, #tpu.memory_space<vmem>>, %arg3: memref<1x128xf32, #tpu.memory_space<vmem>>, %arg4: memref<128x384xbf16, #tpu.memory_space<vmem>>, %arg5: memref<128x128xbf16, #tpu.memory_space<vmem>>, %arg6: memref<1x128xf32, #tpu.memory_space<vmem>>, %arg7: memref<1x128xf32, #tpu.memory_space<vmem>>, %arg8: memref<1x128xf32, #tpu.memory_space<vmem>>, %arg9: memref<128x512xbf16, #tpu.memory_space<vmem>>, %arg10: memref<1x512xf32, #tpu.memory_space<vmem>>, %arg11: memref<512x128xbf16, #tpu.memory_space<vmem>>, %arg12: memref<1x128xf32, #tpu.memory_space<vmem>>, %arg13: memref<1x8x128xf32, #tpu.memory_space<vmem>>) attributes {dimension_semantics = [#tpu.dimension_semantics<parallel>], iteration_bounds = array<i64: 2>, scalar_prefetch = 0 : i64, scratch_operands = 0 : i64, tpu.core_type = #tpu.core_type<tc>, window_params = [{transform_indices = @transform_0, window_bounds = array<i64: 1, 8, 128>}, {pipeline_mode = #tpu.pipeline_mode<synchronous>, transform_indices = @transform_1, window_bounds = array<i64: 1, 128>}, {pipeline_mode = #tpu.pipeline_mode<synchronous>, transform_indices = @transform_2, window_bounds = array<i64: 1, 128>}, {pipeline_mode = #tpu.pipeline_mode<synchronous>, transform_indices = @transform_3, window_bounds = array<i64: 128, 384>}, {pipeline_mode = #tpu.pipeline_mode<synchronous>, transform_indices = @transform_4, window_bounds = array<i64: 128, 128>}, {pipeline_mode = #tpu.pipeline_mode<synchronous>, transform_indices = @transform_5, window_bounds = array<i64: 1, 128>}, {pipeline_mode = #tpu.pipeline_mode<synchronous>, transform_indices = @transform_6, window_bounds = array<i64: 1, 128>}, {pipeline_mode = #tpu.pipeline_mode<synchronous>, transform_indices = @transform_7, window_bounds = array<i64: 1, 128>}, {pipeline_mode = #tpu.pipeline_mode<synchronous>, transform_indices = @transform_8, window_bounds = array<i64: 128, 512>}, {pipeline_mode = #tpu.pipeline_mode<synchronous>, transform_indices = @transform_9, window_bounds = array<i64: 1, 512>}, {pipeline_mode = #tpu.pipeline_mode<synchronous>, transform_indices = @transform_10, window_bounds = array<i64: 512, 128>}, {pipeline_mode = #tpu.pipeline_mode<synchronous>, transform_indices = @transform_11, window_bounds = array<i64: 1, 128>}, {transform_indices = @transform_12, window_bounds = array<i64: 1, 8, 128>}]} {
    %c0 = arith.constant 0 : index
    %c0_0 = arith.constant 0 : index
    %c0_1 = arith.constant 0 : index
    %0 = vector.load %arg1[%c0, %c0_0, %c0_1] : memref<1x8x128xf32, #tpu.memory_space<vmem>>, vector<1x8x128xf32>
    %1 = vector.shape_cast %0 : vector<1x8x128xf32> to vector<8x128xf32>
    %c0_2 = arith.constant 0 : index
    %c0_3 = arith.constant 0 : index
    %2 = vector.load %arg2[%c0_2, %c0_3] : memref<1x128xf32, #tpu.memory_space<vmem>>, vector<1x128xf32>
    %3 = vector.shape_cast %2 : vector<1x128xf32> to vector<128xf32>
    %c0_4 = arith.constant 0 : index
    %c0_5 = arith.constant 0 : index
    %4 = vector.load %arg3[%c0_4, %c0_5] : memref<1x128xf32, #tpu.memory_space<vmem>>, vector<1x128xf32>
    %5 = vector.shape_cast %4 : vector<1x128xf32> to vector<128xf32>
    %cst = arith.constant dense<0.000000e+00> : vector<8xf32>
    %6 = vector.multi_reduction <add>, %1, %cst [1] : vector<8x128xf32> to vector<8xf32>
    %7 = vector.shape_cast %6 : vector<8xf32> to vector<8x1xf32>
    %cst_6 = arith.constant 1.280000e+02 : f32
    %8 = vector.broadcast %cst_6 : f32 to vector<8x1xf32>
    %9 = arith.divf %7, %8 : vector<8x1xf32>
    %10 = vector.broadcast %9 : vector<8x1xf32> to vector<8x128xf32>
    %11 = arith.subf %1, %10 : vector<8x128xf32>
    %12 = arith.mulf %11, %11 : vector<8x128xf32>
    %cst_7 = arith.constant dense<0.000000e+00> : vector<8xf32>
    %13 = vector.multi_reduction <add>, %12, %cst_7 [1] : vector<8x128xf32> to vector<8xf32>
    %14 = vector.shape_cast %13 : vector<8xf32> to vector<8x1xf32>
    %cst_8 = arith.constant 1.280000e+02 : f32
    %15 = vector.broadcast %cst_8 : f32 to vector<8x1xf32>
    %16 = arith.divf %14, %15 : vector<8x1xf32>
    %cst_9 = arith.constant 9.99999974E-6 : f32
    %17 = vector.broadcast %cst_9 : f32 to vector<8x1xf32>
    %18 = arith.addf %16, %17 : vector<8x1xf32>
    %19 = math.rsqrt %18 : vector<8x1xf32>
    %20 = vector.broadcast %19 : vector<8x1xf32> to vector<8x128xf32>
    %21 = arith.mulf %11, %20 : vector<8x128xf32>
    %22 = vector.shape_cast %3 : vector<128xf32> to vector<1x128xf32>
    %23 = vector.broadcast %22 : vector<1x128xf32> to vector<8x128xf32>
    %24 = arith.mulf %21, %23 : vector<8x128xf32>
    %25 = vector.shape_cast %5 : vector<128xf32> to vector<1x128xf32>
    %26 = vector.broadcast %25 : vector<1x128xf32> to vector<8x128xf32>
    %27 = arith.addf %24, %26 : vector<8x128xf32>
    %28 = arith.truncf %27 : vector<8x128xf32> to vector<8x128xbf16>
    %c0_10 = arith.constant 0 : index
    %c0_11 = arith.constant 0 : index
    %29 = vector.load %arg4[%c0_10, %c0_11] : memref<128x384xbf16, #tpu.memory_space<vmem>>, vector<128x384xbf16>
    %cst_12 = arith.constant dense<0.000000e+00> : vector<8x384xf32>
    %30 = tpu.matmul %28, %29, %cst_12 {dimension_numbers = #tpu.dot_dimension_numbers<[1], [0], [0], [1], [0, 0, 1, 1], [], []>} : vector<8x128xbf16>, vector<128x384xbf16>, vector<8x384xf32> -> vector<8x384xf32>
    %31 = arith.truncf %30 : vector<8x384xf32> to vector<8x384xbf16>
    %32 = vector.extract_strided_slice %31 {offsets = [0, 0], sizes = [8, 128], strides = [1, 1]} : vector<8x384xbf16> to vector<8x128xbf16>
    %33 = vector.shape_cast %32 : vector<8x128xbf16> to vector<8x4x32xbf16>
    %34 = tpu.transpose %33, [1, 0, 2] : vector<8x4x32xbf16> -> vector<4x8x32xbf16>
    %35 = vector.extract_strided_slice %31 {offsets = [0, 128], sizes = [8, 128], strides = [1, 1]} : vector<8x384xbf16> to vector<8x128xbf16>
    %36 = vector.shape_cast %35 : vector<8x128xbf16> to vector<8x4x32xbf16>
    %37 = tpu.transpose %36, [1, 0, 2] : vector<8x4x32xbf16> -> vector<4x8x32xbf16>
    %38 = vector.extract_strided_slice %31 {offsets = [0, 256], sizes = [8, 128], strides = [1, 1]} : vector<8x384xbf16> to vector<8x128xbf16>
    %39 = vector.shape_cast %38 : vector<8x128xbf16> to vector<8x4x32xbf16>
    %40 = tpu.transpose %39, [1, 0, 2] : vector<8x4x32xbf16> -> vector<4x8x32xbf16>
    "tpu.trace_start"() <{level = 10 : i32, message = "hqd,hkd->hqk"}> : () -> ()
    %cst_13 = arith.constant dense<0.000000e+00> : vector<4x8x8xf32>
    %41 = tpu.matmul %34, %37, %cst_13 {dimension_numbers = #tpu.dot_dimension_numbers<[2], [2], [1], [1], [0, 0, 0, 1, 1, 1], [0], [0]>} : vector<4x8x32xbf16>, vector<4x8x32xbf16>, vector<4x8x8xf32> -> vector<4x8x8xf32>
    "tpu.trace_stop"() : () -> ()
    %cst_14 = arith.constant dense<0xFF800000> : vector<4x8xf32>
    %42 = vector.multi_reduction <maximumf>, %41, %cst_14 [2] : vector<4x8x8xf32> to vector<4x8xf32>
    %43 = vector.shape_cast %42 : vector<4x8xf32> to vector<4x8x1xf32>
    %44 = vector.broadcast %43 : vector<4x8x1xf32> to vector<4x8x8xf32>
    %45 = arith.subf %41, %44 : vector<4x8x8xf32>
    %46 = math.exp %45 : vector<4x8x8xf32>
    %cst_15 = arith.constant dense<0.000000e+00> : vector<4x8xf32>
    %47 = vector.multi_reduction <add>, %46, %cst_15 [2] : vector<4x8x8xf32> to vector<4x8xf32>
    %48 = vector.shape_cast %47 : vector<4x8xf32> to vector<4x8x1xf32>
    %49 = tpu.reciprocal %48 {approx = true} : vector<4x8x1xf32> -> vector<4x8x1xf32>
    %50 = vector.broadcast %49 : vector<4x8x1xf32> to vector<4x8x8xf32>
    %51 = arith.mulf %46, %50 : vector<4x8x8xf32>
    %52 = arith.truncf %51 : vector<4x8x8xf32> to vector<4x8x8xbf16>
    "tpu.trace_start"() <{level = 10 : i32, message = "hqk,hkd->hqd"}> : () -> ()
    %cst_16 = arith.constant dense<0.000000e+00> : vector<4x8x32xf32>
    %53 = tpu.matmul %52, %40, %cst_16 {dimension_numbers = #tpu.dot_dimension_numbers<[2], [1], [1], [2], [0, 0, 0, 1, 1, 2], [0], [0]>} : vector<4x8x8xbf16>, vector<4x8x32xbf16>, vector<4x8x32xf32> -> vector<4x8x32xf32>
    "tpu.trace_stop"() : () -> ()
    %54 = arith.truncf %53 : vector<4x8x32xf32> to vector<4x8x32xbf16>
    %55 = tpu.transpose %54, [1, 0, 2] : vector<4x8x32xbf16> -> vector<8x4x32xbf16>
    %56 = vector.shape_cast %55 : vector<8x4x32xbf16> to vector<8x128xbf16>
    %c0_17 = arith.constant 0 : index
    %c0_18 = arith.constant 0 : index
    %57 = vector.load %arg5[%c0_17, %c0_18] : memref<128x128xbf16, #tpu.memory_space<vmem>>, vector<128x128xbf16>
    %cst_19 = arith.constant dense<0.000000e+00> : vector<8x128xf32>
    %58 = tpu.matmul %56, %57, %cst_19 {dimension_numbers = #tpu.dot_dimension_numbers<[1], [0], [0], [1], [0, 0, 1, 1], [], []>} : vector<8x128xbf16>, vector<128x128xbf16>, vector<8x128xf32> -> vector<8x128xf32>
    %c0_20 = arith.constant 0 : index
    %c0_21 = arith.constant 0 : index
    %59 = vector.load %arg6[%c0_20, %c0_21] : memref<1x128xf32, #tpu.memory_space<vmem>>, vector<1x128xf32>
    %60 = vector.shape_cast %59 : vector<1x128xf32> to vector<128xf32>
    %61 = vector.shape_cast %60 : vector<128xf32> to vector<1x128xf32>
    %62 = vector.broadcast %61 : vector<1x128xf32> to vector<8x128xf32>
    %63 = arith.addf %58, %62 : vector<8x128xf32>
    %64 = arith.addf %1, %63 : vector<8x128xf32>
    %c0_22 = arith.constant 0 : index
    %c0_23 = arith.constant 0 : index
    %65 = vector.load %arg7[%c0_22, %c0_23] : memref<1x128xf32, #tpu.memory_space<vmem>>, vector<1x128xf32>
    %66 = vector.shape_cast %65 : vector<1x128xf32> to vector<128xf32>
    %c0_24 = arith.constant 0 : index
    %c0_25 = arith.constant 0 : index
    %67 = vector.load %arg8[%c0_24, %c0_25] : memref<1x128xf32, #tpu.memory_space<vmem>>, vector<1x128xf32>
    %68 = vector.shape_cast %67 : vector<1x128xf32> to vector<128xf32>
    %cst_26 = arith.constant dense<0.000000e+00> : vector<8xf32>
    %69 = vector.multi_reduction <add>, %64, %cst_26 [1] : vector<8x128xf32> to vector<8xf32>
    %70 = vector.shape_cast %69 : vector<8xf32> to vector<8x1xf32>
    %cst_27 = arith.constant 1.280000e+02 : f32
    %71 = vector.broadcast %cst_27 : f32 to vector<8x1xf32>
    %72 = arith.divf %70, %71 : vector<8x1xf32>
    %73 = vector.broadcast %72 : vector<8x1xf32> to vector<8x128xf32>
    %74 = arith.subf %64, %73 : vector<8x128xf32>
    %75 = arith.mulf %74, %74 : vector<8x128xf32>
    %cst_28 = arith.constant dense<0.000000e+00> : vector<8xf32>
    %76 = vector.multi_reduction <add>, %75, %cst_28 [1] : vector<8x128xf32> to vector<8xf32>
    %77 = vector.shape_cast %76 : vector<8xf32> to vector<8x1xf32>
    %cst_29 = arith.constant 1.280000e+02 : f32
    %78 = vector.broadcast %cst_29 : f32 to vector<8x1xf32>
    %79 = arith.divf %77, %78 : vector<8x1xf32>
    %cst_30 = arith.constant 9.99999974E-6 : f32
    %80 = vector.broadcast %cst_30 : f32 to vector<8x1xf32>
    %81 = arith.addf %79, %80 : vector<8x1xf32>
    %82 = math.rsqrt %81 : vector<8x1xf32>
    %83 = vector.broadcast %82 : vector<8x1xf32> to vector<8x128xf32>
    %84 = arith.mulf %74, %83 : vector<8x128xf32>
    %85 = vector.shape_cast %66 : vector<128xf32> to vector<1x128xf32>
    %86 = vector.broadcast %85 : vector<1x128xf32> to vector<8x128xf32>
    %87 = arith.mulf %84, %86 : vector<8x128xf32>
    %88 = vector.shape_cast %68 : vector<128xf32> to vector<1x128xf32>
    %89 = vector.broadcast %88 : vector<1x128xf32> to vector<8x128xf32>
    %90 = arith.addf %87, %89 : vector<8x128xf32>
    %91 = arith.truncf %90 : vector<8x128xf32> to vector<8x128xbf16>
    %c0_31 = arith.constant 0 : index
    %c0_32 = arith.constant 0 : index
    %92 = vector.load %arg9[%c0_31, %c0_32] : memref<128x512xbf16, #tpu.memory_space<vmem>>, vector<128x512xbf16>
    %cst_33 = arith.constant dense<0.000000e+00> : vector<8x512xf32>
    %93 = tpu.matmul %91, %92, %cst_33 {dimension_numbers = #tpu.dot_dimension_numbers<[1], [0], [0], [1], [0, 0, 1, 1], [], []>} : vector<8x128xbf16>, vector<128x512xbf16>, vector<8x512xf32> -> vector<8x512xf32>
    %c0_34 = arith.constant 0 : index
    %c0_35 = arith.constant 0 : index
    %94 = vector.load %arg10[%c0_34, %c0_35] : memref<1x512xf32, #tpu.memory_space<vmem>>, vector<1x512xf32>
    %95 = vector.shape_cast %94 : vector<1x512xf32> to vector<512xf32>
    %96 = vector.shape_cast %95 : vector<512xf32> to vector<1x512xf32>
    %97 = vector.broadcast %96 : vector<1x512xf32> to vector<8x512xf32>
    %98 = arith.addf %93, %97 : vector<8x512xf32>
    %cst_36 = arith.constant 5.000000e-01 : f32
    %99 = vector.broadcast %cst_36 : f32 to vector<8x512xf32>
    %100 = arith.mulf %99, %98 : vector<8x512xf32>
    %cst_37 = arith.constant 0.707106769 : f32
    %101 = vector.broadcast %cst_37 : f32 to vector<8x512xf32>
    %102 = arith.mulf %98, %101 : vector<8x512xf32>
    %103 = math.erf %102 : vector<8x512xf32>
    %cst_38 = arith.constant 1.000000e+00 : f32
    %104 = vector.broadcast %cst_38 : f32 to vector<8x512xf32>
    %105 = arith.addf %104, %103 : vector<8x512xf32>
    %106 = arith.mulf %100, %105 : vector<8x512xf32>
    %107 = arith.truncf %106 : vector<8x512xf32> to vector<8x512xbf16>
    %c0_39 = arith.constant 0 : index
    %c0_40 = arith.constant 0 : index
    %108 = vector.load %arg11[%c0_39, %c0_40] : memref<512x128xbf16, #tpu.memory_space<vmem>>, vector<512x128xbf16>
    %cst_41 = arith.constant dense<0.000000e+00> : vector<8x128xf32>
    %109 = tpu.matmul %107, %108, %cst_41 {dimension_numbers = #tpu.dot_dimension_numbers<[1], [0], [0], [1], [0, 0, 1, 1], [], []>} : vector<8x512xbf16>, vector<512x128xbf16>, vector<8x128xf32> -> vector<8x128xf32>
    %c0_42 = arith.constant 0 : index
    %c0_43 = arith.constant 0 : index
    %110 = vector.load %arg12[%c0_42, %c0_43] : memref<1x128xf32, #tpu.memory_space<vmem>>, vector<1x128xf32>
    %111 = vector.shape_cast %110 : vector<1x128xf32> to vector<128xf32>
    %112 = vector.shape_cast %111 : vector<128xf32> to vector<1x128xf32>
    %113 = vector.broadcast %112 : vector<1x128xf32> to vector<8x128xf32>
    %114 = arith.addf %109, %113 : vector<8x128xf32>
    %115 = arith.addf %64, %114 : vector<8x128xf32>
    %c0_44 = arith.constant 0 : index
    %c0_45 = arith.constant 0 : index
    %c0_46 = arith.constant 0 : index
    %116 = vector.load %arg13[%c0_44, %c0_45, %c0_46] : memref<1x8x128xf32, #tpu.memory_space<vmem>>, vector<1x8x128xf32>
    %117 = vector.shape_cast %116 : vector<1x8x128xf32> to vector<8x128xf32>
    %118 = vector.shape_cast %115 : vector<8x128xf32> to vector<1x8x128xf32>
    tpu.vector_store %arg13[%c0_44, %c0_45, %c0_46], %118 {strides = array<i32>} : memref<1x8x128xf32, #tpu.memory_space<vmem>>, vector<1x8x128xf32>,
    return
  }
  func.func @transform_0(%arg0: i32) -> (i32, i32, i32) {
    %c0_i32 = arith.constant 0 : i32
    %c0_i32_0 = arith.constant 0 : i32
    %c0_i32_1 = arith.constant 0 : i32
    return %arg0, %c0_i32, %c0_i32_0 : i32, i32, i32
  }
  func.func @transform_1(%arg0: i32) -> (i32, i32) {
    %c0_i32 = arith.constant 0 : i32
    %c0_i32_0 = arith.constant 0 : i32
    %c0_i32_1 = arith.constant 0 : i32
    return %c0_i32, %c0_i32_0 : i32, i32
  }
  func.func @transform_2(%arg0: i32) -> (i32, i32) {
    %c0_i32 = arith.constant 0 : i32
    %c0_i32_0 = arith.constant 0 : i32
    %c0_i32_1 = arith.constant 0 : i32
    return %c0_i32, %c0_i32_0 : i32, i32
  }
  func.func @transform_3(%arg0: i32) -> (i32, i32) {
    %c0_i32 = arith.constant 0 : i32
    %c0_i32_0 = arith.constant 0 : i32
    %c0_i32_1 = arith.constant 0 : i32
    return %c0_i32, %c0_i32_0 : i32, i32
  }
  func.func @transform_4(%arg0: i32) -> (i32, i32) {
    %c0_i32 = arith.constant 0 : i32
    %c0_i32_0 = arith.constant 0 : i32
    %c0_i32_1 = arith.constant 0 : i32
    return %c0_i32, %c0_i32_0 : i32, i32
  }
  func.func @transform_5(%arg0: i32) -> (i32, i32) {
    %c0_i32 = arith.constant 0 : i32
    %c0_i32_0 = arith.constant 0 : i32
    %c0_i32_1 = arith.constant 0 : i32
    return %c0_i32, %c0_i32_0 : i32, i32
  }
  func.func @transform_6(%arg0: i32) -> (i32, i32) {
    %c0_i32 = arith.constant 0 : i32
    %c0_i32_0 = arith.constant 0 : i32
    %c0_i32_1 = arith.constant 0 : i32
    return %c0_i32, %c0_i32_0 : i32, i32
  }
  func.func @transform_7(%arg0: i32) -> (i32, i32) {
    %c0_i32 = arith.constant 0 : i32
    %c0_i32_0 = arith.constant 0 : i32
    %c0_i32_1 = arith.constant 0 : i32
    return %c0_i32, %c0_i32_0 : i32, i32
  }
  func.func @transform_8(%arg0: i32) -> (i32, i32) {
    %c0_i32 = arith.constant 0 : i32
    %c0_i32_0 = arith.constant 0 : i32
    %c0_i32_1 = arith.constant 0 : i32
    return %c0_i32, %c0_i32_0 : i32, i32
  }
  func.func @transform_9(%arg0: i32) -> (i32, i32) {
    %c0_i32 = arith.constant 0 : i32
    %c0_i32_0 = arith.constant 0 : i32
    %c0_i32_1 = arith.constant 0 : i32
    return %c0_i32, %c0_i32_0 : i32, i32
  }
  func.func @transform_10(%arg0: i32) -> (i32, i32) {
    %c0_i32 = arith.constant 0 : i32
    %c0_i32_0 = arith.constant 0 : i32
    %c0_i32_1 = arith.constant 0 : i32
    return %c0_i32, %c0_i32_0 : i32, i32
  }
  func.func @transform_11(%arg0: i32) -> (i32, i32) {
    %c0_i32 = arith.constant 0 : i32
    %c0_i32_0 = arith.constant 0 : i32
    %c0_i32_1 = arith.constant 0 : i32
    return %c0_i32, %c0_i32_0 : i32, i32
  }
  func.func @transform_12(%arg0: i32) -> (i32, i32, i32) {
    %c0_i32 = arith.constant 0 : i32
    %c0_i32_0 = arith.constant 0 : i32
    %c0_i32_1 = arith.constant 0 : i32
    return %arg0, %c0_i32, %c0_i32_0 : i32, i32, i32
  }
}

</mosaic_0001>

<llo_original>
// kernel: tpu_custom_call.1
$region0: #{tpu_custom_call.1}
  #allocation0 [shape = 'u32[]', space=smem, size = 0x4, offset = 0x4, fixed_abs, tag = 'smem constant byte address 0x4 - core index']
  #allocation1 [shape = 'u32[144,128]{1,0:T(1,128)}', space=vmem, size = 0x12000, scoped, tag = 'internal scratch']
  %s0 = inlined_call_operand.hbm [shape: f32[2,8,128], index: 0, kind: input, shape index: {}, may-alias: {0,12}]
  %s1 = inlined_call_operand.vmem [shape: f32[1,128], index: 1, kind: input, shape index: {}]
  %s2 = inlined_call_operand.vmem [shape: f32[1,128], index: 2, kind: input, shape index: {}]
  %s3 = inlined_call_operand.hbm [shape: bf16[128,384], index: 3, kind: input, shape index: {}]
  %s4 = inlined_call_operand.hbm [shape: bf16[128,128], index: 4, kind: input, shape index: {}]
  %s5 = inlined_call_operand.vmem [shape: f32[1,128], index: 5, kind: input, shape index: {}]
  %s6 = inlined_call_operand.vmem [shape: f32[1,128], index: 6, kind: input, shape index: {}]
  %s7 = inlined_call_operand.vmem [shape: f32[1,128], index: 7, kind: input, shape index: {}]
  %s8 = inlined_call_operand.hbm [shape: bf16[128,512], index: 8, kind: input, shape index: {}]
  %s9 = inlined_call_operand.vmem [shape: f32[1,512], index: 9, kind: input, shape index: {}]
  %s10 = inlined_call_operand.hbm [shape: bf16[512,128], index: 10, kind: input, shape index: {}]
  %s11 = inlined_call_operand.vmem [shape: f32[1,128], index: 11, kind: input, shape index: {}]
  %s12 = inlined_call_operand.hbm [shape: f32[2,8,128], index: 12, kind: output, shape index: {}, may-alias: {0,12}]
  %s13 = sld [smem:[#allocation0]]
  $region101: #{tpu_custom_call.1} parent=0
    _
  %s15 = ssub.s32 1, %s13
  %s16 = scalar_select 0, %s15, %s13
  $region1: #{tpu_custom_call.1} parent=0
    #allocation2 [shape = 'u8[8192]{0}', space=vmem, size = 0x2000, scoped, tag = 'input window, operand 0']
    #allocation3 [shape = 's32[2]{0}', space=sflag, size = 0x8, scoped, tag = 'scoped memory for tpu_custom_call.1']
    #allocation4 [shape = 's32[2]{0}', space=sflag, size = 0x8, scoped, tag = 'scoped memory for tpu_custom_call.1']
    #allocation5 [shape = 'u8[98304]{0}', space=vmem, size = 0x18000, scoped, tag = 'input window, operand 3, single buffered']
    #allocation6 [shape = 's32[1]{0}', space=sflag, size = 0x4, scoped, tag = 'scoped memory for tpu_custom_call.1']
    #allocation7 [shape = 'u8[32768]{0}', space=vmem, size = 0x8000, scoped, tag = 'input window, operand 4, single buffered']
    #allocation8 [shape = 'u8[131072]{0}', space=vmem, size = 0x20000, scoped, tag = 'input window, operand 8, single buffered']
    #allocation9 [shape = 's32[1]{0}', space=sflag, size = 0x4, scoped, tag = 'scoped memory for tpu_custom_call.1']
    #allocation10 [shape = 'u8[131072]{0}', space=vmem, size = 0x20000, scoped, tag = 'input window, operand 10, single buffered']
    #allocation11 [shape = 'u8[8192]{0}', space=vmem, size = 0x2000, scoped, tag = 'output window, operand 0']
    %17 = vsyncpa [#allocation3], 0
    %s18 = scalar_lea.sflag [#allocation3], 1
    %19 = vsyncpa %s18, 0
    %20 = vsyncpa [#allocation6], 0
    %21 = vsyncpa [#allocation9], 0
    %22 = vsyncpa [#allocation4], 0
    %s23 = scalar_lea.sflag [#allocation4], 1
    %24 = vsyncpa %s23, 0
    loop: start=0, step=1, limit=4
    $region2: #{tpu_custom_call.1} parent=1 // loop_pre_header
      _
    $region3: #{tpu_custom_call.1} parent=1 // loop_header
      %s26 = sphi 0, %s30
      %p27 = scmp.ge.s32.totalorder %s26, 4
      %s36 = sphi 0, %s38
      %s39 = sphi 0, %s36
      %s40 = sphi 0, %s39
      %s56 = sphi 0, %s40
      %s60 = sphi 0, %s60
      %s62 = sphi 0, %s60
      %s63 = sphi 0, %s62
      %s77 = sphi 0, %s63
      %s81 = sphi 0, %s81
      %s83 = sphi 0, %s81
      %s84 = sphi 0, %s83
      %s98 = sphi 0, %s84
      %s102 = sphi 0, %s102
      %s104 = sphi 0, %s102
      %s105 = sphi 0, %s104
      %s119 = sphi 0, %s105
      %s123 = sphi 0, %s123
      %s125 = sphi 0, %s123
      %s126 = sphi 0, %s125
      %s140 = sphi 0, %s126
      %s144 = sphi 0, %s144
      %s146 = sphi 0, %s144
      %s147 = sphi 0, %s146
      %s161 = sphi 0, %s147
      %s165 = sphi 0, %s165
      %s167 = sphi 0, %s165
      %s168 = sphi 0, %s167
      %s182 = sphi 0, %s168
      %s186 = sphi 0, %s186
      %s188 = sphi 0, %s186
      %s189 = sphi 0, %s188
      %s203 = sphi 0, %s189
      %s207 = sphi 0, %s207
      %s209 = sphi 0, %s207
      %s210 = sphi 0, %s209
      %s224 = sphi 0, %s210
      %s228 = sphi 0, %s228
      %s230 = sphi 0, %s228
      %s231 = sphi 0, %s230
      %s245 = sphi 0, %s231
      %s249 = sphi 0, %s249
      %s251 = sphi 0, %s249
      %s252 = sphi 0, %s251
      %s266 = sphi 0, %s252
      %s270 = sphi 0, %s270
      %s272 = sphi 0, %s270
      %s273 = sphi 0, %s272
      %s287 = sphi 0, %s273
      %s293 = sphi 0, %s295
      %s296 = sphi 0, %s293
      %s297 = sphi 0, %s296
      %s313 = sphi 0, %s297
    $region4: #{tpu_custom_call.1} parent=1 // loop_header_branch
      %29 = sbr.rel (%p27) target = $region8
    $region5: #{tpu_custom_call.1} parent=1 // loop_body
      %s31 = ssub.s32 %s26, 1
      %s32 = ssub.s32 %s26, 2
      %s33 = sadd.s32 %s26, 1
      %s34 = ssub.s32 %s26, %s33
      %p35 = scmp.eq.s32.totalorder %s34, 0
      %s37 = sadd.s32 %s36, 1
      %s38 = scalar_select %p35, %s36, %s37
      %p41 = pneg %p35
      %p42 = scmp.eq.s32.totalorder %s26, 1
      %p43 = por %p41, %p42
      %p44 = scmp.ne.s32.totalorder %s36, %s39
      %p45 = scmp.eq.s32.totalorder %s26, 0
      %p46 = por %p44, %p45
      %p47 = scmp.ne.s32.totalorder %s36, %s39
      %p48 = scmp.eq.s32.totalorder %s31, 1
      %p49 = por %p47, %p48
      %p50 = scmp.ne.s32.totalorder %s39, %s40
      %p51 = scmp.eq.s32.totalorder %s31, 0
      %p52 = por %p50, %p51
      %p53 = scmp.ne.s32.totalorder %s39, %s40
      %p54 = scmp.eq.s32.totalorder %s32, 1
      %p55 = por %p53, %p54
      %p57 = scmp.ne.s32.totalorder %s40, %s56
      %p58 = scmp.eq.s32.totalorder %s32, 0
      %p59 = por %p57, %p58
      %s61 = sadd.s32 %s60, 1
      %p64 = scmp.eq.s32.totalorder %s26, 1
      %p65 = scmp.ne.s32.totalorder %s60, %s62
      %p66 = scmp.eq.s32.totalorder %s26, 0
      %p67 = por %p65, %p66
      %p68 = scmp.ne.s32.totalorder %s60, %s62
      %p69 = scmp.eq.s32.totalorder %s31, 1
      %p70 = por %p68, %p69
      %p71 = scmp.ne.s32.totalorder %s62, %s63
      %p72 = scmp.eq.s32.totalorder %s31, 0
      %p73 = por %p71, %p72
      %p74 = scmp.ne.s32.totalorder %s62, %s63
      %p75 = scmp.eq.s32.totalorder %s32, 1
      %p76 = por %p74, %p75
      %p78 = scmp.ne.s32.totalorder %s63, %s77
      %p79 = scmp.eq.s32.totalorder %s32, 0
      %p80 = por %p78, %p79
      %s82 = sadd.s32 %s81, 1
      %p85 = scmp.eq.s32.totalorder %s26, 1
      %p86 = scmp.ne.s32.totalorder %s81, %s83
      %p87 = scmp.eq.s32.totalorder %s26, 0
      %p88 = por %p86, %p87
      %p89 = scmp.ne.s32.totalorder %s81, %s83
      %p90 = scmp.eq.s32.totalorder %s31, 1
      %p91 = por %p89, %p90
      %p92 = scmp.ne.s32.totalorder %s83, %s84
      %p93 = scmp.eq.s32.totalorder %s31, 0
      %p94 = por %p92, %p93
      %p95 = scmp.ne.s32.totalorder %s83, %s84
      %p96 = scmp.eq.s32.totalorder %s32, 1
      %p97 = por %p95, %p96
      %p99 = scmp.ne.s32.totalorder %s84, %s98
      %p100 = scmp.eq.s32.totalorder %s32, 0
      %p101 = por %p99, %p100
      %s103 = sadd.s32 %s102, 1
      %p106 = scmp.eq.s32.totalorder %s26, 1
      %p107 = scmp.ne.s32.totalorder %s102, %s104
      %p108 = scmp.eq.s32.totalorder %s26, 0
      %p109 = por %p107, %p108
      %p110 = scmp.ne.s32.totalorder %s102, %s104
      %p111 = scmp.eq.s32.totalorder %s31, 1
      %p112 = por %p110, %p111
      %p113 = scmp.ne.s32.totalorder %s104, %s105
      %p114 = scmp.eq.s32.totalorder %s31, 0
      %p115 = por %p113, %p114
      %p116 = scmp.ne.s32.totalorder %s104, %s105
      %p117 = scmp.eq.s32.totalorder %s32, 1
      %p118 = por %p116, %p117
      %p120 = scmp.ne.s32.totalorder %s105, %s119
      %p121 = scmp.eq.s32.totalorder %s32, 0
      %p122 = por %p120, %p121
      %s124 = sadd.s32 %s123, 1
      %p127 = scmp.eq.s32.totalorder %s26, 1
      %p128 = scmp.ne.s32.totalorder %s123, %s125
      %p129 = scmp.eq.s32.totalorder %s26, 0
      %p130 = por %p128, %p129
      %p131 = scmp.ne.s32.totalorder %s123, %s125
      %p132 = scmp.eq.s32.totalorder %s31, 1
      %p133 = por %p131, %p132
      %p134 = scmp.ne.s32.totalorder %s125, %s126
      %p135 = scmp.eq.s32.totalorder %s31, 0
      %p136 = por %p134, %p135
      %p137 = scmp.ne.s32.totalorder %s125, %s126
      %p138 = scmp.eq.s32.totalorder %s32, 1
      %p139 = por %p137, %p138
      %p141 = scmp.ne.s32.totalorder %s126, %s140
      %p142 = scmp.eq.s32.totalorder %s32, 0
      %p143 = por %p141, %p142
      %s145 = sadd.s32 %s144, 1
      %p148 = scmp.eq.s32.totalorder %s26, 1
      %p149 = scmp.ne.s32.totalorder %s144, %s146
      %p150 = scmp.eq.s32.totalorder %s26, 0
      %p151 = por %p149, %p150
      %p152 = scmp.ne.s32.totalorder %s144, %s146
      %p153 = scmp.eq.s32.totalorder %s31, 1
      %p154 = por %p152, %p153
      %p155 = scmp.ne.s32.totalorder %s146, %s147
      %p156 = scmp.eq.s32.totalorder %s31, 0
      %p157 = por %p155, %p156
      %p158 = scmp.ne.s32.totalorder %s146, %s147
      %p159 = scmp.eq.s32.totalorder %s32, 1
      %p160 = por %p158, %p159
      %p162 = scmp.ne.s32.totalorder %s147, %s161
      %p163 = scmp.eq.s32.totalorder %s32, 0
      %p164 = por %p162, %p163
      %s166 = sadd.s32 %s165, 1
      %p169 = scmp.eq.s32.totalorder %s26, 1
      %p170 = scmp.ne.s32.totalorder %s165, %s167
      %p171 = scmp.eq.s32.totalorder %s26, 0
      %p172 = por %p170, %p171
      %p173 = scmp.ne.s32.totalorder %s165, %s167
      %p174 = scmp.eq.s32.totalorder %s31, 1
      %p175 = por %p173, %p174
      %p176 = scmp.ne.s32.totalorder %s167, %s168
      %p177 = scmp.eq.s32.totalorder %s31, 0
      %p178 = por %p176, %p177
      %p179 = scmp.ne.s32.totalorder %s167, %s168
      %p180 = scmp.eq.s32.totalorder %s32, 1
      %p181 = por %p179, %p180
      %p183 = scmp.ne.s32.totalorder %s168, %s182
      %p184 = scmp.eq.s32.totalorder %s32, 0
      %p185 = por %p183, %p184
      %s187 = sadd.s32 %s186, 1
      %p190 = scmp.eq.s32.totalorder %s26, 1
      %p191 = scmp.ne.s32.totalorder %s186, %s188
      %p192 = scmp.eq.s32.totalorder %s26, 0
      %p193 = por %p191, %p192
      %p194 = scmp.ne.s32.totalorder %s186, %s188
      %p195 = scmp.eq.s32.totalorder %s31, 1
      %p196 = por %p194, %p195
      %p197 = scmp.ne.s32.totalorder %s188, %s189
      %p198 = scmp.eq.s32.totalorder %s31, 0
      %p199 = por %p197, %p198
      %p200 = scmp.ne.s32.totalorder %s188, %s189
      %p201 = scmp.eq.s32.totalorder %s32, 1
      %p202 = por %p200, %p201
      %p204 = scmp.ne.s32.totalorder %s189, %s203
      %p205 = scmp.eq.s32.totalorder %s32, 0
      %p206 = por %p204, %p205
      %s208 = sadd.s32 %s207, 1
      %p211 = scmp.eq.s32.totalorder %s26, 1
      %p212 = scmp.ne.s32.totalorder %s207, %s209
      %p213 = scmp.eq.s32.totalorder %s26, 0
      %p214 = por %p212, %p213
      %p215 = scmp.ne.s32.totalorder %s207, %s209
      %p216 = scmp.eq.s32.totalorder %s31, 1
      %p217 = por %p215, %p216
      %p218 = scmp.ne.s32.totalorder %s209, %s210
      %p219 = scmp.eq.s32.totalorder %s31, 0
      %p220 = por %p218, %p219
      %p221 = scmp.ne.s32.totalorder %s209, %s210
      %p222 = scmp.eq.s32.totalorder %s32, 1
      %p223 = por %p221, %p222
      %p225 = scmp.ne.s32.totalorder %s210, %s224
      %p226 = scmp.eq.s32.totalorder %s32, 0
      %p227 = por %p225, %p226
      %s229 = sadd.s32 %s228, 1
      %p232 = scmp.eq.s32.totalorder %s26, 1
      %p233 = scmp.ne.s32.totalorder %s228, %s230
      %p234 = scmp.eq.s32.totalorder %s26, 0
      %p235 = por %p233, %p234
      %p236 = scmp.ne.s32.totalorder %s228, %s230
      %p237 = scmp.eq.s32.totalorder %s31, 1
      %p238 = por %p236, %p237
      %p239 = scmp.ne.s32.totalorder %s230, %s231
      %p240 = scmp.eq.s32.totalorder %s31, 0
      %p241 = por %p239, %p240
      %p242 = scmp.ne.s32.totalorder %s230, %s231
      %p243 = scmp.eq.s32.totalorder %s32, 1
      %p244 = por %p242, %p243
      %p246 = scmp.ne.s32.totalorder %s231, %s245
      %p247 = scmp.eq.s32.totalorder %s32, 0
      %p248 = por %p246, %p247
      %s250 = sadd.s32 %s249, 1
      %p253 = scmp.eq.s32.totalorder %s26, 1
      %p254 = scmp.ne.s32.totalorder %s249, %s251
      %p255 = scmp.eq.s32.totalorder %s26, 0
      %p256 = por %p254, %p255
      %p257 = scmp.ne.s32.totalorder %s249, %s251
      %p258 = scmp.eq.s32.totalorder %s31, 1
      %p259 = por %p257, %p258
      %p260 = scmp.ne.s32.totalorder %s251, %s252
      %p261 = scmp.eq.s32.totalorder %s31, 0
      %p262 = por %p260, %p261
      %p263 = scmp.ne.s32.totalorder %s251, %s252
      %p264 = scmp.eq.s32.totalorder %s32, 1
      %p265 = por %p263, %p264
      %p267 = scmp.ne.s32.totalorder %s252, %s266
      %p268 = scmp.eq.s32.totalorder %s32, 0
      %p269 = por %p267, %p268
      %s271 = sadd.s32 %s270, 1
      %p274 = scmp.eq.s32.totalorder %s26, 1
      %p275 = scmp.ne.s32.totalorder %s270, %s272
      %p276 = scmp.eq.s32.totalorder %s26, 0
      %p277 = por %p275, %p276
      %p278 = scmp.ne.s32.totalorder %s270, %s272
      %p279 = scmp.eq.s32.totalorder %s31, 1
      %p280 = por %p278, %p279
      %p281 = scmp.ne.s32.totalorder %s272, %s273
      %p282 = scmp.eq.s32.totalorder %s31, 0
      %p283 = por %p281, %p282
      %p284 = scmp.ne.s32.totalorder %s272, %s273
      %p285 = scmp.eq.s32.totalorder %s32, 1
      %p286 = por %p284, %p285
      %p288 = scmp.ne.s32.totalorder %s273, %s287
      %p289 = scmp.eq.s32.totalorder %s32, 0
      %p290 = por %p288, %p289
      %s291 = ssub.s32 %s26, %s33
      %p292 = scmp.eq.s32.totalorder %s291, 0
      %s294 = sadd.s32 %s293, 1
      %s295 = scalar_select %p292, %s293, %s294
      %p298 = pneg %p292
      %p299 = scmp.eq.s32.totalorder %s26, 1
      %p300 = por %p298, %p299
      %p301 = scmp.ne.s32.totalorder %s293, %s296
      %p302 = scmp.eq.s32.totalorder %s26, 0
      %p303 = por %p301, %p302
      %p304 = scmp.ne.s32.totalorder %s293, %s296
      %p305 = scmp.eq.s32.totalorder %s31, 1
      %p306 = por %p304, %p305
      %p307 = scmp.ne.s32.totalorder %s296, %s297
      %p308 = scmp.eq.s32.totalorder %s31, 0
      %p309 = por %p307, %p308
      %p310 = scmp.ne.s32.totalorder %s296, %s297
      %p311 = scmp.eq.s32.totalorder %s32, 1
      %p312 = por %p310, %p311
      %p314 = scmp.ne.s32.totalorder %s297, %s313
      %p315 = scmp.eq.s32.totalorder %s32, 0
      %p316 = por %p314, %p315
      %p317 = scmp.le.s32.totalorder 1, %s26
      %p318 = scmp.lt.s32.totalorder %s26, 3
      %p319 = pnand %p317, %p318
      %p320 = pneg %p319
      // Predicated region
      $region9: #{tpu_custom_call.1} parent=5 // pred_check
        _
      $region10: #{tpu_custom_call.1} parent=5 // pred_check_branch
        %322 = sbr.rel (%p319) target = $region12
      $region11: #{tpu_custom_call.1} parent=5 // pred_region
        %s323 = ssub.s32 %s26, 1
        // Predicated region
        $region13: #{tpu_custom_call.1} parent=11 // pred_check
          %p324 = pneg %p73
        $region14: #{tpu_custom_call.1} parent=11 // pred_check_branch
          %326 = sbr.rel (%p324) target = $region16
        $region15: #{tpu_custom_call.1} parent=11 // pred_region
          _
        $region16: #{tpu_custom_call.1} parent=11 // pred_fallthru
          _
        // Predicated region
        $region17: #{tpu_custom_call.1} parent=11 // pred_check
          %p327 = pneg %p94
        $region18: #{tpu_custom_call.1} parent=11 // pred_check_branch
          %329 = sbr.rel (%p327) target = $region20
        $region19: #{tpu_custom_call.1} parent=11 // pred_region
          _
        $region20: #{tpu_custom_call.1} parent=11 // pred_fallthru
          _
        // Predicated region
        $region21: #{tpu_custom_call.1} parent=11 // pred_check
          %p330 = pneg %p115
        $region22: #{tpu_custom_call.1} parent=11 // pred_check_branch
          %332 = sbr.rel (%p330) target = $region24
        $region23: #{tpu_custom_call.1} parent=11 // pred_region
          %s334 = ssub.s32 3072, 3072
          %335 = vsyncadd [#allocation6], %s334
          %s336 = sshll.u32 [#allocation5], 4
          %s337 = int_to_ptr.vmem [resolvable:$true] %s336
          %342 = dma.hbm_to_vmem [thread:$0]  %s3, 3072, %s337, [#allocation6], 192, 192, 12
        $region24: #{tpu_custom_call.1} parent=11 // pred_fallthru
          _
        // Predicated region
        $region25: #{tpu_custom_call.1} parent=11 // pred_check
          %p343 = pneg %p136
        $region26: #{tpu_custom_call.1} parent=11 // pred_check_branch
          %345 = sbr.rel (%p343) target = $region28
        $region27: #{tpu_custom_call.1} parent=11 // pred_region
          %s347 = ssub.s32 1024, 1024
          %348 = vsyncadd [#allocation6], %s347
          %s349 = sshll.u32 [#allocation7], 4
          %s350 = int_to_ptr.vmem [resolvable:$true] %s349
          %355 = dma.hbm_to_vmem [thread:$0]  %s4, 1024, %s350, [#allocation6], 64, 64, 4
        $region28: #{tpu_custom_call.1} parent=11 // pred_fallthru
          _
        // Predicated region
        $region29: #{tpu_custom_call.1} parent=11 // pred_check
          %p356 = pneg %p157
        $region30: #{tpu_custom_call.1} parent=11 // pred_check_branch
          %358 = sbr.rel (%p356) target = $region32
        $region31: #{tpu_custom_call.1} parent=11 // pred_region
          _
        $region32: #{tpu_custom_call.1} parent=11 // pred_fallthru
          _
        // Predicated region
        $region33: #{tpu_custom_call.1} parent=11 // pred_check
          %p359 = pneg %p178
        $region34: #{tpu_custom_call.1} parent=11 // pred_check_branch
          %361 = sbr.rel (%p359) target = $region36
        $region35: #{tpu_custom_call.1} parent=11 // pred_region
          _
        $region36: #{tpu_custom_call.1} parent=11 // pred_fallthru
          _
        // Predicated region
        $region37: #{tpu_custom_call.1} parent=11 // pred_check
          %p362 = pneg %p199
        $region38: #{tpu_custom_call.1} parent=11 // pred_check_branch
          %364 = sbr.rel (%p362) target = $region40
        $region39: #{tpu_custom_call.1} parent=11 // pred_region
          _
        $region40: #{tpu_custom_call.1} parent=11 // pred_fallthru
          _
        // Predicated region
        $region41: #{tpu_custom_call.1} parent=11 // pred_check
          %p365 = pneg %p220
        $region42: #{tpu_custom_call.1} parent=11 // pred_check_branch
          %367 = sbr.rel (%p365) target = $region44
        $region43: #{tpu_custom_call.1} parent=11 // pred_region
          %s369 = ssub.s32 4096, 4096
          %370 = vsyncadd [#allocation9], %s369
          %s371 = sshll.u32 [#allocation8], 4
          %s372 = int_to_ptr.vmem [resolvable:$true] %s371
          %377 = dma.hbm_to_vmem [thread:$0]  %s8, 4096, %s372, [#allocation9], 256, 256, 16
        $region44: #{tpu_custom_call.1} parent=11 // pred_fallthru
          _
        // Predicated region
        $region45: #{tpu_custom_call.1} parent=11 // pred_check
          %p378 = pneg %p241
        $region46: #{tpu_custom_call.1} parent=11 // pred_check_branch
          %380 = sbr.rel (%p378) target = $region48
        $region47: #{tpu_custom_call.1} parent=11 // pred_region
          _
        $region48: #{tpu_custom_call.1} parent=11 // pred_fallthru
          _
        // Predicated region
        $region49: #{tpu_custom_call.1} parent=11 // pred_check
          %p381 = pneg %p262
        $region50: #{tpu_custom_call.1} parent=11 // pred_check_branch
          %383 = sbr.rel (%p381) target = $region52
        $region51: #{tpu_custom_call.1} parent=11 // pred_region
          %s385 = ssub.s32 4096, 4096
          %386 = vsyncadd [#allocation9], %s385
          %s387 = sshll.u32 [#allocation10], 4
          %s388 = int_to_ptr.vmem [resolvable:$true] %s387
          %393 = dma.hbm_to_vmem [thread:$0]  %s10, 4096, %s388, [#allocation9], 64, 64, 4
        $region52: #{tpu_custom_call.1} parent=11 // pred_fallthru
          _
        // Predicated region
        $region53: #{tpu_custom_call.1} parent=11 // pred_check
          %p394 = pneg %p283
        $region54: #{tpu_custom_call.1} parent=11 // pred_check_branch
          %396 = sbr.rel (%p394) target = $region56
        $region55: #{tpu_custom_call.1} parent=11 // pred_region
          _
        $region56: #{tpu_custom_call.1} parent=11 // pred_fallthru
          _
      $region12: #{tpu_custom_call.1} parent=5 // pred_fallthru
        _
      %p397 = scmp.lt.s32.totalorder %s26, 2
      // Predicated region
      $region57: #{tpu_custom_call.1} parent=5 // pred_check
        %p398 = pneg %p397
      $region58: #{tpu_custom_call.1} parent=5 // pred_check_branch
        %400 = sbr.rel (%p398) target = $region60
      $region59: #{tpu_custom_call.1} parent=5 // pred_region
        // Predicated region
        $region61: #{tpu_custom_call.1} parent=59 // pred_check
          %p401 = pneg %p46
        $region62: #{tpu_custom_call.1} parent=59 // pred_check_branch
          %403 = sbr.rel (%p401) target = $region64
        $region63: #{tpu_custom_call.1} parent=59 // pred_region
          %s404 = sand.u32 %s36, 1
          %s405 = scalar_lea.sflag [#allocation3], %s404
          %s406 = sand.u32 %s36, 1
          %s407 = smul.addr %s406, 8
          %s408 = scalar_lea.vmem [#allocation2], %s407
          %s410 = ssub.s32 128, 128
          %411 = vsyncadd %s405, %s410
          %s412 = smul.addr %s26, 128
          %s413 = scalar_lea.hbm %s0, %s412
          %s415 = sshll.u32 %s408, 4
          %s416 = int_to_ptr.vmem [resolvable:$true] %s415
          %418 = dma.hbm_to_vmem [thread:$0]  %s413, 128, %s416, %s405
        $region64: #{tpu_custom_call.1} parent=59 // pred_fallthru
          _
      $region60: #{tpu_custom_call.1} parent=5 // pred_fallthru
        _
      %p419 = scmp.le.s32.totalorder 1, %s26
      %p420 = scmp.lt.s32.totalorder %s26, 3
      %p421 = pnand %p419, %p420
      %p422 = pneg %p421
      // Predicated region
      $region65: #{tpu_custom_call.1} parent=5 // pred_check
        _
      $region66: #{tpu_custom_call.1} parent=5 // pred_check_branch
        %424 = sbr.rel (%p421) target = $region68
      $region67: #{tpu_custom_call.1} parent=5 // pred_region
        %s425 = ssub.s32 %s26, 1
        %s426 = sand.u32 %s39, 1
        %s427 = scalar_lea.sflag [#allocation3], %s426
        %s428 = sand.u32 %s39, 1
        %s429 = smul.addr %s428, 8
        %s430 = scalar_lea.vmem [#allocation2], %s429
        // Predicated region
        $region69: #{tpu_custom_call.1} parent=67 // pred_check
          %p431 = pneg %p52
        $region70: #{tpu_custom_call.1} parent=67 // pred_check_branch
          %433 = sbr.rel (%p431) target = $region72
        $region71: #{tpu_custom_call.1} parent=67 // pred_region
          %434 = dma.done %s427, 128
        $region72: #{tpu_custom_call.1} parent=67 // pred_fallthru
          _
        // Predicated region
        $region73: #{tpu_custom_call.1} parent=67 // pred_check
          %p435 = pneg %p115
        $region74: #{tpu_custom_call.1} parent=67 // pred_check_branch
          %437 = sbr.rel (%p435) target = $region76
        $region75: #{tpu_custom_call.1} parent=67 // pred_region
          %438 = dma.done [#allocation6], 3072
        $region76: #{tpu_custom_call.1} parent=67 // pred_fallthru
          _
        // Predicated region
        $region77: #{tpu_custom_call.1} parent=67 // pred_check
          %p439 = pneg %p136
        $region78: #{tpu_custom_call.1} parent=67 // pred_check_branch
          %441 = sbr.rel (%p439) target = $region80
        $region79: #{tpu_custom_call.1} parent=67 // pred_region
          %442 = dma.done [#allocation6], 1024
        $region80: #{tpu_custom_call.1} parent=67 // pred_fallthru
          _
        // Predicated region
        $region81: #{tpu_custom_call.1} parent=67 // pred_check
          %p443 = pneg %p220
        $region82: #{tpu_custom_call.1} parent=67 // pred_check_branch
          %445 = sbr.rel (%p443) target = $region84
        $region83: #{tpu_custom_call.1} parent=67 // pred_region
          %446 = dma.done [#allocation9], 4096
        $region84: #{tpu_custom_call.1} parent=67 // pred_fallthru
          _
        // Predicated region
        $region85: #{tpu_custom_call.1} parent=67 // pred_check
          %p447 = pneg %p262
        $region86: #{tpu_custom_call.1} parent=67 // pred_check_branch
          %449 = sbr.rel (%p447) target = $region88
        $region87: #{tpu_custom_call.1} parent=67 // pred_region
          %450 = dma.done [#allocation9], 4096
        $region88: #{tpu_custom_call.1} parent=67 // pred_fallthru
          _
        %s451 = sand.u32 %s39, 1
        %s452 = scalar_lea.sflag [#allocation3], %s451
        %s453 = sand.u32 %s39, 1
        %s454 = smul.addr %s453, 8
        %s455 = scalar_lea.vmem [#allocation2], %s454
        %p456 = pneg %p52
        %p457 = pneg %p49
        %p458 = pneg %p73
        %p459 = pneg %p70
        %p460 = pneg %p94
        %p461 = pneg %p91
        %p462 = pneg %p115
        %p463 = pneg %p112
        %p464 = pneg %p136
        %p465 = pneg %p133
        %p466 = pneg %p157
        %p467 = pneg %p154
        %p468 = pneg %p178
        %p469 = pneg %p175
        %p470 = pneg %p199
        %p471 = pneg %p196
        %p472 = pneg %p220
        %p473 = pneg %p217
        %p474 = pneg %p241
        %p475 = pneg %p238
        %p476 = pneg %p262
        %p477 = pneg %p259
        %p478 = pneg %p283
        %p479 = pneg %p280
        %p480 = pneg %p309
        %p481 = pneg %p306
        %s482 = sand.u32 %s296, 1
        %s483 = scalar_lea.sflag [#allocation4], %s482
        %s484 = sand.u32 %s296, 1
        %s485 = smul.addr %s484, 8
        %s486 = scalar_lea.vmem [#allocation11], %s485
        %v488 = vld [vmem:[%s430] sm:$0xff]
        %v489 = vld [vmem:[%s1] sm:$0x1]
        %v490 = vld [vmem:[%s2] sm:$0x1]
        %491 = vadd.xlane.f32.xlu0 %v488
        %v492 = vpop.xlane.xlu0 %491
        %v493 = vrcp.pop 128.0
        %v494 = vmul.f32 %v492, %v493
        %v495 = vsub.f32 %v488, %v494
        %v496 = vmul.f32 %v495, %v495
        %497 = vadd.xlane.f32.xlu0 %v496
        %v498 = vpop.xlane.xlu0 %497
        %v499 = vmul.f32 %v498, %v493
        %v500 = vadd.f32 %v499, 1e-05
        %v501 = vrsqrt.pop %v500
        %v502 = vmul.f32 %v495, %v501
        %v504 = vlaneseq
        %v505 = vshrl.u32 %v504, 7
        %v506 = vsub.s32 0, %v505
        %v507 = vrot.slane %v489, %v506
        %v509 = vmul.f32 %v502, %v507
        %v511 = vlaneseq
        %v512 = vshrl.u32 %v511, 7
        %v513 = vsub.s32 0, %v512
        %v514 = vrot.slane %v490, %v513
        %v516 = vadd.f32 %v509, %v514
        %v517 = vpack.c.bf16 %v516, %v516
        %v518 = vld [vmem:[#allocation5] sm:$0xff]
        %v519 = vld [vmem:[#allocation5 + $0x8] sm:$0xf]
        %v520 = vld [vmem:[#allocation5 + $0xc] sm:$0xff]
        %v521 = vld [vmem:[#allocation5 + $0x14] sm:$0xf]
        %v522 = vld [vmem:[#allocation5 + $0x18] sm:$0xff]
        %v523 = vld [vmem:[#allocation5 + $0x20] sm:$0xf]
        %v524 = vld [vmem:[#allocation5 + $0x24] sm:$0xff]
        %v525 = vld [vmem:[#allocation5 + $0x2c] sm:$0xf]
        %v526 = vld [vmem:[#allocation5 + $0x30] sm:$0xff]
        %v527 = vld [vmem:[#allocation5 + $0x38] sm:$0xf]
        %v528 = vld [vmem:[#allocation5 + $0x3c] sm:$0xff]
        %v529 = vld [vmem:[#allocation5 + $0x44] sm:$0xf]
        %v530 = vld [vmem:[#allocation5 + $0x48] sm:$0xff]
        %v531 = vld [vmem:[#allocation5 + $0x50] sm:$0xf]
        %v532 = vld [vmem:[#allocation5 + $0x54] sm:$0xff]
        %v533 = vld [vmem:[#allocation5 + $0x5c] sm:$0xf]
        %v534 = vld [vmem:[#allocation5 + $0x60] sm:$0xff]
        %v535 = vld [vmem:[#allocation5 + $0x68] sm:$0xf]
        %v536 = vld [vmem:[#allocation5 + $0x6c] sm:$0xff]
        %v537 = vld [vmem:[#allocation5 + $0x74] sm:$0xf]
        %v538 = vld [vmem:[#allocation5 + $0x78] sm:$0xff]
        %v539 = vld [vmem:[#allocation5 + $0x80] sm:$0xf]
        %v540 = vld [vmem:[#allocation5 + $0x84] sm:$0xff]
        %v541 = vld [vmem:[#allocation5 + $0x8c] sm:$0xf]
        %v542 = vld [vmem:[#allocation5 + $0x90] sm:$0xff]
        %v543 = vld [vmem:[#allocation5 + $0x98] sm:$0xf]
        %v544 = vld [vmem:[#allocation5 + $0x9c] sm:$0xff]
        %v545 = vld [vmem:[#allocation5 + $0xa4] sm:$0xf]
        %v546 = vld [vmem:[#allocation5 + $0xa8] sm:$0xff]
        %v547 = vld [vmem:[#allocation5 + $0xb0] sm:$0xf]
        %v548 = vld [vmem:[#allocation5 + $0xb4] sm:$0xff]
        %v549 = vld [vmem:[#allocation5 + $0xbc] sm:$0xf]
        %v582 = vunpack.c.l.b16 %v518
        %v583 = vunpack.c.h.b16 %v518
        %v584 = vunpack.c.l.b16 %v519
        %v585 = vunpack.c.l.b16 %v520
        %v586 = vunpack.c.h.b16 %v520
        %v587 = vunpack.c.l.b16 %v521
        %v588 = vunpack.c.l.b16 %v522
        %v589 = vunpack.c.h.b16 %v522
        %v590 = vunpack.c.l.b16 %v523
        %v591 = vunpack.c.l.b16 %v524
        %v592 = vunpack.c.h.b16 %v524
        %v593 = vunpack.c.l.b16 %v525
        %v594 = vunpack.c.l.b16 %v526
        %v595 = vunpack.c.h.b16 %v526
        %v596 = vunpack.c.l.b16 %v527
        %v597 = vunpack.c.l.b16 %v528
        %v598 = vunpack.c.h.b16 %v528
        %v599 = vunpack.c.l.b16 %v529
        %v600 = vunpack.c.l.b16 %v530
        %v601 = vunpack.c.h.b16 %v530
        %v602 = vunpack.c.l.b16 %v531
        %v603 = vunpack.c.l.b16 %v532
        %v604 = vunpack.c.h.b16 %v532
        %v605 = vunpack.c.l.b16 %v533
        %v606 = vunpack.c.l.b16 %v534
        %v607 = vunpack.c.h.b16 %v534
        %v608 = vunpack.c.l.b16 %v535
        %v609 = vunpack.c.l.b16 %v536
        %v610 = vunpack.c.h.b16 %v536
        %v611 = vunpack.c.l.b16 %v537
        %v612 = vunpack.c.l.b16 %v538
        %v613 = vunpack.c.h.b16 %v538
        %v614 = vunpack.c.l.b16 %v539
        %v615 = vunpack.c.l.b16 %v540
        %v616 = vunpack.c.h.b16 %v540
        %v617 = vunpack.c.l.b16 %v541
        %v618 = vunpack.c.l.b16 %v542
        %v619 = vunpack.c.h.b16 %v542
        %v620 = vunpack.c.l.b16 %v543
        %v621 = vunpack.c.l.b16 %v544
        %v622 = vunpack.c.h.b16 %v544
        %v623 = vunpack.c.l.b16 %v545
        %v624 = vunpack.c.l.b16 %v546
        %v625 = vunpack.c.h.b16 %v546
        %v626 = vunpack.c.l.b16 %v547
        %v627 = vunpack.c.l.b16 %v548
        %v628 = vunpack.c.h.b16 %v548
        %v629 = vunpack.c.l.b16 %v549
        %v630 = vpack.c.b16 %v585, %v582
        %v631 = vpack.c.b16 %v586, %v583
        %v632 = vpack.c.b16 %v587, %v584
        %v633 = vpack.c.b16 %v591, %v588
        %v634 = vpack.c.b16 %v592, %v589
        %v635 = vpack.c.b16 %v593, %v590
        %v636 = vpack.c.b16 %v597, %v594
        %v637 = vpack.c.b16 %v598, %v595
        %v638 = vpack.c.b16 %v599, %v596
        %v639 = vpack.c.b16 %v603, %v600
        %v640 = vpack.c.b16 %v604, %v601
        %v641 = vpack.c.b16 %v605, %v602
        %v642 = vpack.c.b16 %v609, %v606
        %v643 = vpack.c.b16 %v610, %v607
        %v644 = vpack.c.b16 %v611, %v608
        %v645 = vpack.c.b16 %v615, %v612
        %v646 = vpack.c.b16 %v616, %v613
        %v647 = vpack.c.b16 %v617, %v614
        %v648 = vpack.c.b16 %v621, %v618
        %v649 = vpack.c.b16 %v622, %v619
        %v650 = vpack.c.b16 %v623, %v620
        %v651 = vpack.c.b16 %v627, %v624
        %v652 = vpack.c.b16 %v628, %v625
        %v653 = vpack.c.b16 %v629, %v626
        %678 = vmatprep.subr.bf16.mxu0 %v631
        %679 = vmatpush1.bf16.msra.mxu0 %v630
        %680 = vmatprep.subr.bf16.mxu0 %v634
        %681 = vmatpush1.bf16.msra.mxu0 %v633
        %682 = vmatprep.subr.bf16.mxu0 %v637
        %683 = vmatpush1.bf16.msra.mxu0 %v636
        %684 = vmatprep.subr.bf16.mxu0 %v640
        %685 = vmatpush1.bf16.msra.mxu0 %v639
        %686 = vmatprep.subr.bf16.mxu0 %v643
        %687 = vmatpush1.bf16.msra.mxu0 %v642
        %688 = vmatprep.subr.bf16.mxu0 %v646
        %689 = vmatpush1.bf16.msra.mxu0 %v645
        %690 = vmatprep.subr.bf16.mxu0 %v649
        %691 = vmatpush1.bf16.msra.mxu0 %v648
        %692 = vmatprep.subr.bf16.mxu0 %v652
        %693 = vmatpush1.bf16.msra.mxu0 %v651
        %694 = vmatprep.subr.bf16.mxu0 0
        %695 = vmatpush1.bf16.msra.mxu0 0
        %696 = vmatprep.subr.bf16.mxu0 0
        %697 = vmatpush1.bf16.msra.mxu0 0
        %698 = vmatprep.subr.bf16.mxu0 0
        %699 = vmatpush1.bf16.msra.mxu0 0
        %700 = vmatprep.subr.bf16.mxu0 0
        %701 = vmatpush1.bf16.msra.mxu0 0
        %702 = vmatprep.subr.bf16.mxu0 0
        %703 = vmatpush1.bf16.msra.mxu0 0
        %704 = vmatprep.subr.bf16.mxu0 0
        %705 = vmatpush1.bf16.msra.mxu0 0
        %706 = vmatprep.subr.bf16.mxu0 0
        %707 = vmatpush1.bf16.msra.mxu0 0
        %708 = vmatprep.subr.bf16.mxu0 0
        %709 = vmatpush1.bf16.msra.mxu0 0
        %710 = vmatprep.mubr.bf16.mxu0 0
        %711 = vmatmul.mubr.bf16.gmra.mrb[0].mxu0 %v517
        %v712 = vpop.f32.mrb[0].mxu0
        %v713 = vadd.f32 0.0, %v712
        %v714 = vpop.f32.mrb[0].mxu0
        %v715 = vadd.f32 0.0, %v714
        %v716 = vpop.f32.mrb[0].mxu0
        %v717 = vpop.f32.mrb[0].mxu0
        %718 = vdwg.mxu0
        %719 = vmatprep.subr.bf16.mxu0 0
        %720 = vmatpush1.bf16.msra.mxu0 %v632
        %721 = vmatprep.subr.bf16.mxu0 0
        %722 = vmatpush1.bf16.msra.mxu0 %v635
        %723 = vmatprep.subr.bf16.mxu0 0
        %724 = vmatpush1.bf16.msra.mxu0 %v638
        %725 = vmatprep.subr.bf16.mxu0 0
        %726 = vmatpush1.bf16.msra.mxu0 %v641
        %727 = vmatprep.subr.bf16.mxu0 0
        %728 = vmatpush1.bf16.msra.mxu0 %v644
        %729 = vmatprep.subr.bf16.mxu0 0
        %730 = vmatpush1.bf16.msra.mxu0 %v647
        %731 = vmatprep.subr.bf16.mxu0 0
        %732 = vmatpush1.bf16.msra.mxu0 %v650
        %733 = vmatprep.subr.bf16.mxu0 0
        %734 = vmatpush1.bf16.msra.mxu0 %v653
        %735 = vmatprep.subr.bf16.mxu0 0
        %736 = vmatpush1.bf16.msra.mxu0 0
        %737 = vmatprep.subr.bf16.mxu0 0
        %738 = vmatpush1.bf16.msra.mxu0 0
        %739 = vmatprep.subr.bf16.mxu0 0
        %740 = vmatpush1.bf16.msra.mxu0 0
        %741 = vmatprep.subr.bf16.mxu0 0
        %742 = vmatpush1.bf16.msra.mxu0 0
        %743 = vmatprep.subr.bf16.mxu0 0
        %744 = vmatpush1.bf16.msra.mxu0 0
        %745 = vmatprep.subr.bf16.mxu0 0
        %746 = vmatpush1.bf16.msra.mxu0 0
        %747 = vmatprep.subr.bf16.mxu0 0
        %748 = vmatpush1.bf16.msra.mxu0 0
        %749 = vmatprep.subr.bf16.mxu0 0
        %750 = vmatpush1.bf16.msra.mxu0 0
        %751 = vmatprep.mubr.bf16.mxu0 0
        %752 = vmatmul.mubr.bf16.gmra.mrb[0].mxu0 %v517
        %v753 = vpop.f32.mrb[0].mxu0
        %v754 = vadd.f32 0.0, %v753
        %v755 = vpop.f32.mrb[0].mxu0
        %v756 = vpop.f32.mrb[0].mxu0
        %v757 = vpop.f32.mrb[0].mxu0
        %758 = vdwg.mxu0
        %v759 = vpack.c.bf16 %v713, %v713
        %v760 = vpack.c.bf16 %v715, %v715
        %v761 = vpack.c.bf16 %v754, %v754
        %763 = vrot.lane.b32.xlu0 %v759, 96
        %v764 = vpop.permute.xlu0 %763
        %765 = vrot.lane.b32.xlu0 %v759, 64
        %v766 = vpop.permute.xlu0 %765
        %767 = vrot.lane.b32.xlu0 %v759, 32
        %v768 = vpop.permute.xlu0 %767
        %v770 = vunpack.c.l.s4 1983009808
        %v771 = vunpack.c.0.s8 %v770
        %v772 = vlaneseq
        %v773 = vshrl.u32 %v772, 7
        %v774 = vsub.s32 %v771, %v773
        %v775 = vrot.slane %v759, %v774
        %v778 = vunpack.c.l.s4 1983009808
        %v779 = vunpack.c.0.s8 %v778
        %v780 = vlaneseq
        %v781 = vshrl.u32 %v780, 7
        %v782 = vsub.s32 %v779, %v781
        %v783 = vrot.slane %v766, %v782
        %v784 = vcombine.low %v775, %v783
        %v785 = vcombine.high %v775, %v783
        %v787 = vunpack.c.l.s4 1934713408
        %v788 = vunpack.c.0.s8 %v787
        %v789 = vlaneseq
        %v790 = vshrl.u32 %v789, 7
        %v791 = vsub.s32 %v788, %v790
        %v792 = vrot.slane %v784, %v791
        %v794 = vunpack.c.l.s4 1934713408
        %v795 = vunpack.c.0.s8 %v794
        %v796 = vlaneseq
        %v797 = vshrl.u32 %v796, 7
        %v798 = vsub.s32 %v795, %v797
        %v799 = vrot.slane %v785, %v798
        %v800 = vcombine.high %v792, 0
        %v801 = vcombine.high %v799, 0
        %v804 = vunpack.c.l.s4 1983009808
        %v805 = vunpack.c.0.s8 %v804
        %v806 = vlaneseq
        %v807 = vshrl.u32 %v806, 7
        %v808 = vsub.s32 %v805, %v807
        %v809 = vrot.slane %v764, %v808
        %v812 = vunpack.c.l.s4 1983009808
        %v813 = vunpack.c.0.s8 %v812
        %v814 = vlaneseq
        %v815 = vshrl.u32 %v814, 7
        %v816 = vsub.s32 %v813, %v815
        %v817 = vrot.slane %v768, %v816
        %v818 = vcombine.low %v809, %v817
        %v819 = vcombine.high %v809, %v817
        %v821 = vunpack.c.l.s4 1934713408
        %v822 = vunpack.c.0.s8 %v821
        %v823 = vlaneseq
        %v824 = vshrl.u32 %v823, 7
        %v825 = vsub.s32 %v822, %v824
        %v826 = vrot.slane %v818, %v825
        %v828 = vunpack.c.l.s4 1934713408
        %v829 = vunpack.c.0.s8 %v828
        %v830 = vlaneseq
        %v831 = vshrl.u32 %v830, 7
        %v832 = vsub.s32 %v829, %v831
        %v833 = vrot.slane %v819, %v832
        %v834 = vcombine.high %v826, 0
        %v835 = vcombine.high %v833, 0
        %v838 = vpack.i.b16 %v826, %v792
        %v840 = vshrl.u32 %v792, 16
        %v841 = vshrl.u32 %v826, 16
        %v842 = vpack.i.b16 %v841, %v840
        %v846 = vpack.i.b16 %v834, %v800
        %v848 = vshrl.u32 %v800, 16
        %v849 = vshrl.u32 %v834, 16
        %v850 = vpack.i.b16 %v849, %v848
        %v854 = vpack.i.b16 %v833, %v799
        %v856 = vshrl.u32 %v799, 16
        %v857 = vshrl.u32 %v833, 16
        %v858 = vpack.i.b16 %v857, %v856
        %v862 = vpack.i.b16 %v835, %v801
        %v864 = vshrl.u32 %v801, 16
        %v865 = vshrl.u32 %v835, 16
        %v866 = vpack.i.b16 %v865, %v864
        %v868 = vcombine.low %v838, %v854
        %v870 = vunpack.c.l.s4 1983009808
        %v871 = vunpack.c.0.s8 %v870
        %v872 = vlaneseq
        %v873 = vshrl.u32 %v872, 7
        %v874 = vsub.s32 %v871, %v873
        %v875 = vrot.slane %v868, %v874
        %v876 = vcombine.low %v846, %v862
        %v878 = vunpack.c.l.s4 1983009808
        %v879 = vunpack.c.0.s8 %v878
        %v880 = vlaneseq
        %v881 = vshrl.u32 %v880, 7
        %v882 = vsub.s32 %v879, %v881
        %v883 = vrot.slane %v876, %v882
        %v884 = vcombine.low %v875, %v883
        %v886 = vunpack.c.l.s4 1934713408
        %v887 = vunpack.c.0.s8 %v886
        %v888 = vlaneseq
        %v889 = vshrl.u32 %v888, 7
        %v890 = vsub.s32 %v887, %v889
        %v891 = vrot.slane %v884, %v890
        %v892 = vcombine.high %v891, 0
        %v893 = vcombine.low %v842, %v858
        %v895 = vunpack.c.l.s4 1983009808
        %v896 = vunpack.c.0.s8 %v895
        %v897 = vlaneseq
        %v898 = vshrl.u32 %v897, 7
        %v899 = vsub.s32 %v896, %v898
        %v900 = vrot.slane %v893, %v899
        %v901 = vcombine.low %v850, %v866
        %v903 = vunpack.c.l.s4 1983009808
        %v904 = vunpack.c.0.s8 %v903
        %v905 = vlaneseq
        %v906 = vshrl.u32 %v905, 7
        %v907 = vsub.s32 %v904, %v906
        %v908 = vrot.slane %v901, %v907
        %v909 = vcombine.low %v900, %v908
        %v911 = vunpack.c.l.s4 1934713408
        %v912 = vunpack.c.0.s8 %v911
        %v913 = vlaneseq
        %v914 = vshrl.u32 %v913, 7
        %v915 = vsub.s32 %v912, %v914
        %v916 = vrot.slane %v909, %v915
        %v917 = vcombine.high %v916, 0
        %v920 = vpack.i.b16 %v916, %v891
        %v921 = vshrl.u32 %v891, 16
        %v922 = vshrl.u32 %v916, 16
        %v923 = vpack.i.b16 %v922, %v921
        %v926 = vpack.i.b16 %v917, %v892
        %v927 = vshrl.u32 %v892, 16
        %v928 = vshrl.u32 %v917, 16
        %v929 = vpack.i.b16 %v928, %v927
        %931 = vrot.lane.b32.xlu0 %v760, 96
        %v932 = vpop.permute.xlu0 %931
        %933 = vrot.lane.b32.xlu0 %v760, 64
        %v934 = vpop.permute.xlu0 %933
        %935 = vrot.lane.b32.xlu0 %v760, 32
        %v936 = vpop.permute.xlu0 %935
        %v938 = vunpack.c.l.s4 1983009808
        %v939 = vunpack.c.0.s8 %v938
        %v940 = vlaneseq
        %v941 = vshrl.u32 %v940, 7
        %v942 = vsub.s32 %v939, %v941
        %v943 = vrot.slane %v760, %v942
        %v946 = vunpack.c.l.s4 1983009808
        %v947 = vunpack.c.0.s8 %v946
        %v948 = vlaneseq
        %v949 = vshrl.u32 %v948, 7
        %v950 = vsub.s32 %v947, %v949
        %v951 = vrot.slane %v934, %v950
        %v952 = vcombine.low %v943, %v951
        %v953 = vcombine.high %v943, %v951
        %v955 = vunpack.c.l.s4 1934713408
        %v956 = vunpack.c.0.s8 %v955
        %v957 = vlaneseq
        %v958 = vshrl.u32 %v957, 7
        %v959 = vsub.s32 %v956, %v958
        %v960 = vrot.slane %v952, %v959
        %v962 = vunpack.c.l.s4 1934713408
        %v963 = vunpack.c.0.s8 %v962
        %v964 = vlaneseq
        %v965 = vshrl.u32 %v964, 7
        %v966 = vsub.s32 %v963, %v965
        %v967 = vrot.slane %v953, %v966
        %v968 = vcombine.high %v960, 0
        %v969 = vcombine.high %v967, 0
        %v972 = vunpack.c.l.s4 1983009808
        %v973 = vunpack.c.0.s8 %v972
        %v974 = vlaneseq
        %v975 = vshrl.u32 %v974, 7
        %v976 = vsub.s32 %v973, %v975
        %v977 = vrot.slane %v932, %v976
        %v980 = vunpack.c.l.s4 1983009808
        %v981 = vunpack.c.0.s8 %v980
        %v982 = vlaneseq
        %v983 = vshrl.u32 %v982, 7
        %v984 = vsub.s32 %v981, %v983
        %v985 = vrot.slane %v936, %v984
        %v986 = vcombine.low %v977, %v985
        %v987 = vcombine.high %v977, %v985
        %v989 = vunpack.c.l.s4 1934713408
        %v990 = vunpack.c.0.s8 %v989
        %v991 = vlaneseq
        %v992 = vshrl.u32 %v991, 7
        %v993 = vsub.s32 %v990, %v992
        %v994 = vrot.slane %v986, %v993
        %v996 = vunpack.c.l.s4 1934713408
        %v997 = vunpack.c.0.s8 %v996
        %v998 = vlaneseq
        %v999 = vshrl.u32 %v998, 7
        %v1000 = vsub.s32 %v997, %v999
        %v1001 = vrot.slane %v987, %v1000
        %v1002 = vcombine.high %v994, 0
        %v1003 = vcombine.high %v1001, 0
        %v1006 = vpack.i.b16 %v994, %v960
        %v1008 = vshrl.u32 %v960, 16
        %v1009 = vshrl.u32 %v994, 16
        %v1010 = vpack.i.b16 %v1009, %v1008
        %v1014 = vpack.i.b16 %v1002, %v968
        %v1016 = vshrl.u32 %v968, 16
        %v1017 = vshrl.u32 %v1002, 16
        %v1018 = vpack.i.b16 %v1017, %v1016
        %v1022 = vpack.i.b16 %v1001, %v967
        %v1024 = vshrl.u32 %v967, 16
        %v1025 = vshrl.u32 %v1001, 16
        %v1026 = vpack.i.b16 %v1025, %v1024
        %v1030 = vpack.i.b16 %v1003, %v969
        %v1032 = vshrl.u32 %v969, 16
        %v1033 = vshrl.u32 %v1003, 16
        %v1034 = vpack.i.b16 %v1033, %v1032
        %v1036 = vcombine.low %v1006, %v1022
        %v1038 = vunpack.c.l.s4 1983009808
        %v1039 = vunpack.c.0.s8 %v1038
        %v1040 = vlaneseq
        %v1041 = vshrl.u32 %v1040, 7
        %v1042 = vsub.s32 %v1039, %v1041
        %v1043 = vrot.slane %v1036, %v1042
        %v1044 = vcombine.low %v1014, %v1030
        %v1046 = vunpack.c.l.s4 1983009808
        %v1047 = vunpack.c.0.s8 %v1046
        %v1048 = vlaneseq
        %v1049 = vshrl.u32 %v1048, 7
        %v1050 = vsub.s32 %v1047, %v1049
        %v1051 = vrot.slane %v1044, %v1050
        %v1052 = vcombine.low %v1043, %v1051
        %v1054 = vunpack.c.l.s4 1934713408
        %v1055 = vunpack.c.0.s8 %v1054
        %v1056 = vlaneseq
        %v1057 = vshrl.u32 %v1056, 7
        %v1058 = vsub.s32 %v1055, %v1057
        %v1059 = vrot.slane %v1052, %v1058
        %v1060 = vcombine.high %v1059, 0
        %v1061 = vcombine.low %v1010, %v1026
        %v1063 = vunpack.c.l.s4 1983009808
        %v1064 = vunpack.c.0.s8 %v1063
        %v1065 = vlaneseq
        %v1066 = vshrl.u32 %v1065, 7
        %v1067 = vsub.s32 %v1064, %v1066
        %v1068 = vrot.slane %v1061, %v1067
        %v1069 = vcombine.low %v1018, %v1034
        %v1071 = vunpack.c.l.s4 1983009808
        %v1072 = vunpack.c.0.s8 %v1071
        %v1073 = vlaneseq
        %v1074 = vshrl.u32 %v1073, 7
        %v1075 = vsub.s32 %v1072, %v1074
        %v1076 = vrot.slane %v1069, %v1075
        %v1077 = vcombine.low %v1068, %v1076
        %v1079 = vunpack.c.l.s4 1934713408
        %v1080 = vunpack.c.0.s8 %v1079
        %v1081 = vlaneseq
        %v1082 = vshrl.u32 %v1081, 7
        %v1083 = vsub.s32 %v1080, %v1082
        %v1084 = vrot.slane %v1077, %v1083
        %v1085 = vcombine.high %v1084, 0
        %v1088 = vpack.i.b16 %v1084, %v1059
        %v1089 = vshrl.u32 %v1059, 16
        %v1090 = vshrl.u32 %v1084, 16
        %v1091 = vpack.i.b16 %v1090, %v1089
        %v1094 = vpack.i.b16 %v1085, %v1060
        %v1095 = vshrl.u32 %v1060, 16
        %v1096 = vshrl.u32 %v1085, 16
        %v1097 = vpack.i.b16 %v1096, %v1095
        %1099 = vrot.lane.b32.xlu0 %v761, 96
        %v1100 = vpop.permute.xlu0 %1099
        %1101 = vrot.lane.b32.xlu0 %v761, 64
        %v1102 = vpop.permute.xlu0 %1101
        %1103 = vrot.lane.b32.xlu0 %v761, 32
        %v1104 = vpop.permute.xlu0 %1103
        %v1106 = vunpack.c.l.s4 1983009808
        %v1107 = vunpack.c.0.s8 %v1106
        %v1108 = vlaneseq
        %v1109 = vshrl.u32 %v1108, 7
        %v1110 = vsub.s32 %v1107, %v1109
        %v1111 = vrot.slane %v761, %v1110
        %v1114 = vunpack.c.l.s4 1983009808
        %v1115 = vunpack.c.0.s8 %v1114
        %v1116 = vlaneseq
        %v1117 = vshrl.u32 %v1116, 7
        %v1118 = vsub.s32 %v1115, %v1117
        %v1119 = vrot.slane %v1102, %v1118
        %v1120 = vcombine.low %v1111, %v1119
        %v1121 = vcombine.high %v1111, %v1119
        %v1123 = vunpack.c.l.s4 1934713408
        %v1124 = vunpack.c.0.s8 %v1123
        %v1125 = vlaneseq
        %v1126 = vshrl.u32 %v1125, 7
        %v1127 = vsub.s32 %v1124, %v1126
        %v1128 = vrot.slane %v1120, %v1127
        %v1130 = vunpack.c.l.s4 1934713408
        %v1131 = vunpack.c.0.s8 %v1130
        %v1132 = vlaneseq
        %v1133 = vshrl.u32 %v1132, 7
        %v1134 = vsub.s32 %v1131, %v1133
        %v1135 = vrot.slane %v1121, %v1134
        %v1136 = vcombine.high %v1128, 0
        %v1137 = vcombine.high %v1135, 0
        %v1140 = vunpack.c.l.s4 1983009808
        %v1141 = vunpack.c.0.s8 %v1140
        %v1142 = vlaneseq
        %v1143 = vshrl.u32 %v1142, 7
        %v1144 = vsub.s32 %v1141, %v1143
        %v1145 = vrot.slane %v1100, %v1144
        %v1148 = vunpack.c.l.s4 1983009808
        %v1149 = vunpack.c.0.s8 %v1148
        %v1150 = vlaneseq
        %v1151 = vshrl.u32 %v1150, 7
        %v1152 = vsub.s32 %v1149, %v1151
        %v1153 = vrot.slane %v1104, %v1152
        %v1154 = vcombine.low %v1145, %v1153
        %v1155 = vcombine.high %v1145, %v1153
        %v1157 = vunpack.c.l.s4 1934713408
        %v1158 = vunpack.c.0.s8 %v1157
        %v1159 = vlaneseq
        %v1160 = vshrl.u32 %v1159, 7
        %v1161 = vsub.s32 %v1158, %v1160
        %v1162 = vrot.slane %v1154, %v1161
        %v1164 = vunpack.c.l.s4 1934713408
        %v1165 = vunpack.c.0.s8 %v1164
        %v1166 = vlaneseq
        %v1167 = vshrl.u32 %v1166, 7
        %v1168 = vsub.s32 %v1165, %v1167
        %v1169 = vrot.slane %v1155, %v1168
        %v1170 = vcombine.high %v1162, 0
        %v1171 = vcombine.high %v1169, 0
        %v1174 = vpack.i.b16 %v1162, %v1128
        %v1176 = vshrl.u32 %v1128, 16
        %v1177 = vshrl.u32 %v1162, 16
        %v1178 = vpack.i.b16 %v1177, %v1176
        %v1182 = vpack.i.b16 %v1170, %v1136
        %v1184 = vshrl.u32 %v1136, 16
        %v1185 = vshrl.u32 %v1170, 16
        %v1186 = vpack.i.b16 %v1185, %v1184
        %v1190 = vpack.i.b16 %v1169, %v1135
        %v1192 = vshrl.u32 %v1135, 16
        %v1193 = vshrl.u32 %v1169, 16
        %v1194 = vpack.i.b16 %v1193, %v1192
        %v1198 = vpack.i.b16 %v1171, %v1137
        %v1200 = vshrl.u32 %v1137, 16
        %v1201 = vshrl.u32 %v1171, 16
        %v1202 = vpack.i.b16 %v1201, %v1200
        %v1204 = vcombine.low %v1174, %v1190
        %v1206 = vunpack.c.l.s4 1983009808
        %v1207 = vunpack.c.0.s8 %v1206
        %v1208 = vlaneseq
        %v1209 = vshrl.u32 %v1208, 7
        %v1210 = vsub.s32 %v1207, %v1209
        %v1211 = vrot.slane %v1204, %v1210
        %v1212 = vcombine.low %v1182, %v1198
        %v1214 = vunpack.c.l.s4 1983009808
        %v1215 = vunpack.c.0.s8 %v1214
        %v1216 = vlaneseq
        %v1217 = vshrl.u32 %v1216, 7
        %v1218 = vsub.s32 %v1215, %v1217
        %v1219 = vrot.slane %v1212, %v1218
        %v1220 = vcombine.low %v1211, %v1219
        %v1222 = vunpack.c.l.s4 1934713408
        %v1223 = vunpack.c.0.s8 %v1222
        %v1224 = vlaneseq
        %v1225 = vshrl.u32 %v1224, 7
        %v1226 = vsub.s32 %v1223, %v1225
        %v1227 = vrot.slane %v1220, %v1226
        %v1228 = vcombine.high %v1227, 0
        %v1229 = vcombine.low %v1178, %v1194
        %v1231 = vunpack.c.l.s4 1983009808
        %v1232 = vunpack.c.0.s8 %v1231
        %v1233 = vlaneseq
        %v1234 = vshrl.u32 %v1233, 7
        %v1235 = vsub.s32 %v1232, %v1234
        %v1236 = vrot.slane %v1229, %v1235
        %v1237 = vcombine.low %v1186, %v1202
        %v1239 = vunpack.c.l.s4 1983009808
        %v1240 = vunpack.c.0.s8 %v1239
        %v1241 = vlaneseq
        %v1242 = vshrl.u32 %v1241, 7
        %v1243 = vsub.s32 %v1240, %v1242
        %v1244 = vrot.slane %v1237, %v1243
        %v1245 = vcombine.low %v1236, %v1244
        %v1247 = vunpack.c.l.s4 1934713408
        %v1248 = vunpack.c.0.s8 %v1247
        %v1249 = vlaneseq
        %v1250 = vshrl.u32 %v1249, 7
        %v1251 = vsub.s32 %v1248, %v1250
        %v1252 = vrot.slane %v1245, %v1251
        %v1253 = vcombine.high %v1252, 0
        %v1256 = vpack.i.b16 %v1252, %v1227
        %v1257 = vshrl.u32 %v1227, 16
        %v1258 = vshrl.u32 %v1252, 16
        %v1259 = vpack.i.b16 %v1258, %v1257
        %v1262 = vpack.i.b16 %v1253, %v1228
        %v1263 = vshrl.u32 %v1228, 16
        %v1264 = vshrl.u32 %v1253, 16
        %v1265 = vpack.i.b16 %v1264, %v1263
        %vm1266 = vcmask 261120
        %v1268 = vsel %vm1266, %v920, 0
        %v1271 = vsel %vm1266, %v1088, 0
        %1273 = vmatprep.subr.bf16.mxu0 0
        %1274 = vmatpush1.bf16.xpose.msra.mxu0 %v1271
        %1275 = vmatprep.subr.bf16.mxu0 0
        %1276 = vmatpush1.bf16.xpose.msra.mxu0 0
        %1277 = vmatprep.subr.bf16.mxu0 0
        %1278 = vmatpush1.bf16.xpose.msra.mxu0 0
        %1279 = vmatprep.subr.bf16.mxu0 0
        %1280 = vmatpush1.bf16.xpose.msra.mxu0 0
        %1281 = vmatprep.subr.bf16.mxu0 0
        %1282 = vmatpush1.bf16.xpose.msra.mxu0 0
        %1283 = vmatprep.subr.bf16.mxu0 0
        %1284 = vmatpush1.bf16.xpose.msra.mxu0 0
        %1285 = vmatprep.subr.bf16.mxu0 0
        %1286 = vmatpush1.bf16.xpose.msra.mxu0 0
        %1287 = vmatprep.subr.bf16.mxu0 0
        %1288 = vmatpush1.bf16.xpose.msra.mxu0 0
        %1289 = vmatprep.subr.bf16.mxu0 0
        %1290 = vmatpush1.bf16.xpose.msra.mxu0 0
        %1291 = vmatprep.subr.bf16.mxu0 0
        %1292 = vmatpush1.bf16.xpose.msra.mxu0 0
        %1293 = vmatprep.subr.bf16.mxu0 0
        %1294 = vmatpush1.bf16.xpose.msra.mxu0 0
        %1295 = vmatprep.subr.bf16.mxu0 0
        %1296 = vmatpush1.bf16.xpose.msra.mxu0 0
        %1297 = vmatprep.subr.bf16.mxu0 0
        %1298 = vmatpush1.bf16.xpose.msra.mxu0 0
        %1299 = vmatprep.subr.bf16.mxu0 0
        %1300 = vmatpush1.bf16.xpose.msra.mxu0 0
        %1301 = vmatprep.subr.bf16.mxu0 0
        %1302 = vmatpush1.bf16.xpose.msra.mxu0 0
        %1303 = vmatprep.subr.bf16.mxu0 0
        %1304 = vmatpush1.bf16.xpose.msra.mxu0 0
        %1305 = vmatprep.mubr.bf16.mxu0 0
        %1306 = vmatmul.mubr.bf16.gmra.mrb[0].mxu0 %v1268
        %v1307 = vpop.f32.mrb[0].mxu0
        %v1308 = vadd.f32 0.0, %v1307
        %v1309 = vpop.f32.mrb[0].mxu0
        %v1310 = vpop.f32.mrb[0].mxu0
        %v1311 = vpop.f32.mrb[0].mxu0
        %1312 = vdwg.mxu0
        %v1314 = vsel %vm1266, %v923, 0
        %v1317 = vsel %vm1266, %v1091, 0
        %1319 = vmatprep.subr.bf16.mxu0 0
        %1320 = vmatpush1.bf16.xpose.msra.mxu0 %v1317
        %1321 = vmatprep.subr.bf16.mxu0 0
        %1322 = vmatpush1.bf16.xpose.msra.mxu0 0
        %1323 = vmatprep.subr.bf16.mxu0 0
        %1324 = vmatpush1.bf16.xpose.msra.mxu0 0
        %1325 = vmatprep.subr.bf16.mxu0 0
        %1326 = vmatpush1.bf16.xpose.msra.mxu0 0
        %1327 = vmatprep.subr.bf16.mxu0 0
        %1328 = vmatpush1.bf16.xpose.msra.mxu0 0
        %1329 = vmatprep.subr.bf16.mxu0 0
        %1330 = vmatpush1.bf16.xpose.msra.mxu0 0
        %1331 = vmatprep.subr.bf16.mxu0 0
        %1332 = vmatpush1.bf16.xpose.msra.mxu0 0
        %1333 = vmatprep.subr.bf16.mxu0 0
        %1334 = vmatpush1.bf16.xpose.msra.mxu0 0
        %1335 = vmatprep.subr.bf16.mxu0 0
        %1336 = vmatpush1.bf16.xpose.msra.mxu0 0
        %1337 = vmatprep.subr.bf16.mxu0 0
        %1338 = vmatpush1.bf16.xpose.msra.mxu0 0
        %1339 = vmatprep.subr.bf16.mxu0 0
        %1340 = vmatpush1.bf16.xpose.msra.mxu0 0
        %1341 = vmatprep.subr.bf16.mxu0 0
        %1342 = vmatpush1.bf16.xpose.msra.mxu0 0
        %1343 = vmatprep.subr.bf16.mxu0 0
        %1344 = vmatpush1.bf16.xpose.msra.mxu0 0
        %1345 = vmatprep.subr.bf16.mxu0 0
        %1346 = vmatpush1.bf16.xpose.msra.mxu0 0
        %1347 = vmatprep.subr.bf16.mxu0 0
        %1348 = vmatpush1.bf16.xpose.msra.mxu0 0
        %1349 = vmatprep.subr.bf16.mxu0 0
        %1350 = vmatpush1.bf16.xpose.msra.mxu0 0
        %1351 = vmatprep.mubr.bf16.mxu0 0
        %1352 = vmatmul.mubr.bf16.gmra.mrb[0].mxu0 %v1314
        %v1353 = vpop.f32.mrb[0].mxu0
        %v1354 = vadd.f32 0.0, %v1353
        %v1355 = vpop.f32.mrb[0].mxu0
        %v1356 = vpop.f32.mrb[0].mxu0
        %v1357 = vpop.f32.mrb[0].mxu0
        %1358 = vdwg.mxu0
        %v1360 = vsel %vm1266, %v926, 0
        %v1363 = vsel %vm1266, %v1094, 0
        %1365 = vmatprep.subr.bf16.mxu0 0
        %1366 = vmatpush1.bf16.xpose.msra.mxu0 %v1363
        %1367 = vmatprep.subr.bf16.mxu0 0
        %1368 = vmatpush1.bf16.xpose.msra.mxu0 0
        %1369 = vmatprep.subr.bf16.mxu0 0
        %1370 = vmatpush1.bf16.xpose.msra.mxu0 0
        %1371 = vmatprep.subr.bf16.mxu0 0
        %1372 = vmatpush1.bf16.xpose.msra.mxu0 0
        %1373 = vmatprep.subr.bf16.mxu0 0
        %1374 = vmatpush1.bf16.xpose.msra.mxu0 0
        %1375 = vmatprep.subr.bf16.mxu0 0
        %1376 = vmatpush1.bf16.xpose.msra.mxu0 0
        %1377 = vmatprep.subr.bf16.mxu0 0
        %1378 = vmatpush1.bf16.xpose.msra.mxu0 0
        %1379 = vmatprep.subr.bf16.mxu0 0
        %1380 = vmatpush1.bf16.xpose.msra.mxu0 0
        %1381 = vmatprep.subr.bf16.mxu0 0
        %1382 = vmatpush1.bf16.xpose.msra.mxu0 0
        %1383 = vmatprep.subr.bf16.mxu0 0
        %1384 = vmatpush1.bf16.xpose.msra.mxu0 0
        %1385 = vmatprep.subr.bf16.mxu0 0
        %1386 = vmatpush1.bf16.xpose.msra.mxu0 0
        %1387 = vmatprep.subr.bf16.mxu0 0
        %1388 = vmatpush1.bf16.xpose.msra.mxu0 0
        %1389 = vmatprep.subr.bf16.mxu0 0
        %1390 = vmatpush1.bf16.xpose.msra.mxu0 0
        %1391 = vmatprep.subr.bf16.mxu0 0
        %1392 = vmatpush1.bf16.xpose.msra.mxu0 0
        %1393 = vmatprep.subr.bf16.mxu0 0
        %1394 = vmatpush1.bf16.xpose.msra.mxu0 0
        %1395 = vmatprep.subr.bf16.mxu0 0
        %1396 = vmatpush1.bf16.xpose.msra.mxu0 0
        %1397 = vmatprep.mubr.bf16.mxu0 0
        %1398 = vmatmul.mubr.bf16.gmra.mrb[0].mxu0 %v1360
        %v1399 = vpop.f32.mrb[0].mxu0
        %v1400 = vadd.f32 0.0, %v1399
        %v1401 = vpop.f32.mrb[0].mxu0
        %v1402 = vpop.f32.mrb[0].mxu0
        %v1403 = vpop.f32.mrb[0].mxu0
        %1404 = vdwg.mxu0
        %v1406 = vsel %vm1266, %v929, 0
        %v1409 = vsel %vm1266, %v1097, 0
        %1411 = vmatprep.subr.bf16.mxu0 0
        %1412 = vmatpush1.bf16.xpose.msra.mxu0 %v1409
        %1413 = vmatprep.subr.bf16.mxu0 0
        %1414 = vmatpush1.bf16.xpose.msra.mxu0 0
        %1415 = vmatprep.subr.bf16.mxu0 0
        %1416 = vmatpush1.bf16.xpose.msra.mxu0 0
        %1417 = vmatprep.subr.bf16.mxu0 0
        %1418 = vmatpush1.bf16.xpose.msra.mxu0 0
        %1419 = vmatprep.subr.bf16.mxu0 0
        %1420 = vmatpush1.bf16.xpose.msra.mxu0 0
        %1421 = vmatprep.subr.bf16.mxu0 0
        %1422 = vmatpush1.bf16.xpose.msra.mxu0 0
        %1423 = vmatprep.subr.bf16.mxu0 0
        %1424 = vmatpush1.bf16.xpose.msra.mxu0 0
        %1425 = vmatprep.subr.bf16.mxu0 0
        %1426 = vmatpush1.bf16.xpose.msra.mxu0 0
        %1427 = vmatprep.subr.bf16.mxu0 0
        %1428 = vmatpush1.bf16.xpose.msra.mxu0 0
        %1429 = vmatprep.subr.bf16.mxu0 0
        %1430 = vmatpush1.bf16.xpose.msra.mxu0 0
        %1431 = vmatprep.subr.bf16.mxu0 0
        %1432 = vmatpush1.bf16.xpose.msra.mxu0 0
        %1433 = vmatprep.subr.bf16.mxu0 0
        %1434 = vmatpush1.bf16.xpose.msra.mxu0 0
        %1435 = vmatprep.subr.bf16.mxu0 0
        %1436 = vmatpush1.bf16.xpose.msra.mxu0 0
        %1437 = vmatprep.subr.bf16.mxu0 0
        %1438 = vmatpush1.bf16.xpose.msra.mxu0 0
        %1439 = vmatprep.subr.bf16.mxu0 0
        %1440 = vmatpush1.bf16.xpose.msra.mxu0 0
        %1441 = vmatprep.subr.bf16.mxu0 0
        %1442 = vmatpush1.bf16.xpose.msra.mxu0 0
        %1443 = vmatprep.mubr.bf16.mxu0 0
        %1444 = vmatmul.mubr.bf16.gmra.mrb[0].mxu0 %v1406
        %v1445 = vpop.f32.mrb[0].mxu0
        %v1446 = vadd.f32 0.0, %v1445
        %v1447 = vpop.f32.mrb[0].mxu0
        %v1448 = vpop.f32.mrb[0].mxu0
        %v1449 = vpop.f32.mrb[0].mxu0
        %1450 = vdwg.mxu0
        %vm1451 = vcmask 64512
        %v1452 = vsel %vm1451, %v1308, -inf
        %1453 = vmax.xlane.f32.xlu0 %v1452
        %v1454 = vpop.xlane.xlu0 %1453
        %v1455 = vsel %vm1451, %v1354, -inf
        %1456 = vmax.xlane.f32.xlu0 %v1455
        %v1457 = vpop.xlane.xlu0 %1456
        %v1458 = vsel %vm1451, %v1400, -inf
        %1459 = vmax.xlane.f32.xlu0 %v1458
        %v1460 = vpop.xlane.xlu0 %1459
        %v1461 = vsel %vm1451, %v1446, -inf
        %1462 = vmax.xlane.f32.xlu0 %v1461
        %v1463 = vpop.xlane.xlu0 %1462
        %v1464 = vsub.f32 %v1308, %v1454
        %v1465 = vsub.f32 %v1354, %v1457
        %v1466 = vsub.f32 %v1400, %v1460
        %v1467 = vsub.f32 %v1446, %v1463
        %v1468 = vmul.f32 %v1464, 1.442695
        %v1469 = vpow.pop %v1468
        %v1470 = vmul.f32 %v1465, 1.442695
        %v1471 = vpow.pop %v1470
        %v1472 = vmul.f32 %v1466, 1.442695
        %v1473 = vpow.pop %v1472
        %v1474 = vmul.f32 %v1467, 1.442695
        %v1475 = vpow.pop %v1474
        %v1476 = vsel %vm1451, %v1469, 0.0
        %1477 = vadd.xlane.f32.xlu0 %v1476
        %v1478 = vpop.xlane.xlu0 %1477
        %v1479 = vsel %vm1451, %v1471, 0.0
        %1480 = vadd.xlane.f32.xlu0 %v1479
        %v1481 = vpop.xlane.xlu0 %1480
        %v1482 = vsel %vm1451, %v1473, 0.0
        %1483 = vadd.xlane.f32.xlu0 %v1482
        %v1484 = vpop.xlane.xlu0 %1483
        %v1485 = vsel %vm1451, %v1475, 0.0
        %1486 = vadd.xlane.f32.xlu0 %v1485
        %v1487 = vpop.xlane.xlu0 %1486
        %v1488 = vrcp.pop %v1478
        %v1489 = vrcp.pop %v1481
        %v1490 = vrcp.pop %v1484
        %v1491 = vrcp.pop %v1487
        %v1492 = vmul.f32 %v1469, %v1488
        %v1493 = vmul.f32 %v1471, %v1489
        %v1494 = vmul.f32 %v1473, %v1490
        %v1495 = vmul.f32 %v1475, %v1491
        %v1496 = vpack.c.bf16 %v1492, %v1492
        %v1497 = vpack.c.bf16 %v1493, %v1493
        %v1498 = vpack.c.bf16 %v1494, %v1494
        %v1499 = vpack.c.bf16 %v1495, %v1495
        %v1501 = vsel %vm1451, %v1496, 0
        %vm1503 = vcmask 1043456
        %v1505 = vsel %vm1503, %v1256, 0
        %1507 = vmatprep.subr.bf16.mxu0 0
        %1508 = vmatpush1.bf16.msra.mxu0 %v1505
        %1509 = vmatprep.subr.bf16.mxu0 0
        %1510 = vmatpush1.bf16.msra.mxu0 0
        %1511 = vmatprep.subr.bf16.mxu0 0
        %1512 = vmatpush1.bf16.msra.mxu0 0
        %1513 = vmatprep.subr.bf16.mxu0 0
        %1514 = vmatpush1.bf16.msra.mxu0 0
        %1515 = vmatprep.subr.bf16.mxu0 0
        %1516 = vmatpush1.bf16.msra.mxu0 0
        %1517 = vmatprep.subr.bf16.mxu0 0
        %1518 = vmatpush1.bf16.msra.mxu0 0
        %1519 = vmatprep.subr.bf16.mxu0 0
        %1520 = vmatpush1.bf16.msra.mxu0 0
        %1521 = vmatprep.subr.bf16.mxu0 0
        %1522 = vmatpush1.bf16.msra.mxu0 0
        %1523 = vmatprep.subr.bf16.mxu0 0
        %1524 = vmatpush1.bf16.msra.mxu0 0
        %1525 = vmatprep.subr.bf16.mxu0 0
        %1526 = vmatpush1.bf16.msra.mxu0 0
        %1527 = vmatprep.subr.bf16.mxu0 0
        %1528 = vmatpush1.bf16.msra.mxu0 0
        %1529 = vmatprep.subr.bf16.mxu0 0
        %1530 = vmatpush1.bf16.msra.mxu0 0
        %1531 = vmatprep.subr.bf16.mxu0 0
        %1532 = vmatpush1.bf16.msra.mxu0 0
        %1533 = vmatprep.subr.bf16.mxu0 0
        %1534 = vmatpush1.bf16.msra.mxu0 0
        %1535 = vmatprep.subr.bf16.mxu0 0
        %1536 = vmatpush1.bf16.msra.mxu0 0
        %1537 = vmatprep.subr.bf16.mxu0 0
        %1538 = vmatpush1.bf16.msra.mxu0 0
        %1539 = vmatprep.mubr.bf16.mxu0 0
        %1540 = vmatmul.mubr.bf16.gmra.mrb[0].mxu0 %v1501
        %v1541 = vpop.f32.mrb[0].mxu0
        %v1542 = vadd.f32 0.0, %v1541
        %v1543 = vpop.f32.mrb[0].mxu0
        %v1544 = vpop.f32.mrb[0].mxu0
        %v1545 = vpop.f32.mrb[0].mxu0
        %1546 = vdwg.mxu0
        %v1548 = vsel %vm1451, %v1497, 0
        %v1551 = vsel %vm1503, %v1259, 0
        %1553 = vmatprep.subr.bf16.mxu0 0
        %1554 = vmatpush1.bf16.msra.mxu0 %v1551
        %1555 = vmatprep.subr.bf16.mxu0 0
        %1556 = vmatpush1.bf16.msra.mxu0 0
        %1557 = vmatprep.subr.bf16.mxu0 0
        %1558 = vmatpush1.bf16.msra.mxu0 0
        %1559 = vmatprep.subr.bf16.mxu0 0
        %1560 = vmatpush1.bf16.msra.mxu0 0
        %1561 = vmatprep.subr.bf16.mxu0 0
        %1562 = vmatpush1.bf16.msra.mxu0 0
        %1563 = vmatprep.subr.bf16.mxu0 0
        %1564 = vmatpush1.bf16.msra.mxu0 0
        %1565 = vmatprep.subr.bf16.mxu0 0
        %1566 = vmatpush1.bf16.msra.mxu0 0
        %1567 = vmatprep.subr.bf16.mxu0 0
        %1568 = vmatpush1.bf16.msra.mxu0 0
        %1569 = vmatprep.subr.bf16.mxu0 0
        %1570 = vmatpush1.bf16.msra.mxu0 0
        %1571 = vmatprep.subr.bf16.mxu0 0
        %1572 = vmatpush1.bf16.msra.mxu0 0
        %1573 = vmatprep.subr.bf16.mxu0 0
        %1574 = vmatpush1.bf16.msra.mxu0 0
        %1575 = vmatprep.subr.bf16.mxu0 0
        %1576 = vmatpush1.bf16.msra.mxu0 0
        %1577 = vmatprep.subr.bf16.mxu0 0
        %1578 = vmatpush1.bf16.msra.mxu0 0
        %1579 = vmatprep.subr.bf16.mxu0 0
        %1580 = vmatpush1.bf16.msra.mxu0 0
        %1581 = vmatprep.subr.bf16.mxu0 0
        %1582 = vmatpush1.bf16.msra.mxu0 0
        %1583 = vmatprep.subr.bf16.mxu0 0
        %1584 = vmatpush1.bf16.msra.mxu0 0
        %1585 = vmatprep.mubr.bf16.mxu0 0
        %1586 = vmatmul.mubr.bf16.gmra.mrb[0].mxu0 %v1548
        %v1587 = vpop.f32.mrb[0].mxu0
        %v1588 = vadd.f32 0.0, %v1587
        %v1589 = vpop.f32.mrb[0].mxu0
        %v1590 = vpop.f32.mrb[0].mxu0
        %v1591 = vpop.f32.mrb[0].mxu0
        %1592 = vdwg.mxu0
        %v1594 = vsel %vm1451, %v1498, 0
        %v1597 = vsel %vm1503, %v1262, 0
        %1599 = vmatprep.subr.bf16.mxu0 0
        %1600 = vmatpush1.bf16.msra.mxu0 %v1597
        %1601 = vmatprep.subr.bf16.mxu0 0
        %1602 = vmatpush1.bf16.msra.mxu0 0
        %1603 = vmatprep.subr.bf16.mxu0 0
        %1604 = vmatpush1.bf16.msra.mxu0 0
        %1605 = vmatprep.subr.bf16.mxu0 0
        %1606 = vmatpush1.bf16.msra.mxu0 0
        %1607 = vmatprep.subr.bf16.mxu0 0
        %1608 = vmatpush1.bf16.msra.mxu0 0
        %1609 = vmatprep.subr.bf16.mxu0 0
        %1610 = vmatpush1.bf16.msra.mxu0 0
        %1611 = vmatprep.subr.bf16.mxu0 0
        %1612 = vmatpush1.bf16.msra.mxu0 0
        %1613 = vmatprep.subr.bf16.mxu0 0
        %1614 = vmatpush1.bf16.msra.mxu0 0
        %1615 = vmatprep.subr.bf16.mxu0 0
        %1616 = vmatpush1.bf16.msra.mxu0 0
        %1617 = vmatprep.subr.bf16.mxu0 0
        %1618 = vmatpush1.bf16.msra.mxu0 0
        %1619 = vmatprep.subr.bf16.mxu0 0
        %1620 = vmatpush1.bf16.msra.mxu0 0
        %1621 = vmatprep.subr.bf16.mxu0 0
        %1622 = vmatpush1.bf16.msra.mxu0 0
        %1623 = vmatprep.subr.bf16.mxu0 0
        %1624 = vmatpush1.bf16.msra.mxu0 0
        %1625 = vmatprep.subr.bf16.mxu0 0
        %1626 = vmatpush1.bf16.msra.mxu0 0
        %1627 = vmatprep.subr.bf16.mxu0 0
        %1628 = vmatpush1.bf16.msra.mxu0 0
        %1629 = vmatprep.subr.bf16.mxu0 0
        %1630 = vmatpush1.bf16.msra.mxu0 0
        %1631 = vmatprep.mubr.bf16.mxu0 0
        %1632 = vmatmul.mubr.bf16.gmra.mrb[0].mxu0 %v1594
        %v1633 = vpop.f32.mrb[0].mxu0
        %v1634 = vadd.f32 0.0, %v1633
        %v1635 = vpop.f32.mrb[0].mxu0
        %v1636 = vpop.f32.mrb[0].mxu0
        %v1637 = vpop.f32.mrb[0].mxu0
        %1638 = vdwg.mxu0
        %v1640 = vsel %vm1451, %v1499, 0
        %v1643 = vsel %vm1503, %v1265, 0
        %1645 = vmatprep.subr.bf16.mxu0 0
        %1646 = vmatpush1.bf16.msra.mxu0 %v1643
        %1647 = vmatprep.subr.bf16.mxu0 0
        %1648 = vmatpush1.bf16.msra.mxu0 0
        %1649 = vmatprep.subr.bf16.mxu0 0
        %1650 = vmatpush1.bf16.msra.mxu0 0
        %1651 = vmatprep.subr.bf16.mxu0 0
        %1652 = vmatpush1.bf16.msra.mxu0 0
        %1653 = vmatprep.subr.bf16.mxu0 0
        %1654 = vmatpush1.bf16.msra.mxu0 0
        %1655 = vmatprep.subr.bf16.mxu0 0
        %1656 = vmatpush1.bf16.msra.mxu0 0
        %1657 = vmatprep.subr.bf16.mxu0 0
        %1658 = vmatpush1.bf16.msra.mxu0 0
        %1659 = vmatprep.subr.bf16.mxu0 0
        %1660 = vmatpush1.bf16.msra.mxu0 0
        %1661 = vmatprep.subr.bf16.mxu0 0
        %1662 = vmatpush1.bf16.msra.mxu0 0
        %1663 = vmatprep.subr.bf16.mxu0 0
        %1664 = vmatpush1.bf16.msra.mxu0 0
        %1665 = vmatprep.subr.bf16.mxu0 0
        %1666 = vmatpush1.bf16.msra.mxu0 0
        %1667 = vmatprep.subr.bf16.mxu0 0
        %1668 = vmatpush1.bf16.msra.mxu0 0
        %1669 = vmatprep.subr.bf16.mxu0 0
        %1670 = vmatpush1.bf16.msra.mxu0 0
        %1671 = vmatprep.subr.bf16.mxu0 0
        %1672 = vmatpush1.bf16.msra.mxu0 0
        %1673 = vmatprep.subr.bf16.mxu0 0
        %1674 = vmatpush1.bf16.msra.mxu0 0
        %1675 = vmatprep.subr.bf16.mxu0 0
        %1676 = vmatpush1.bf16.msra.mxu0 0
        %1677 = vmatprep.mubr.bf16.mxu0 0
        %1678 = vmatmul.mubr.bf16.gmra.mrb[0].mxu0 %v1640
        %v1679 = vpop.f32.mrb[0].mxu0
        %v1680 = vadd.f32 0.0, %v1679
        %v1681 = vpop.f32.mrb[0].mxu0
        %v1682 = vpop.f32.mrb[0].mxu0
        %v1683 = vpop.f32.mrb[0].mxu0
        %1684 = vdwg.mxu0
        %v1685 = vpack.c.bf16 %v1542, %v1542
        %v1687 = vunpack.c.l.s4 1983009808
        %v1688 = vunpack.c.0.s8 %v1687
        %v1689 = vlaneseq
        %v1690 = vshrl.u32 %v1689, 7
        %v1691 = vsub.s32 %v1688, %v1690
        %v1692 = vrot.slane %v1685, %v1691
        %v1693 = vpack.c.bf16 %v1634, %v1634
        %v1695 = vunpack.c.l.s4 1983009808
        %v1696 = vunpack.c.0.s8 %v1695
        %v1697 = vlaneseq
        %v1698 = vshrl.u32 %v1697, 7
        %v1699 = vsub.s32 %v1696, %v1698
        %v1700 = vrot.slane %v1693, %v1699
        %v1701 = vcombine.low %v1692, %v1700
        %v1702 = vcombine.high %v1692, %v1700
        %v1704 = vunpack.c.l.s4 1934713408
        %v1705 = vunpack.c.0.s8 %v1704
        %v1706 = vlaneseq
        %v1707 = vshrl.u32 %v1706, 7
        %v1708 = vsub.s32 %v1705, %v1707
        %v1709 = vrot.slane %v1701, %v1708
        %v1711 = vunpack.c.l.s4 1934713408
        %v1712 = vunpack.c.0.s8 %v1711
        %v1713 = vlaneseq
        %v1714 = vshrl.u32 %v1713, 7
        %v1715 = vsub.s32 %v1712, %v1714
        %v1716 = vrot.slane %v1702, %v1715
        %v1717 = vcombine.high %v1709, 0
        %v1718 = vcombine.high %v1716, 0
        %v1719 = vpack.c.bf16 %v1588, %v1588
        %v1721 = vunpack.c.l.s4 1983009808
        %v1722 = vunpack.c.0.s8 %v1721
        %v1723 = vlaneseq
        %v1724 = vshrl.u32 %v1723, 7
        %v1725 = vsub.s32 %v1722, %v1724
        %v1726 = vrot.slane %v1719, %v1725
        %v1727 = vpack.c.bf16 %v1680, %v1680
        %v1729 = vunpack.c.l.s4 1983009808
        %v1730 = vunpack.c.0.s8 %v1729
        %v1731 = vlaneseq
        %v1732 = vshrl.u32 %v1731, 7
        %v1733 = vsub.s32 %v1730, %v1732
        %v1734 = vrot.slane %v1727, %v1733
        %v1735 = vcombine.low %v1726, %v1734
        %v1736 = vcombine.high %v1726, %v1734
        %v1738 = vunpack.c.l.s4 1934713408
        %v1739 = vunpack.c.0.s8 %v1738
        %v1740 = vlaneseq
        %v1741 = vshrl.u32 %v1740, 7
        %v1742 = vsub.s32 %v1739, %v1741
        %v1743 = vrot.slane %v1735, %v1742
        %v1745 = vunpack.c.l.s4 1934713408
        %v1746 = vunpack.c.0.s8 %v1745
        %v1747 = vlaneseq
        %v1748 = vshrl.u32 %v1747, 7
        %v1749 = vsub.s32 %v1746, %v1748
        %v1750 = vrot.slane %v1736, %v1749
        %v1751 = vcombine.high %v1743, 0
        %v1752 = vcombine.high %v1750, 0
        %v1755 = vpack.i.b16 %v1743, %v1709
        %v1757 = vshrl.u32 %v1709, 16
        %v1758 = vshrl.u32 %v1743, 16
        %v1759 = vpack.i.b16 %v1758, %v1757
        %v1763 = vpack.i.b16 %v1751, %v1717
        %v1765 = vshrl.u32 %v1717, 16
        %v1766 = vshrl.u32 %v1751, 16
        %v1767 = vpack.i.b16 %v1766, %v1765
        %v1771 = vpack.i.b16 %v1750, %v1716
        %v1773 = vshrl.u32 %v1716, 16
        %v1774 = vshrl.u32 %v1750, 16
        %v1775 = vpack.i.b16 %v1774, %v1773
        %v1779 = vpack.i.b16 %v1752, %v1718
        %v1781 = vshrl.u32 %v1718, 16
        %v1782 = vshrl.u32 %v1752, 16
        %v1783 = vpack.i.b16 %v1782, %v1781
        %v1785 = vcombine.low %v1755, %v1771
        %v1787 = vunpack.c.l.s4 1983009808
        %v1788 = vunpack.c.0.s8 %v1787
        %v1789 = vlaneseq
        %v1790 = vshrl.u32 %v1789, 7
        %v1791 = vsub.s32 %v1788, %v1790
        %v1792 = vrot.slane %v1785, %v1791
        %v1793 = vcombine.low %v1763, %v1779
        %v1795 = vunpack.c.l.s4 1983009808
        %v1796 = vunpack.c.0.s8 %v1795
        %v1797 = vlaneseq
        %v1798 = vshrl.u32 %v1797, 7
        %v1799 = vsub.s32 %v1796, %v1798
        %v1800 = vrot.slane %v1793, %v1799
        %v1801 = vcombine.low %v1792, %v1800
        %v1803 = vunpack.c.l.s4 1934713408
        %v1804 = vunpack.c.0.s8 %v1803
        %v1805 = vlaneseq
        %v1806 = vshrl.u32 %v1805, 7
        %v1807 = vsub.s32 %v1804, %v1806
        %v1808 = vrot.slane %v1801, %v1807
        %v1809 = vcombine.high %v1808, 0
        %v1810 = vcombine.low %v1759, %v1775
        %v1812 = vunpack.c.l.s4 1983009808
        %v1813 = vunpack.c.0.s8 %v1812
        %v1814 = vlaneseq
        %v1815 = vshrl.u32 %v1814, 7
        %v1816 = vsub.s32 %v1813, %v1815
        %v1817 = vrot.slane %v1810, %v1816
        %v1818 = vcombine.low %v1767, %v1783
        %v1820 = vunpack.c.l.s4 1983009808
        %v1821 = vunpack.c.0.s8 %v1820
        %v1822 = vlaneseq
        %v1823 = vshrl.u32 %v1822, 7
        %v1824 = vsub.s32 %v1821, %v1823
        %v1825 = vrot.slane %v1818, %v1824
        %v1826 = vcombine.low %v1817, %v1825
        %v1828 = vunpack.c.l.s4 1934713408
        %v1829 = vunpack.c.0.s8 %v1828
        %v1830 = vlaneseq
        %v1831 = vshrl.u32 %v1830, 7
        %v1832 = vsub.s32 %v1829, %v1831
        %v1833 = vrot.slane %v1826, %v1832
        %v1834 = vcombine.high %v1833, 0
        %v1837 = vpack.i.b16 %v1833, %v1808
        %v1838 = vshrl.u32 %v1808, 16
        %v1839 = vshrl.u32 %v1833, 16
        %v1840 = vpack.i.b16 %v1839, %v1838
        %v1843 = vpack.i.b16 %v1834, %v1809
        %v1844 = vshrl.u32 %v1809, 16
        %v1845 = vshrl.u32 %v1834, 16
        %v1846 = vpack.i.b16 %v1845, %v1844
        %1847 = vrot.lane.b32.xlu0 %v1840, 32
        %v1848 = vpop.permute.xlu0 %1847
        %1849 = vrot.lane.b32.xlu0 %v1843, 64
        %v1850 = vpop.permute.xlu0 %1849
        %1851 = vrot.lane.b32.xlu0 %v1846, 96
        %v1852 = vpop.permute.xlu0 %1851
        %v1855 = vsel %vm1266, %v1837, %v1848
        %vm1856 = vcmask 523264
        %v1858 = vsel %vm1856, %v1855, %v1850
        %vm1859 = vcmask 785408
        %v1861 = vsel %vm1859, %v1858, %v1852
        %v1863 = vld [vmem:[#allocation7] sm:$0xf]
        %v1864 = vld [vmem:[#allocation7 + $0x4] sm:$0xf]
        %v1865 = vld [vmem:[#allocation7 + $0x8] sm:$0xf]
        %v1866 = vld [vmem:[#allocation7 + $0xc] sm:$0xf]
        %v1867 = vld [vmem:[#allocation7 + $0x10] sm:$0xf]
        %v1868 = vld [vmem:[#allocation7 + $0x14] sm:$0xf]
        %v1869 = vld [vmem:[#allocation7 + $0x18] sm:$0xf]
        %v1870 = vld [vmem:[#allocation7 + $0x1c] sm:$0xf]
        %v1871 = vld [vmem:[#allocation7 + $0x20] sm:$0xf]
        %v1872 = vld [vmem:[#allocation7 + $0x24] sm:$0xf]
        %v1873 = vld [vmem:[#allocation7 + $0x28] sm:$0xf]
        %v1874 = vld [vmem:[#allocation7 + $0x2c] sm:$0xf]
        %v1875 = vld [vmem:[#allocation7 + $0x30] sm:$0xf]
        %v1876 = vld [vmem:[#allocation7 + $0x34] sm:$0xf]
        %v1877 = vld [vmem:[#allocation7 + $0x38] sm:$0xf]
        %v1878 = vld [vmem:[#allocation7 + $0x3c] sm:$0xf]
        %v1879 = vld [vmem:[%s5] sm:$0x1]
        %v1881 = vlaneseq
        %v1882 = vshrl.u32 %v1881, 7
        %v1883 = vsub.s32 0, %v1882
        %v1884 = vrot.slane %v1879, %v1883
        %v1902 = vunpack.c.l.b16 %v1863
        %v1903 = vunpack.c.l.b16 %v1864
        %v1904 = vunpack.c.l.b16 %v1865
        %v1905 = vunpack.c.l.b16 %v1866
        %v1906 = vunpack.c.l.b16 %v1867
        %v1907 = vunpack.c.l.b16 %v1868
        %v1908 = vunpack.c.l.b16 %v1869
        %v1909 = vunpack.c.l.b16 %v1870
        %v1910 = vunpack.c.l.b16 %v1871
        %v1911 = vunpack.c.l.b16 %v1872
        %v1912 = vunpack.c.l.b16 %v1873
        %v1913 = vunpack.c.l.b16 %v1874
        %v1914 = vunpack.c.l.b16 %v1875
        %v1915 = vunpack.c.l.b16 %v1876
        %v1916 = vunpack.c.l.b16 %v1877
        %v1917 = vunpack.c.l.b16 %v1878
        %v1918 = vpack.c.b16 %v1903, %v1902
        %v1919 = vpack.c.b16 %v1905, %v1904
        %v1920 = vpack.c.b16 %v1907, %v1906
        %v1921 = vpack.c.b16 %v1909, %v1908
        %v1922 = vpack.c.b16 %v1911, %v1910
        %v1923 = vpack.c.b16 %v1913, %v1912
        %v1924 = vpack.c.b16 %v1915, %v1914
        %v1925 = vpack.c.b16 %v1917, %v1916
        %1934 = vmatprep.subr.bf16.mxu0 0
        %1935 = vmatpush1.bf16.msra.mxu0 %v1918
        %1936 = vmatprep.subr.bf16.mxu0 0
        %1937 = vmatpush1.bf16.msra.mxu0 %v1919
        %1938 = vmatprep.subr.bf16.mxu0 0
        %1939 = vmatpush1.bf16.msra.mxu0 %v1920
        %1940 = vmatprep.subr.bf16.mxu0 0
        %1941 = vmatpush1.bf16.msra.mxu0 %v1921
        %1942 = vmatprep.subr.bf16.mxu0 0
        %1943 = vmatpush1.bf16.msra.mxu0 %v1922
        %1944 = vmatprep.subr.bf16.mxu0 0
        %1945 = vmatpush1.bf16.msra.mxu0 %v1923
        %1946 = vmatprep.subr.bf16.mxu0 0
        %1947 = vmatpush1.bf16.msra.mxu0 %v1924
        %1948 = vmatprep.subr.bf16.mxu0 0
        %1949 = vmatpush1.bf16.msra.mxu0 %v1925
        %1950 = vmatprep.subr.bf16.mxu0 0
        %1951 = vmatpush1.bf16.msra.mxu0 0
        %1952 = vmatprep.subr.bf16.mxu0 0
        %1953 = vmatpush1.bf16.msra.mxu0 0
        %1954 = vmatprep.subr.bf16.mxu0 0
        %1955 = vmatpush1.bf16.msra.mxu0 0
        %1956 = vmatprep.subr.bf16.mxu0 0
        %1957 = vmatpush1.bf16.msra.mxu0 0
        %1958 = vmatprep.subr.bf16.mxu0 0
        %1959 = vmatpush1.bf16.msra.mxu0 0
        %1960 = vmatprep.subr.bf16.mxu0 0
        %1961 = vmatpush1.bf16.msra.mxu0 0
        %1962 = vmatprep.subr.bf16.mxu0 0
        %1963 = vmatpush1.bf16.msra.mxu0 0
        %1964 = vmatprep.subr.bf16.mxu0 0
        %1965 = vmatpush1.bf16.msra.mxu0 0
        %1966 = vmatprep.mubr.bf16.mxu0 0
        %1967 = vmatmul.mubr.bf16.gmra.mrb[0].mxu0 %v1861
        %v1968 = vpop.f32.mrb[0].mxu0
        %v1969 = vadd.f32 %v1884, %v1968
        %v1970 = vpop.f32.mrb[0].mxu0
        %v1971 = vpop.f32.mrb[0].mxu0
        %v1972 = vpop.f32.mrb[0].mxu0
        %1973 = vdwg.mxu0
        %v1974 = vadd.f32 %v488, %v1969
        %v1975 = vld [vmem:[%s6] sm:$0x1]
        %v1976 = vld [vmem:[%s7] sm:$0x1]
        %1977 = vadd.xlane.f32.xlu0 %v1974
        %v1978 = vpop.xlane.xlu0 %1977
        %v1979 = vmul.f32 %v1978, %v493
        %v1980 = vsub.f32 %v1974, %v1979
        %v1981 = vmul.f32 %v1980, %v1980
        %1982 = vadd.xlane.f32.xlu0 %v1981
        %v1983 = vpop.xlane.xlu0 %1982
        %v1984 = vmul.f32 %v1983, %v493
        %v1985 = vadd.f32 %v1984, 1e-05
        %v1986 = vrsqrt.pop %v1985
        %v1987 = vmul.f32 %v1980, %v1986
        %v1989 = vlaneseq
        %v1990 = vshrl.u32 %v1989, 7
        %v1991 = vsub.s32 0, %v1990
        %v1992 = vrot.slane %v1975, %v1991
        %v1994 = vmul.f32 %v1987, %v1992
        %v1996 = vlaneseq
        %v1997 = vshrl.u32 %v1996, 7
        %v1998 = vsub.s32 0, %v1997
        %v1999 = vrot.slane %v1976, %v1998
        %v2001 = vadd.f32 %v1994, %v1999
        %v2002 = vpack.c.bf16 %v2001, %v2001
        %v2003 = vld [vmem:[#allocation8] sm:$0xff]
        %v2004 = vld [vmem:[#allocation8 + $0x8] sm:$0xff]
        %v2005 = vld [vmem:[#allocation8 + $0x10] sm:$0xff]
        %v2006 = vld [vmem:[#allocation8 + $0x18] sm:$0xff]
        %v2007 = vld [vmem:[#allocation8 + $0x20] sm:$0xff]
        %v2008 = vld [vmem:[#allocation8 + $0x28] sm:$0xff]
        %v2009 = vld [vmem:[#allocation8 + $0x30] sm:$0xff]
        %v2010 = vld [vmem:[#allocation8 + $0x38] sm:$0xff]
        %v2011 = vld [vmem:[#allocation8 + $0x40] sm:$0xff]
        %v2012 = vld [vmem:[#allocation8 + $0x48] sm:$0xff]
        %v2013 = vld [vmem:[#allocation8 + $0x50] sm:$0xff]
        %v2014 = vld [vmem:[#allocation8 + $0x58] sm:$0xff]
        %v2015 = vld [vmem:[#allocation8 + $0x60] sm:$0xff]
        %v2016 = vld [vmem:[#allocation8 + $0x68] sm:$0xff]
        %v2017 = vld [vmem:[#allocation8 + $0x70] sm:$0xff]
        %v2018 = vld [vmem:[#allocation8 + $0x78] sm:$0xff]
        %v2019 = vld [vmem:[#allocation8 + $0x80] sm:$0xff]
        %v2020 = vld [vmem:[#allocation8 + $0x88] sm:$0xff]
        %v2021 = vld [vmem:[#allocation8 + $0x90] sm:$0xff]
        %v2022 = vld [vmem:[#allocation8 + $0x98] sm:$0xff]
        %v2023 = vld [vmem:[#allocation8 + $0xa0] sm:$0xff]
        %v2024 = vld [vmem:[#allocation8 + $0xa8] sm:$0xff]
        %v2025 = vld [vmem:[#allocation8 + $0xb0] sm:$0xff]
        %v2026 = vld [vmem:[#allocation8 + $0xb8] sm:$0xff]
        %v2027 = vld [vmem:[#allocation8 + $0xc0] sm:$0xff]
        %v2028 = vld [vmem:[#allocation8 + $0xc8] sm:$0xff]
        %v2029 = vld [vmem:[#allocation8 + $0xd0] sm:$0xff]
        %v2030 = vld [vmem:[#allocation8 + $0xd8] sm:$0xff]
        %v2031 = vld [vmem:[#allocation8 + $0xe0] sm:$0xff]
        %v2032 = vld [vmem:[#allocation8 + $0xe8] sm:$0xff]
        %v2033 = vld [vmem:[#allocation8 + $0xf0] sm:$0xff]
        %v2034 = vld [vmem:[#allocation8 + $0xf8] sm:$0xff]
        %v2035 = vld [vmem:[%s9] sm:$0xf]
        %v2037 = vlaneseq
        %v2038 = vshrl.u32 %v2037, 7
        %v2039 = vsub.s32 0, %v2038
        %v2040 = vrot.slane %v2035, %v2039
        %v2041 = vlaneseq
        %v2042 = vshrl.u32 %v2041, 7
        %v2043 = vsub.s32 1, %v2042
        %v2044 = vrot.slane %v2035, %v2043
        %v2045 = vlaneseq
        %v2046 = vshrl.u32 %v2045, 7
        %v2047 = vsub.s32 2, %v2046
        %v2048 = vrot.slane %v2035, %v2047
        %v2049 = vlaneseq
        %v2050 = vshrl.u32 %v2049, 7
        %v2051 = vsub.s32 3, %v2050
        %v2052 = vrot.slane %v2035, %v2051
        %v2089 = vunpack.c.l.b16 %v2003
        %v2090 = vunpack.c.h.b16 %v2003
        %v2091 = vunpack.c.l.b16 %v2004
        %v2092 = vunpack.c.h.b16 %v2004
        %v2093 = vunpack.c.l.b16 %v2005
        %v2094 = vunpack.c.h.b16 %v2005
        %v2095 = vunpack.c.l.b16 %v2006
        %v2096 = vunpack.c.h.b16 %v2006
        %v2097 = vunpack.c.l.b16 %v2007
        %v2098 = vunpack.c.h.b16 %v2007
        %v2099 = vunpack.c.l.b16 %v2008
        %v2100 = vunpack.c.h.b16 %v2008
        %v2101 = vunpack.c.l.b16 %v2009
        %v2102 = vunpack.c.h.b16 %v2009
        %v2103 = vunpack.c.l.b16 %v2010
        %v2104 = vunpack.c.h.b16 %v2010
        %v2105 = vunpack.c.l.b16 %v2011
        %v2106 = vunpack.c.h.b16 %v2011
        %v2107 = vunpack.c.l.b16 %v2012
        %v2108 = vunpack.c.h.b16 %v2012
        %v2109 = vunpack.c.l.b16 %v2013
        %v2110 = vunpack.c.h.b16 %v2013
        %v2111 = vunpack.c.l.b16 %v2014
        %v2112 = vunpack.c.h.b16 %v2014
        %v2113 = vunpack.c.l.b16 %v2015
        %v2114 = vunpack.c.h.b16 %v2015
        %v2115 = vunpack.c.l.b16 %v2016
        %v2116 = vunpack.c.h.b16 %v2016
        %v2117 = vunpack.c.l.b16 %v2017
        %v2118 = vunpack.c.h.b16 %v2017
        %v2119 = vunpack.c.l.b16 %v2018
        %v2120 = vunpack.c.h.b16 %v2018
        %v2121 = vunpack.c.l.b16 %v2019
        %v2122 = vunpack.c.h.b16 %v2019
        %v2123 = vunpack.c.l.b16 %v2020
        %v2124 = vunpack.c.h.b16 %v2020
        %v2125 = vunpack.c.l.b16 %v2021
        %v2126 = vunpack.c.h.b16 %v2021
        %v2127 = vunpack.c.l.b16 %v2022
        %v2128 = vunpack.c.h.b16 %v2022
        %v2129 = vunpack.c.l.b16 %v2023
        %v2130 = vunpack.c.h.b16 %v2023
        %v2131 = vunpack.c.l.b16 %v2024
        %v2132 = vunpack.c.h.b16 %v2024
        %v2133 = vunpack.c.l.b16 %v2025
        %v2134 = vunpack.c.h.b16 %v2025
        %v2135 = vunpack.c.l.b16 %v2026
        %v2136 = vunpack.c.h.b16 %v2026
        %v2137 = vunpack.c.l.b16 %v2027
        %v2138 = vunpack.c.h.b16 %v2027
        %v2139 = vunpack.c.l.b16 %v2028
        %v2140 = vunpack.c.h.b16 %v2028
        %v2141 = vunpack.c.l.b16 %v2029
        %v2142 = vunpack.c.h.b16 %v2029
        %v2143 = vunpack.c.l.b16 %v2030
        %v2144 = vunpack.c.h.b16 %v2030
        %v2145 = vunpack.c.l.b16 %v2031
        %v2146 = vunpack.c.h.b16 %v2031
        %v2147 = vunpack.c.l.b16 %v2032
        %v2148 = vunpack.c.h.b16 %v2032
        %v2149 = vunpack.c.l.b16 %v2033
        %v2150 = vunpack.c.h.b16 %v2033
        %v2151 = vunpack.c.l.b16 %v2034
        %v2152 = vunpack.c.h.b16 %v2034
        %v2153 = vpack.c.b16 %v2093, %v2089
        %v2154 = vpack.c.b16 %v2094, %v2090
        %v2155 = vpack.c.b16 %v2095, %v2091
        %v2156 = vpack.c.b16 %v2096, %v2092
        %v2157 = vpack.c.b16 %v2101, %v2097
        %v2158 = vpack.c.b16 %v2102, %v2098
        %v2159 = vpack.c.b16 %v2103, %v2099
        %v2160 = vpack.c.b16 %v2104, %v2100
        %v2161 = vpack.c.b16 %v2109, %v2105
        %v2162 = vpack.c.b16 %v2110, %v2106
        %v2163 = vpack.c.b16 %v2111, %v2107
        %v2164 = vpack.c.b16 %v2112, %v2108
        %v2165 = vpack.c.b16 %v2117, %v2113
        %v2166 = vpack.c.b16 %v2118, %v2114
        %v2167 = vpack.c.b16 %v2119, %v2115
        %v2168 = vpack.c.b16 %v2120, %v2116
        %v2169 = vpack.c.b16 %v2125, %v2121
        %v2170 = vpack.c.b16 %v2126, %v2122
        %v2171 = vpack.c.b16 %v2127, %v2123
        %v2172 = vpack.c.b16 %v2128, %v2124
        %v2173 = vpack.c.b16 %v2133, %v2129
        %v2174 = vpack.c.b16 %v2134, %v2130
        %v2175 = vpack.c.b16 %v2135, %v2131
        %v2176 = vpack.c.b16 %v2136, %v2132
        %v2177 = vpack.c.b16 %v2141, %v2137
        %v2178 = vpack.c.b16 %v2142, %v2138
        %v2179 = vpack.c.b16 %v2143, %v2139
        %v2180 = vpack.c.b16 %v2144, %v2140
        %v2181 = vpack.c.b16 %v2149, %v2145
        %v2182 = vpack.c.b16 %v2150, %v2146
        %v2183 = vpack.c.b16 %v2151, %v2147
        %v2184 = vpack.c.b16 %v2152, %v2148
        %2217 = vmatprep.subr.bf16.mxu0 %v2154
        %2218 = vmatpush1.bf16.msra.mxu0 %v2153
        %2219 = vmatprep.subr.bf16.mxu0 %v2158
        %2220 = vmatpush1.bf16.msra.mxu0 %v2157
        %2221 = vmatprep.subr.bf16.mxu0 %v2162
        %2222 = vmatpush1.bf16.msra.mxu0 %v2161
        %2223 = vmatprep.subr.bf16.mxu0 %v2166
        %2224 = vmatpush1.bf16.msra.mxu0 %v2165
        %2225 = vmatprep.subr.bf16.mxu0 %v2170
        %2226 = vmatpush1.bf16.msra.mxu0 %v2169
        %2227 = vmatprep.subr.bf16.mxu0 %v2174
        %2228 = vmatpush1.bf16.msra.mxu0 %v2173
        %2229 = vmatprep.subr.bf16.mxu0 %v2178
        %2230 = vmatpush1.bf16.msra.mxu0 %v2177
        %2231 = vmatprep.subr.bf16.mxu0 %v2182
        %2232 = vmatpush1.bf16.msra.mxu0 %v2181
        %2233 = vmatprep.subr.bf16.mxu0 0
        %2234 = vmatpush1.bf16.msra.mxu0 0
        %2235 = vmatprep.subr.bf16.mxu0 0
        %2236 = vmatpush1.bf16.msra.mxu0 0
        %2237 = vmatprep.subr.bf16.mxu0 0
        %2238 = vmatpush1.bf16.msra.mxu0 0
        %2239 = vmatprep.subr.bf16.mxu0 0
        %2240 = vmatpush1.bf16.msra.mxu0 0
        %2241 = vmatprep.subr.bf16.mxu0 0
        %2242 = vmatpush1.bf16.msra.mxu0 0
        %2243 = vmatprep.subr.bf16.mxu0 0
        %2244 = vmatpush1.bf16.msra.mxu0 0
        %2245 = vmatprep.subr.bf16.mxu0 0
        %2246 = vmatpush1.bf16.msra.mxu0 0
        %2247 = vmatprep.subr.bf16.mxu0 0
        %2248 = vmatpush1.bf16.msra.mxu0 0
        %2249 = vmatprep.mubr.bf16.mxu0 0
        %2250 = vmatmul.mubr.bf16.gmra.mrb[0].mxu0 %v2002
        %v2251 = vpop.f32.mrb[0].mxu0
        %v2252 = vadd.f32 %v2040, %v2251
        %v2253 = vpop.f32.mrb[0].mxu0
        %v2254 = vadd.f32 %v2044, %v2253
        %v2255 = vpop.f32.mrb[0].mxu0
        %v2256 = vpop.f32.mrb[0].mxu0
        %2257 = vdwg.mxu0
        %2258 = vmatprep.subr.bf16.mxu0 %v2156
        %2259 = vmatpush1.bf16.msra.mxu0 %v2155
        %2260 = vmatprep.subr.bf16.mxu0 %v2160
        %2261 = vmatpush1.bf16.msra.mxu0 %v2159
        %2262 = vmatprep.subr.bf16.mxu0 %v2164
        %2263 = vmatpush1.bf16.msra.mxu0 %v2163
        %2264 = vmatprep.subr.bf16.mxu0 %v2168
        %2265 = vmatpush1.bf16.msra.mxu0 %v2167
        %2266 = vmatprep.subr.bf16.mxu0 %v2172
        %2267 = vmatpush1.bf16.msra.mxu0 %v2171
        %2268 = vmatprep.subr.bf16.mxu0 %v2176
        %2269 = vmatpush1.bf16.msra.mxu0 %v2175
        %2270 = vmatprep.subr.bf16.mxu0 %v2180
        %2271 = vmatpush1.bf16.msra.mxu0 %v2179
        %2272 = vmatprep.subr.bf16.mxu0 %v2184
        %2273 = vmatpush1.bf16.msra.mxu0 %v2183
        %2274 = vmatprep.subr.bf16.mxu0 0
        %2275 = vmatpush1.bf16.msra.mxu0 0
        %2276 = vmatprep.subr.bf16.mxu0 0
        %2277 = vmatpush1.bf16.msra.mxu0 0
        %2278 = vmatprep.subr.bf16.mxu0 0
        %2279 = vmatpush1.bf16.msra.mxu0 0
        %2280 = vmatprep.subr.bf16.mxu0 0
        %2281 = vmatpush1.bf16.msra.mxu0 0
        %2282 = vmatprep.subr.bf16.mxu0 0
        %2283 = vmatpush1.bf16.msra.mxu0 0
        %2284 = vmatprep.subr.bf16.mxu0 0
        %2285 = vmatpush1.bf16.msra.mxu0 0
        %2286 = vmatprep.subr.bf16.mxu0 0
        %2287 = vmatpush1.bf16.msra.mxu0 0
        %2288 = vmatprep.subr.bf16.mxu0 0
        %2289 = vmatpush1.bf16.msra.mxu0 0
        %2290 = vmatprep.mubr.bf16.mxu0 0
        %2291 = vmatmul.mubr.bf16.gmra.mrb[0].mxu0 %v2002
        %v2292 = vpop.f32.mrb[0].mxu0
        %v2293 = vadd.f32 %v2048, %v2292
        %v2294 = vpop.f32.mrb[0].mxu0
        %v2295 = vadd.f32 %v2052, %v2294
        %v2296 = vpop.f32.mrb[0].mxu0
        %v2297 = vpop.f32.mrb[0].mxu0
        %2298 = vdwg.mxu0
        %v2299 = vmul.f32 %v2252, 0.5
        %v2300 = vmul.f32 %v2254, 0.5
        %v2301 = vmul.f32 %v2293, 0.5
        %v2302 = vmul.f32 %v2295, 0.5
        %v2303 = vmul.f32 %v2252, 0.70710677
        %v2304 = vmul.f32 %v2254, 0.70710677
        %v2305 = vmul.f32 %v2293, 0.70710677
        %v2306 = vmul.f32 %v2295, 0.70710677
        %v2307 = verf.f32.pop %v2303
        %v2308 = verf.f32.pop %v2304
        %v2309 = verf.f32.pop %v2305
        %v2310 = verf.f32.pop %v2306
        %v2311 = vadd.f32 %v2307, 1.0
        %v2312 = vadd.f32 %v2308, 1.0
        %v2313 = vadd.f32 %v2309, 1.0
        %v2314 = vadd.f32 %v2310, 1.0
        %v2315 = vmul.f32 %v2299, %v2311
        %v2316 = vmul.f32 %v2300, %v2312
        %v2317 = vmul.f32 %v2301, %v2313
        %v2318 = vmul.f32 %v2302, %v2314
        %v2319 = vpack.c.bf16 %v2315, %v2315
        %v2320 = vpack.c.bf16 %v2316, %v2316
        %v2321 = vpack.c.bf16 %v2317, %v2317
        %v2322 = vpack.c.bf16 %v2318, %v2318
        %v2323 = vld [vmem:[#allocation10] sm:$0xf]
        %v2324 = vld [vmem:[#allocation10 + $0x4] sm:$0xf]
        %v2325 = vld [vmem:[#allocation10 + $0x8] sm:$0xf]
        %v2326 = vld [vmem:[#allocation10 + $0xc] sm:$0xf]
        %v2327 = vld [vmem:[#allocation10 + $0x10] sm:$0xf]
        %v2328 = vld [vmem:[#allocation10 + $0x14] sm:$0xf]
        %v2329 = vld [vmem:[#allocation10 + $0x18] sm:$0xf]
        %v2330 = vld [vmem:[#allocation10 + $0x1c] sm:$0xf]
        %v2331 = vld [vmem:[#allocation10 + $0x20] sm:$0xf]
        %v2332 = vld [vmem:[#allocation10 + $0x24] sm:$0xf]
        %v2333 = vld [vmem:[#allocation10 + $0x28] sm:$0xf]
        %v2334 = vld [vmem:[#allocation10 + $0x2c] sm:$0xf]
        %v2335 = vld [vmem:[#allocation10 + $0x30] sm:$0xf]
        %v2336 = vld [vmem:[#allocation10 + $0x34] sm:$0xf]
        %v2337 = vld [vmem:[#allocation10 + $0x38] sm:$0xf]
        %v2338 = vld [vmem:[#allocation10 + $0x3c] sm:$0xf]
        %v2339 = vld [vmem:[#allocation10 + $0x40] sm:$0xf]
        %v2340 = vld [vmem:[#allocation10 + $0x44] sm:$0xf]
        %v2341 = vld [vmem:[#allocation10 + $0x48] sm:$0xf]
        %v2342 = vld [vmem:[#allocation10 + $0x4c] sm:$0xf]
        %v2343 = vld [vmem:[#allocation10 + $0x50] sm:$0xf]
        %v2344 = vld [vmem:[#allocation10 + $0x54] sm:$0xf]
        %v2345 = vld [vmem:[#allocation10 + $0x58] sm:$0xf]
        %v2346 = vld [vmem:[#allocation10 + $0x5c] sm:$0xf]
        %v2347 = vld [vmem:[#allocation10 + $0x60] sm:$0xf]
        %v2348 = vld [vmem:[#allocation10 + $0x64] sm:$0xf]
        %v2349 = vld [vmem:[#allocation10 + $0x68] sm:$0xf]
        %v2350 = vld [vmem:[#allocation10 + $0x6c] sm:$0xf]
        %v2351 = vld [vmem:[#allocation10 + $0x70] sm:$0xf]
        %v2352 = vld [vmem:[#allocation10 + $0x74] sm:$0xf]
        %v2353 = vld [vmem:[#allocation10 + $0x78] sm:$0xf]
        %v2354 = vld [vmem:[#allocation10 + $0x7c] sm:$0xf]
        %v2355 = vld [vmem:[#allocation10 + $0x80] sm:$0xf]
        %v2356 = vld [vmem:[#allocation10 + $0x84] sm:$0xf]
        %v2357 = vld [vmem:[#allocation10 + $0x88] sm:$0xf]
        %v2358 = vld [vmem:[#allocation10 + $0x8c] sm:$0xf]
        %v2359 = vld [vmem:[#allocation10 + $0x90] sm:$0xf]
        %v2360 = vld [vmem:[#allocation10 + $0x94] sm:$0xf]
        %v2361 = vld [vmem:[#allocation10 + $0x98] sm:$0xf]
        %v2362 = vld [vmem:[#allocation10 + $0x9c] sm:$0xf]
        %v2363 = vld [vmem:[#allocation10 + $0xa0] sm:$0xf]
        %v2364 = vld [vmem:[#allocation10 + $0xa4] sm:$0xf]
        %v2365 = vld [vmem:[#allocation10 + $0xa8] sm:$0xf]
        %v2366 = vld [vmem:[#allocation10 + $0xac] sm:$0xf]
        %v2367 = vld [vmem:[#allocation10 + $0xb0] sm:$0xf]
        %v2368 = vld [vmem:[#allocation10 + $0xb4] sm:$0xf]
        %v2369 = vld [vmem:[#allocation10 + $0xb8] sm:$0xf]
        %v2370 = vld [vmem:[#allocation10 + $0xbc] sm:$0xf]
        %v2371 = vld [vmem:[#allocation10 + $0xc0] sm:$0xf]
        %v2372 = vld [vmem:[#allocation10 + $0xc4] sm:$0xf]
        %v2373 = vld [vmem:[#allocation10 + $0xc8] sm:$0xf]
        %v2374 = vld [vmem:[#allocation10 + $0xcc] sm:$0xf]
        %v2375 = vld [vmem:[#allocation10 + $0xd0] sm:$0xf]
        %v2376 = vld [vmem:[#allocation10 + $0xd4] sm:$0xf]
        %v2377 = vld [vmem:[#allocation10 + $0xd8] sm:$0xf]
        %v2378 = vld [vmem:[#allocation10 + $0xdc] sm:$0xf]
        %v2379 = vld [vmem:[#allocation10 + $0xe0] sm:$0xf]
        %v2380 = vld [vmem:[#allocation10 + $0xe4] sm:$0xf]
        %v2381 = vld [vmem:[#allocation10 + $0xe8] sm:$0xf]
        %v2382 = vld [vmem:[#allocation10 + $0xec] sm:$0xf]
        %v2383 = vld [vmem:[#allocation10 + $0xf0] sm:$0xf]
        %v2384 = vld [vmem:[#allocation10 + $0xf4] sm:$0xf]
        %v2385 = vld [vmem:[#allocation10 + $0xf8] sm:$0xf]
        %v2386 = vld [vmem:[#allocation10 + $0xfc] sm:$0xf]
        %v2387 = vld [vmem:[%s11] sm:$0x1]
        %v2389 = vlaneseq
        %v2390 = vshrl.u32 %v2389, 7
        %v2391 = vsub.s32 0, %v2390
        %v2392 = vrot.slane %v2387, %v2391
        %v2458 = vunpack.c.l.b16 %v2323
        %v2459 = vunpack.c.l.b16 %v2324
        %v2460 = vunpack.c.l.b16 %v2325
        %v2461 = vunpack.c.l.b16 %v2326
        %v2462 = vunpack.c.l.b16 %v2327
        %v2463 = vunpack.c.l.b16 %v2328
        %v2464 = vunpack.c.l.b16 %v2329
        %v2465 = vunpack.c.l.b16 %v2330
        %v2466 = vunpack.c.l.b16 %v2331
        %v2467 = vunpack.c.l.b16 %v2332
        %v2468 = vunpack.c.l.b16 %v2333
        %v2469 = vunpack.c.l.b16 %v2334
        %v2470 = vunpack.c.l.b16 %v2335
        %v2471 = vunpack.c.l.b16 %v2336
        %v2472 = vunpack.c.l.b16 %v2337
        %v2473 = vunpack.c.l.b16 %v2338
        %v2474 = vunpack.c.l.b16 %v2339
        %v2475 = vunpack.c.l.b16 %v2340
        %v2476 = vunpack.c.l.b16 %v2341
        %v2477 = vunpack.c.l.b16 %v2342
        %v2478 = vunpack.c.l.b16 %v2343
        %v2479 = vunpack.c.l.b16 %v2344
        %v2480 = vunpack.c.l.b16 %v2345
        %v2481 = vunpack.c.l.b16 %v2346
        %v2482 = vunpack.c.l.b16 %v2347
        %v2483 = vunpack.c.l.b16 %v2348
        %v2484 = vunpack.c.l.b16 %v2349
        %v2485 = vunpack.c.l.b16 %v2350
        %v2486 = vunpack.c.l.b16 %v2351
        %v2487 = vunpack.c.l.b16 %v2352
        %v2488 = vunpack.c.l.b16 %v2353
        %v2489 = vunpack.c.l.b16 %v2354
        %v2490 = vunpack.c.l.b16 %v2355
        %v2491 = vunpack.c.l.b16 %v2356
        %v2492 = vunpack.c.l.b16 %v2357
        %v2493 = vunpack.c.l.b16 %v2358
        %v2494 = vunpack.c.l.b16 %v2359
        %v2495 = vunpack.c.l.b16 %v2360
        %v2496 = vunpack.c.l.b16 %v2361
        %v2497 = vunpack.c.l.b16 %v2362
        %v2498 = vunpack.c.l.b16 %v2363
        %v2499 = vunpack.c.l.b16 %v2364
        %v2500 = vunpack.c.l.b16 %v2365
        %v2501 = vunpack.c.l.b16 %v2366
        %v2502 = vunpack.c.l.b16 %v2367
        %v2503 = vunpack.c.l.b16 %v2368
        %v2504 = vunpack.c.l.b16 %v2369
        %v2505 = vunpack.c.l.b16 %v2370
        %v2506 = vunpack.c.l.b16 %v2371
        %v2507 = vunpack.c.l.b16 %v2372
        %v2508 = vunpack.c.l.b16 %v2373
        %v2509 = vunpack.c.l.b16 %v2374
        %v2510 = vunpack.c.l.b16 %v2375
        %v2511 = vunpack.c.l.b16 %v2376
        %v2512 = vunpack.c.l.b16 %v2377
        %v2513 = vunpack.c.l.b16 %v2378
        %v2514 = vunpack.c.l.b16 %v2379
        %v2515 = vunpack.c.l.b16 %v2380
        %v2516 = vunpack.c.l.b16 %v2381
        %v2517 = vunpack.c.l.b16 %v2382
        %v2518 = vunpack.c.l.b16 %v2383
        %v2519 = vunpack.c.l.b16 %v2384
        %v2520 = vunpack.c.l.b16 %v2385
        %v2521 = vunpack.c.l.b16 %v2386
        %v2522 = vpack.c.b16 %v2459, %v2458
        %v2523 = vpack.c.b16 %v2461, %v2460
        %v2524 = vpack.c.b16 %v2463, %v2462
        %v2525 = vpack.c.b16 %v2465, %v2464
        %v2526 = vpack.c.b16 %v2467, %v2466
        %v2527 = vpack.c.b16 %v2469, %v2468
        %v2528 = vpack.c.b16 %v2471, %v2470
        %v2529 = vpack.c.b16 %v2473, %v2472
        %v2530 = vpack.c.b16 %v2475, %v2474
        %v2531 = vpack.c.b16 %v2477, %v2476
        %v2532 = vpack.c.b16 %v2479, %v2478
        %v2533 = vpack.c.b16 %v2481, %v2480
        %v2534 = vpack.c.b16 %v2483, %v2482
        %v2535 = vpack.c.b16 %v2485, %v2484
        %v2536 = vpack.c.b16 %v2487, %v2486
        %v2537 = vpack.c.b16 %v2489, %v2488
        %v2538 = vpack.c.b16 %v2491, %v2490
        %v2539 = vpack.c.b16 %v2493, %v2492
        %v2540 = vpack.c.b16 %v2495, %v2494
        %v2541 = vpack.c.b16 %v2497, %v2496
        %v2542 = vpack.c.b16 %v2499, %v2498
        %v2543 = vpack.c.b16 %v2501, %v2500
        %v2544 = vpack.c.b16 %v2503, %v2502
        %v2545 = vpack.c.b16 %v2505, %v2504
        %v2546 = vpack.c.b16 %v2507, %v2506
        %v2547 = vpack.c.b16 %v2509, %v2508
        %v2548 = vpack.c.b16 %v2511, %v2510
        %v2549 = vpack.c.b16 %v2513, %v2512
        %v2550 = vpack.c.b16 %v2515, %v2514
        %v2551 = vpack.c.b16 %v2517, %v2516
        %v2552 = vpack.c.b16 %v2519, %v2518
        %v2553 = vpack.c.b16 %v2521, %v2520
        %2586 = vmatprep.subr.bf16.mxu0 0
        %2587 = vmatpush1.bf16.msra.mxu0 %v2522
        %2588 = vmatprep.subr.bf16.mxu0 0
        %2589 = vmatpush1.bf16.msra.mxu0 %v2523
        %2590 = vmatprep.subr.bf16.mxu0 0
        %2591 = vmatpush1.bf16.msra.mxu0 %v2524
        %2592 = vmatprep.subr.bf16.mxu0 0
        %2593 = vmatpush1.bf16.msra.mxu0 %v2525
        %2594 = vmatprep.subr.bf16.mxu0 0
        %2595 = vmatpush1.bf16.msra.mxu0 %v2526
        %2596 = vmatprep.subr.bf16.mxu0 0
        %2597 = vmatpush1.bf16.msra.mxu0 %v2527
        %2598 = vmatprep.subr.bf16.mxu0 0
        %2599 = vmatpush1.bf16.msra.mxu0 %v2528
        %2600 = vmatprep.subr.bf16.mxu0 0
        %2601 = vmatpush1.bf16.msra.mxu0 %v2529
        %2602 = vmatprep.subr.bf16.mxu0 0
        %2603 = vmatpush1.bf16.msra.mxu0 %v2530
        %2604 = vmatprep.subr.bf16.mxu0 0
        %2605 = vmatpush1.bf16.msra.mxu0 %v2531
        %2606 = vmatprep.subr.bf16.mxu0 0
        %2607 = vmatpush1.bf16.msra.mxu0 %v2532
        %2608 = vmatprep.subr.bf16.mxu0 0
        %2609 = vmatpush1.bf16.msra.mxu0 %v2533
        %2610 = vmatprep.subr.bf16.mxu0 0
        %2611 = vmatpush1.bf16.msra.mxu0 %v2534
        %2612 = vmatprep.subr.bf16.mxu0 0
        %2613 = vmatpush1.bf16.msra.mxu0 %v2535
        %2614 = vmatprep.subr.bf16.mxu0 0
        %2615 = vmatpush1.bf16.msra.mxu0 %v2536
        %2616 = vmatprep.subr.bf16.mxu0 0
        %2617 = vmatpush1.bf16.msra.mxu0 %v2537
        %2618 = vmatprep.mubr.bf16.mxu0 %v2320
        %2619 = vmatmul.mubr.bf16.gmra.mrb[0].mxu0 %v2319
        %v2620 = vpop.f32.mrb[0].mxu0
        %v2621 = vadd.f32 %v2392, %v2620
        %v2622 = vpop.f32.mrb[0].mxu0
        %v2623 = vpop.f32.mrb[0].mxu0
        %v2624 = vpop.f32.mrb[0].mxu0
        %2625 = vdwg.mxu0
        %2626 = vmatprep.subr.bf16.mxu0 0
        %2627 = vmatpush1.bf16.msra.mxu0 %v2538
        %2628 = vmatprep.subr.bf16.mxu0 0
        %2629 = vmatpush1.bf16.msra.mxu0 %v2539
        %2630 = vmatprep.subr.bf16.mxu0 0
        %2631 = vmatpush1.bf16.msra.mxu0 %v2540
        %2632 = vmatprep.subr.bf16.mxu0 0
        %2633 = vmatpush1.bf16.msra.mxu0 %v2541
        %2634 = vmatprep.subr.bf16.mxu0 0
        %2635 = vmatpush1.bf16.msra.mxu0 %v2542
        %2636 = vmatprep.subr.bf16.mxu0 0
        %2637 = vmatpush1.bf16.msra.mxu0 %v2543
        %2638 = vmatprep.subr.bf16.mxu0 0
        %2639 = vmatpush1.bf16.msra.mxu0 %v2544
        %2640 = vmatprep.subr.bf16.mxu0 0
        %2641 = vmatpush1.bf16.msra.mxu0 %v2545
        %2642 = vmatprep.subr.bf16.mxu0 0
        %2643 = vmatpush1.bf16.msra.mxu0 %v2546
        %2644 = vmatprep.subr.bf16.mxu0 0
        %2645 = vmatpush1.bf16.msra.mxu0 %v2547
        %2646 = vmatprep.subr.bf16.mxu0 0
        %2647 = vmatpush1.bf16.msra.mxu0 %v2548
        %2648 = vmatprep.subr.bf16.mxu0 0
        %2649 = vmatpush1.bf16.msra.mxu0 %v2549
        %2650 = vmatprep.subr.bf16.mxu0 0
        %2651 = vmatpush1.bf16.msra.mxu0 %v2550
        %2652 = vmatprep.subr.bf16.mxu0 0
        %2653 = vmatpush1.bf16.msra.mxu0 %v2551
        %2654 = vmatprep.subr.bf16.mxu0 0
        %2655 = vmatpush1.bf16.msra.mxu0 %v2552
        %2656 = vmatprep.subr.bf16.mxu0 0
        %2657 = vmatpush1.bf16.msra.mxu0 %v2553
        %2658 = vmatprep.mubr.bf16.mxu0 %v2322
        %2659 = vmatmul.mubr.bf16.gmra.mrb[0].mxu0 %v2321
        %v2660 = vpop.f32.mrb[0].mxu0
        %v2661 = vadd.f32 %v2621, %v2660
        %v2662 = vpop.f32.mrb[0].mxu0
        %v2663 = vpop.f32.mrb[0].mxu0
        %v2664 = vpop.f32.mrb[0].mxu0
        %2665 = vdwg.mxu0
        %v2666 = vadd.f32 %v1974, %v2661
        %2667 = vst [vmem:[%s486] sm:$0xff] %v2666
        %s2668 = sand.u32 %s296, 1
        %s2669 = scalar_lea.sflag [#allocation4], %s2668
        %s2670 = sand.u32 %s296, 1
        %s2671 = smul.addr %s2670, 8
        %s2672 = scalar_lea.vmem [#allocation11], %s2671
        // Predicated region
        $region89: #{tpu_custom_call.1} parent=67 // pred_check
          %p2673 = pneg %p306
        $region90: #{tpu_custom_call.1} parent=67 // pred_check_branch
          %2675 = sbr.rel (%p2673) target = $region92
        $region91: #{tpu_custom_call.1} parent=67 // pred_region
          %s2677 = ssub.s32 128, 128
          %2678 = vsyncadd %s2669, %s2677
          %s2679 = smul.addr %s31, 128
          %s2680 = scalar_lea.hbm %s12, %s2679
          %s2682 = sshll.u32 %s2672, 4
          %s2683 = int_to_ptr.vmem [resolvable:$true] %s2682
          %2685 = dma.vmem_to_hbm [thread:$0]  %s2683, 128, %s2680, %s2669
        $region92: #{tpu_custom_call.1} parent=67 // pred_fallthru
          _
      $region68: #{tpu_custom_call.1} parent=5 // pred_fallthru
        _
      %p2686 = scmp.le.s32.totalorder 2, %s26
      // Predicated region
      $region93: #{tpu_custom_call.1} parent=5 // pred_check
        %p2687 = pneg %p2686
      $region94: #{tpu_custom_call.1} parent=5 // pred_check_branch
        %2689 = sbr.rel (%p2687) target = $region96
      $region95: #{tpu_custom_call.1} parent=5 // pred_region
        %s2690 = ssub.s32 %s26, 2
        // Predicated region
        $region97: #{tpu_custom_call.1} parent=95 // pred_check
          %p2691 = pneg %p312
        $region98: #{tpu_custom_call.1} parent=95 // pred_check_branch
          %2693 = sbr.rel (%p2691) target = $region100
        $region99: #{tpu_custom_call.1} parent=95 // pred_region
          %s2694 = sand.u32 %s297, 1
          %s2695 = scalar_lea.sflag [#allocation4], %s2694
          %s2696 = sand.u32 %s297, 1
          %s2697 = smul.addr %s2696, 8
          %s2698 = scalar_lea.vmem [#allocation11], %s2697
          %2699 = dma.done %s2695, 128
        $region100: #{tpu_custom_call.1} parent=95 // pred_fallthru
          _
      $region96: #{tpu_custom_call.1} parent=5 // pred_fallthru
        _
    $region6: #{tpu_custom_call.1} parent=1 // loop_footer
      %s30 = sadd.s32 1, %s26
    $region7: #{tpu_custom_call.1} parent=1 // loop_footer_branch
      %25 = sbr.rel target = $region3
    $region8: #{tpu_custom_call.1} parent=1 // loop_exit
      _
    %2700 = vsyncpa [#allocation3], 1
    %s2701 = scalar_lea.sflag [#allocation3], 1
    %2702 = vsyncpa %s2701, 1
    %2703 = vsyncpa [#allocation6], 1
    %2704 = vsyncpa [#allocation9], 1
    %2705 = vsyncpa [#allocation4], 1
    %s2706 = scalar_lea.sflag [#allocation4], 1
    %2707 = vsyncpa %s2706, 1

// kernel: tpu_custom_call.1
$region0: #{tpu_custom_call.1}
  #allocation0 [shape = 'u32[]', space=smem, size = 0x4, offset = 0x4, fixed_abs, tag = 'smem constant byte address 0x4 - core index']
  #allocation1 [shape = 'u32[144,128]{1,0:T(1,128)}', space=vmem, size = 0x12000, scoped, tag = 'internal scratch']
  %s0 = inlined_call_operand.hbm [shape: f32[2,8,128], index: 0, kind: input, shape index: {}, may-alias: {0,12}]
  %s1 = inlined_call_operand.vmem [shape: f32[1,128], index: 1, kind: input, shape index: {}]
  %s2 = inlined_call_operand.vmem [shape: f32[1,128], index: 2, kind: input, shape index: {}]
  %s3 = inlined_call_operand.hbm [shape: bf16[128,384], index: 3, kind: input, shape index: {}]
  %s4 = inlined_call_operand.hbm [shape: bf16[128,128], index: 4, kind: input, shape index: {}]
  %s5 = inlined_call_operand.vmem [shape: f32[1,128], index: 5, kind: input, shape index: {}]
  %s6 = inlined_call_operand.vmem [shape: f32[1,128], index: 6, kind: input, shape index: {}]
  %s7 = inlined_call_operand.vmem [shape: f32[1,128], index: 7, kind: input, shape index: {}]
  %s8 = inlined_call_operand.hbm [shape: bf16[128,512], index: 8, kind: input, shape index: {}]
  %s9 = inlined_call_operand.vmem [shape: f32[1,512], index: 9, kind: input, shape index: {}]
  %s10 = inlined_call_operand.hbm [shape: bf16[512,128], index: 10, kind: input, shape index: {}]
  %s11 = inlined_call_operand.vmem [shape: f32[1,128], index: 11, kind: input, shape index: {}]
  %s12 = inlined_call_operand.hbm [shape: f32[2,8,128], index: 12, kind: output, shape index: {}, may-alias: {0,12}]
  %s13 = sld [smem:[#allocation0]]
  $region101: #{tpu_custom_call.1} parent=0
    _
  %s15 = ssub.s32 1, %s13
  %s16 = scalar_select 0, %s15, %s13
  $region1: #{tpu_custom_call.1} parent=0
    #allocation2 [shape = 'u8[8192]{0}', space=vmem, size = 0x2000, scoped, tag = 'input window, operand 0']
    #allocation3 [shape = 's32[2]{0}', space=sflag, size = 0x8, scoped, tag = 'scoped memory for tpu_custom_call.1']
    #allocation4 [shape = 's32[2]{0}', space=sflag, size = 0x8, scoped, tag = 'scoped memory for tpu_custom_call.1']
    #allocation5 [shape = 'u8[98304]{0}', space=vmem, size = 0x18000, scoped, tag = 'input window, operand 3, single buffered']
    #allocation6 [shape = 's32[1]{0}', space=sflag, size = 0x4, scoped, tag = 'scoped memory for tpu_custom_call.1']
    #allocation7 [shape = 'u8[32768]{0}', space=vmem, size = 0x8000, scoped, tag = 'input window, operand 4, single buffered']
    #allocation8 [shape = 'u8[131072]{0}', space=vmem, size = 0x20000, scoped, tag = 'input window, operand 8, single buffered']
    #allocation9 [shape = 's32[1]{0}', space=sflag, size = 0x4, scoped, tag = 'scoped memory for tpu_custom_call.1']
    #allocation10 [shape = 'u8[131072]{0}', space=vmem, size = 0x20000, scoped, tag = 'input window, operand 10, single buffered']
    #allocation11 [shape = 'u8[8192]{0}', space=vmem, size = 0x2000, scoped, tag = 'output window, operand 0']
    %17 = vsyncpa [#allocation3], 0
    %s18 = scalar_lea.sflag [#allocation3], 1
    %19 = vsyncpa %s18, 0
    %20 = vsyncpa [#allocation6], 0
    %21 = vsyncpa [#allocation9], 0
    %22 = vsyncpa [#allocation4], 0
    %s23 = scalar_lea.sflag [#allocation4], 1
    %24 = vsyncpa %s23, 0
    loop: start=0, step=1, limit=4
    $region2: #{tpu_custom_call.1} parent=1 // loop_pre_header
      _
    $region3: #{tpu_custom_call.1} parent=1 // loop_header
      %s26 = sphi 0, %s30
      %p27 = scmp.ge.s32.totalorder %s26, 4
      %s36 = sphi 0, %s38
      %s39 = sphi 0, %s36
      %s40 = sphi 0, %s39
      %s56 = sphi 0, %s40
      %s60 = sphi 0, %s60
      %s62 = sphi 0, %s60
      %s63 = sphi 0, %s62
      %s77 = sphi 0, %s63
      %s81 = sphi 0, %s81
      %s83 = sphi 0, %s81
      %s84 = sphi 0, %s83
      %s98 = sphi 0, %s84
      %s102 = sphi 0, %s102
      %s104 = sphi 0, %s102
      %s105 = sphi 0, %s104
      %s119 = sphi 0, %s105
      %s123 = sphi 0, %s123
      %s125 = sphi 0, %s123
      %s126 = sphi 0, %s125
      %s140 = sphi 0, %s126
      %s144 = sphi 0, %s144
      %s146 = sphi 0, %s144
      %s147 = sphi 0, %s146
      %s161 = sphi 0, %s147
      %s165 = sphi 0, %s165
      %s167 = sphi 0, %s165
      %s168 = sphi 0, %s167
      %s182 = sphi 0, %s168
      %s186 = sphi 0, %s186
      %s188 = sphi 0, %s186
      %s189 = sphi 0, %s188
      %s203 = sphi 0, %s189
      %s207 = sphi 0, %s207
      %s209 = sphi 0, %s207
      %s210 = sphi 0, %s209
      %s224 = sphi 0, %s210
      %s228 = sphi 0, %s228
      %s230 = sphi 0, %s228
      %s231 = sphi 0, %s230
      %s245 = sphi 0, %s231
      %s249 = sphi 0, %s249
      %s251 = sphi 0, %s249
      %s252 = sphi 0, %s251
      %s266 = sphi 0, %s252
      %s270 = sphi 0, %s270
      %s272 = sphi 0, %s270
      %s273 = sphi 0, %s272
      %s287 = sphi 0, %s273
      %s293 = sphi 0, %s295
      %s296 = sphi 0, %s293
      %s297 = sphi 0, %s296
      %s313 = sphi 0, %s297
    $region4: #{tpu_custom_call.1} parent=1 // loop_header_branch
      %29 = sbr.rel (%p27) target = $region8
    $region5: #{tpu_custom_call.1} parent=1 // loop_body
      %s31 = ssub.s32 %s26, 1
      %s32 = ssub.s32 %s26, 2
      %s33 = sadd.s32 %s26, 1
      %s34 = ssub.s32 %s26, %s33
      %p35 = scmp.eq.s32.totalorder %s34, 0
      %s37 = sadd.s32 %s36, 1
      %s38 = scalar_select %p35, %s36, %s37
      %p41 = pneg %p35
      %p42 = scmp.eq.s32.totalorder %s26, 1
      %p43 = por %p41, %p42
      %p44 = scmp.ne.s32.totalorder %s36, %s39
      %p45 = scmp.eq.s32.totalorder %s26, 0
      %p46 = por %p44, %p45
      %p47 = scmp.ne.s32.totalorder %s36, %s39
      %p48 = scmp.eq.s32.totalorder %s31, 1
      %p49 = por %p47, %p48
      %p50 = scmp.ne.s32.totalorder %s39, %s40
      %p51 = scmp.eq.s32.totalorder %s31, 0
      %p52 = por %p50, %p51
      %p53 = scmp.ne.s32.totalorder %s39, %s40
      %p54 = scmp.eq.s32.totalorder %s32, 1
      %p55 = por %p53, %p54
      %p57 = scmp.ne.s32.totalorder %s40, %s56
      %p58 = scmp.eq.s32.totalorder %s32, 0
      %p59 = por %p57, %p58
      %s61 = sadd.s32 %s60, 1
      %p64 = scmp.eq.s32.totalorder %s26, 1
      %p65 = scmp.ne.s32.totalorder %s60, %s62
      %p66 = scmp.eq.s32.totalorder %s26, 0
      %p67 = por %p65, %p66
      %p68 = scmp.ne.s32.totalorder %s60, %s62
      %p69 = scmp.eq.s32.totalorder %s31, 1
      %p70 = por %p68, %p69
      %p71 = scmp.ne.s32.totalorder %s62, %s63
      %p72 = scmp.eq.s32.totalorder %s31, 0
      %p73 = por %p71, %p72
      %p74 = scmp.ne.s32.totalorder %s62, %s63
      %p75 = scmp.eq.s32.totalorder %s32, 1
      %p76 = por %p74, %p75
      %p78 = scmp.ne.s32.totalorder %s63, %s77
      %p79 = scmp.eq.s32.totalorder %s32, 0
      %p80 = por %p78, %p79
      %s82 = sadd.s32 %s81, 1
      %p85 = scmp.eq.s32.totalorder %s26, 1
      %p86 = scmp.ne.s32.totalorder %s81, %s83
      %p87 = scmp.eq.s32.totalorder %s26, 0
      %p88 = por %p86, %p87
      %p89 = scmp.ne.s32.totalorder %s81, %s83
      %p90 = scmp.eq.s32.totalorder %s31, 1
      %p91 = por %p89, %p90
      %p92 = scmp.ne.s32.totalorder %s83, %s84
      %p93 = scmp.eq.s32.totalorder %s31, 0
      %p94 = por %p92, %p93
      %p95 = scmp.ne.s32.totalorder %s83, %s84
      %p96 = scmp.eq.s32.totalorder %s32, 1
      %p97 = por %p95, %p96
      %p99 = scmp.ne.s32.totalorder %s84, %s98
      %p100 = scmp.eq.s32.totalorder %s32, 0
      %p101 = por %p99, %p100
      %s103 = sadd.s32 %s102, 1
      %p106 = scmp.eq.s32.totalorder %s26, 1
      %p107 = scmp.ne.s32.totalorder %s102, %s104
      %p108 = scmp.eq.s32.totalorder %s26, 0
      %p109 = por %p107, %p108
      %p110 = scmp.ne.s32.totalorder %s102, %s104
      %p111 = scmp.eq.s32.totalorder %s31, 1
      %p112 = por %p110, %p111
      %p113 = scmp.ne.s32.totalorder %s104, %s105
      %p114 = scmp.eq.s32.totalorder %s31, 0
      %p115 = por %p113, %p114
      %p116 = scmp.ne.s32.totalorder %s104, %s105
      %p117 = scmp.eq.s32.totalorder %s32, 1
      %p118 = por %p116, %p117
      %p120 = scmp.ne.s32.totalorder %s105, %s119
      %p121 = scmp.eq.s32.totalorder %s32, 0
      %p122 = por %p120, %p121
      %s124 = sadd.s32 %s123, 1
      %p127 = scmp.eq.s32.totalorder %s26, 1
      %p128 = scmp.ne.s32.totalorder %s123, %s125
      %p129 = scmp.eq.s32.totalorder %s26, 0
      %p130 = por %p128, %p129
      %p131 = scmp.ne.s32.totalorder %s123, %s125
      %p132 = scmp.eq.s32.totalorder %s31, 1
      %p133 = por %p131, %p132
      %p134 = scmp.ne.s32.totalorder %s125, %s126
      %p135 = scmp.eq.s32.totalorder %s31, 0
      %p136 = por %p134, %p135
      %p137 = scmp.ne.s32.totalorder %s125, %s126
      %p138 = scmp.eq.s32.totalorder %s32, 1
      %p139 = por %p137, %p138
      %p141 = scmp.ne.s32.totalorder %s126, %s140
      %p142 = scmp.eq.s32.totalorder %s32, 0
      %p143 = por %p141, %p142
      %s145 = sadd.s32 %s144, 1
      %p148 = scmp.eq.s32.totalorder %s26, 1
      %p149 = scmp.ne.s32.totalorder %s144, %s146
      %p150 = scmp.eq.s32.totalorder %s26, 0
      %p151 = por %p149, %p150
      %p152 = scmp.ne.s32.totalorder %s144, %s146
      %p153 = scmp.eq.s32.totalorder %s31, 1
      %p154 = por %p152, %p153
      %p155 = scmp.ne.s32.totalorder %s146, %s147
      %p156 = scmp.eq.s32.totalorder %s31, 0
      %p157 = por %p155, %p156
      %p158 = scmp.ne.s32.totalorder %s146, %s147
      %p159 = scmp.eq.s32.totalorder %s32, 1
      %p160 = por %p158, %p159
      %p162 = scmp.ne.s32.totalorder %s147, %s161
      %p163 = scmp.eq.s32.totalorder %s32, 0
      %p164 = por %p162, %p163
      %s166 = sadd.s32 %s165, 1
      %p169 = scmp.eq.s32.totalorder %s26, 1
      %p170 = scmp.ne.s32.totalorder %s165, %s167
      %p171 = scmp.eq.s32.totalorder %s26, 0
      %p172 = por %p170, %p171
      %p173 = scmp.ne.s32.totalorder %s165, %s167
      %p174 = scmp.eq.s32.totalorder %s31, 1
      %p175 = por %p173, %p174
      %p176 = scmp.ne.s32.totalorder %s167, %s168
      %p177 = scmp.eq.s32.totalorder %s31, 0
      %p178 = por %p176, %p177
      %p179 = scmp.ne.s32.totalorder %s167, %s168
      %p180 = scmp.eq.s32.totalorder %s32, 1
      %p181 = por %p179, %p180
      %p183 = scmp.ne.s32.totalorder %s168, %s182
      %p184 = scmp.eq.s32.totalorder %s32, 0
      %p185 = por %p183, %p184
      %s187 = sadd.s32 %s186, 1
      %p190 = scmp.eq.s32.totalorder %s26, 1
      %p191 = scmp.ne.s32.totalorder %s186, %s188
      %p192 = scmp.eq.s32.totalorder %s26, 0
      %p193 = por %p191, %p192
      %p194 = scmp.ne.s32.totalorder %s186, %s188
      %p195 = scmp.eq.s32.totalorder %s31, 1
      %p196 = por %p194, %p195
      %p197 = scmp.ne.s32.totalorder %s188, %s189
      %p198 = scmp.eq.s32.totalorder %s31, 0
      %p199 = por %p197, %p198
      %p200 = scmp.ne.s32.totalorder %s188, %s189
      %p201 = scmp.eq.s32.totalorder %s32, 1
      %p202 = por %p200, %p201
      %p204 = scmp.ne.s32.totalorder %s189, %s203
      %p205 = scmp.eq.s32.totalorder %s32, 0
      %p206 = por %p204, %p205
      %s208 = sadd.s32 %s207, 1
      %p211 = scmp.eq.s32.totalorder %s26, 1
      %p212 = scmp.ne.s32.totalorder %s207, %s209
      %p213 = scmp.eq.s32.totalorder %s26, 0
      %p214 = por %p212, %p213
      %p215 = scmp.ne.s32.totalorder %s207, %s209
      %p216 = scmp.eq.s32.totalorder %s31, 1
      %p217 = por %p215, %p216
      %p218 = scmp.ne.s32.totalorder %s209, %s210
      %p219 = scmp.eq.s32.totalorder %s31, 0
      %p220 = por %p218, %p219
      %p221 = scmp.ne.s32.totalorder %s209, %s210
      %p222 = scmp.eq.s32.totalorder %s32, 1
      %p223 = por %p221, %p222
      %p225 = scmp.ne.s32.totalorder %s210, %s224
      %p226 = scmp.eq.s32.totalorder %s32, 0
      %p227 = por %p225, %p226
      %s229 = sadd.s32 %s228, 1
      %p232 = scmp.eq.s32.totalorder %s26, 1
      %p233 = scmp.ne.s32.totalorder %s228, %s230
      %p234 = scmp.eq.s32.totalorder %s26, 0
      %p235 = por %p233, %p234
      %p236 = scmp.ne.s32.totalorder %s228, %s230
      %p237 = scmp.eq.s32.totalorder %s31, 1
      %p238 = por %p236, %p237
      %p239 = scmp.ne.s32.totalorder %s230, %s231
      %p240 = scmp.eq.s32.totalorder %s31, 0
      %p241 = por %p239, %p240
      %p242 = scmp.ne.s32.totalorder %s230, %s231
      %p243 = scmp.eq.s32.totalorder %s32, 1
      %p244 = por %p242, %p243
      %p246 = scmp.ne.s32.totalorder %s231, %s245
      %p247 = scmp.eq.s32.totalorder %s32, 0
      %p248 = por %p246, %p247
      %s250 = sadd.s32 %s249, 1
      %p253 = scmp.eq.s32.totalorder %s26, 1
      %p254 = scmp.ne.s32.totalorder %s249, %s251
      %p255 = scmp.eq.s32.totalorder %s26, 0
      %p256 = por %p254, %p255
      %p257 = scmp.ne.s32.totalorder %s249, %s251
      %p258 = scmp.eq.s32.totalorder %s31, 1
      %p259 = por %p257, %p258
      %p260 = scmp.ne.s32.totalorder %s251, %s252
      %p261 = scmp.eq.s32.totalorder %s31, 0
      %p262 = por %p260, %p261
      %p263 = scmp.ne.s32.totalorder %s251, %s252
      %p264 = scmp.eq.s32.totalorder %s32, 1
      %p265 = por %p263, %p264
      %p267 = scmp.ne.s32.totalorder %s252, %s266
      %p268 = scmp.eq.s32.totalorder %s32, 0
      %p269 = por %p267, %p268
      %s271 = sadd.s32 %s270, 1
      %p274 = scmp.eq.s32.totalorder %s26, 1
      %p275 = scmp.ne.s32.totalorder %s270, %s272
      %p276 = scmp.eq.s32.totalorder %s26, 0
      %p277 = por %p275, %p276
      %p278 = scmp.ne.s32.totalorder %s270, %s272
      %p279 = scmp.eq.s32.totalorder %s31, 1
      %p280 = por %p278, %p279
      %p281 = scmp.ne.s32.totalorder %s272, %s273
      %p282 = scmp.eq.s32.totalorder %s31, 0
      %p283 = por %p281, %p282
      %p284 = scmp.ne.s32.totalorder %s272, %s273
      %p285 = scmp.eq.s32.totalorder %s32, 1
      %p286 = por %p284, %p285
      %p288 = scmp.ne.s32.totalorder %s273, %s287
      %p289 = scmp.eq.s32.totalorder %s32, 0
      %p290 = por %p288, %p289
      %s291 = ssub.s32 %s26, %s33
      %p292 = scmp.eq.s32.totalorder %s291, 0
      %s294 = sadd.s32 %s293, 1
      %s295 = scalar_select %p292, %s293, %s294
      %p298 = pneg %p292
      %p299 = scmp.eq.s32.totalorder %s26, 1
      %p300 = por %p298, %p299
      %p301 = scmp.ne.s32.totalorder %s293, %s296
      %p302 = scmp.eq.s32.totalorder %s26, 0
      %p303 = por %p301, %p302
      %p304 = scmp.ne.s32.totalorder %s293, %s296
      %p305 = scmp.eq.s32.totalorder %s31, 1
      %p306 = por %p304, %p305
      %p307 = scmp.ne.s32.totalorder %s296, %s297
      %p308 = scmp.eq.s32.totalorder %s31, 0
      %p309 = por %p307, %p308
      %p310 = scmp.ne.s32.totalorder %s296, %s297
      %p311 = scmp.eq.s32.totalorder %s32, 1
      %p312 = por %p310, %p311
      %p314 = scmp.ne.s32.totalorder %s297, %s313
      %p315 = scmp.eq.s32.totalorder %s32, 0
      %p316 = por %p314, %p315
      %p317 = scmp.le.s32.totalorder 1, %s26
      %p318 = scmp.lt.s32.totalorder %s26, 3
      %p319 = pnand %p317, %p318
      %p320 = pneg %p319
      // Predicated region
      $region9: #{tpu_custom_call.1} parent=5 // pred_check
        _
      $region10: #{tpu_custom_call.1} parent=5 // pred_check_branch
        %322 = sbr.rel (%p319) target = $region12
      $region11: #{tpu_custom_call.1} parent=5 // pred_region
        %s323 = ssub.s32 %s26, 1
        // Predicated region
        $region13: #{tpu_custom_call.1} parent=11 // pred_check
          %p324 = pneg %p73
        $region14: #{tpu_custom_call.1} parent=11 // pred_check_branch
          %326 = sbr.rel (%p324) target = $region16
        $region15: #{tpu_custom_call.1} parent=11 // pred_region
          _
        $region16: #{tpu_custom_call.1} parent=11 // pred_fallthru
          _
        // Predicated region
        $region17: #{tpu_custom_call.1} parent=11 // pred_check
          %p327 = pneg %p94
        $region18: #{tpu_custom_call.1} parent=11 // pred_check_branch
          %329 = sbr.rel (%p327) target = $region20
        $region19: #{tpu_custom_call.1} parent=11 // pred_region
          _
        $region20: #{tpu_custom_call.1} parent=11 // pred_fallthru
          _
        // Predicated region
        $region21: #{tpu_custom_call.1} parent=11 // pred_check
          %p330 = pneg %p115
        $region22: #{tpu_custom_call.1} parent=11 // pred_check_branch
          %332 = sbr.rel (%p330) target = $region24
        $region23: #{tpu_custom_call.1} parent=11 // pred_region
          %s334 = ssub.s32 3072, 3072
          %335 = vsyncadd [#allocation6], %s334
          %s336 = sshll.u32 [#allocation5], 4
          %s337 = int_to_ptr.vmem [resolvable:$true] %s336
          %342 = dma.hbm_to_vmem [thread:$0]  %s3, 3072, %s337, [#allocation6], 192, 192, 12
        $region24: #{tpu_custom_call.1} parent=11 // pred_fallthru
          _
        // Predicated region
        $region25: #{tpu_custom_call.1} parent=11 // pred_check
          %p343 = pneg %p136
        $region26: #{tpu_custom_call.1} parent=11 // pred_check_branch
          %345 = sbr.rel (%p343) target = $region28
        $region27: #{tpu_custom_call.1} parent=11 // pred_region
          %s347 = ssub.s32 1024, 1024
          %348 = vsyncadd [#allocation6], %s347
          %s349 = sshll.u32 [#allocation7], 4
          %s350 = int_to_ptr.vmem [resolvable:$true] %s349
          %355 = dma.hbm_to_vmem [thread:$0]  %s4, 1024, %s350, [#allocation6], 64, 64, 4
        $region28: #{tpu_custom_call.1} parent=11 // pred_fallthru
          _
        // Predicated region
        $region29: #{tpu_custom_call.1} parent=11 // pred_check
          %p356 = pneg %p157
        $region30: #{tpu_custom_call.1} parent=11 // pred_check_branch
          %358 = sbr.rel (%p356) target = $region32
        $region31: #{tpu_custom_call.1} parent=11 // pred_region
          _
        $region32: #{tpu_custom_call.1} parent=11 // pred_fallthru
          _
        // Predicated region
        $region33: #{tpu_custom_call.1} parent=11 // pred_check
          %p359 = pneg %p178
        $region34: #{tpu_custom_call.1} parent=11 // pred_check_branch
          %361 = sbr.rel (%p359) target = $region36
        $region35: #{tpu_custom_call.1} parent=11 // pred_region
          _
        $region36: #{tpu_custom_call.1} parent=11 // pred_fallthru
          _
        // Predicated region
        $region37: #{tpu_custom_call.1} parent=11 // pred_check
          %p362 = pneg %p199
        $region38: #{tpu_custom_call.1} parent=11 // pred_check_branch
          %364 = sbr.rel (%p362) target = $region40
        $region39: #{tpu_custom_call.1} parent=11 // pred_region
          _
        $region40: #{tpu_custom_call.1} parent=11 // pred_fallthru
          _
        // Predicated region
        $region41: #{tpu_custom_call.1} parent=11 // pred_check
          %p365 = pneg %p220
        $region42: #{tpu_custom_call.1} parent=11 // pred_check_branch
          %367 = sbr.rel (%p365) target = $region44
        $region43: #{tpu_custom_call.1} parent=11 // pred_region
          %s369 = ssub.s32 4096, 4096
          %370 = vsyncadd [#allocation9], %s369
          %s371 = sshll.u32 [#allocation8], 4
          %s372 = int_to_ptr.vmem [resolvable:$true] %s371
          %377 = dma.hbm_to_vmem [thread:$0]  %s8, 4096, %s372, [#allocation9], 256, 256, 16
        $region44: #{tpu_custom_call.1} parent=11 // pred_fallthru
          _
        // Predicated region
        $region45: #{tpu_custom_call.1} parent=11 // pred_check
          %p378 = pneg %p241
        $region46: #{tpu_custom_call.1} parent=11 // pred_check_branch
          %380 = sbr.rel (%p378) target = $region48
        $region47: #{tpu_custom_call.1} parent=11 // pred_region
          _
        $region48: #{tpu_custom_call.1} parent=11 // pred_fallthru
          _
        // Predicated region
        $region49: #{tpu_custom_call.1} parent=11 // pred_check
          %p381 = pneg %p262
        $region50: #{tpu_custom_call.1} parent=11 // pred_check_branch
          %383 = sbr.rel (%p381) target = $region52
        $region51: #{tpu_custom_call.1} parent=11 // pred_region
          %s385 = ssub.s32 4096, 4096
          %386 = vsyncadd [#allocation9], %s385
          %s387 = sshll.u32 [#allocation10], 4
          %s388 = int_to_ptr.vmem [resolvable:$true] %s387
          %393 = dma.hbm_to_vmem [thread:$0]  %s10, 4096, %s388, [#allocation9], 64, 64, 4
        $region52: #{tpu_custom_call.1} parent=11 // pred_fallthru
          _
        // Predicated region
        $region53: #{tpu_custom_call.1} parent=11 // pred_check
          %p394 = pneg %p283
        $region54: #{tpu_custom_call.1} parent=11 // pred_check_branch
          %396 = sbr.rel (%p394) target = $region56
        $region55: #{tpu_custom_call.1} parent=11 // pred_region
          _
        $region56: #{tpu_custom_call.1} parent=11 // pred_fallthru
          _
      $region12: #{tpu_custom_call.1} parent=5 // pred_fallthru
        _
      %p397 = scmp.lt.s32.totalorder %s26, 2
      // Predicated region
      $region57: #{tpu_custom_call.1} parent=5 // pred_check
        %p398 = pneg %p397
      $region58: #{tpu_custom_call.1} parent=5 // pred_check_branch
        %400 = sbr.rel (%p398) target = $region60
      $region59: #{tpu_custom_call.1} parent=5 // pred_region
        // Predicated region
        $region61: #{tpu_custom_call.1} parent=59 // pred_check
          %p401 = pneg %p46
        $region62: #{tpu_custom_call.1} parent=59 // pred_check_branch
          %403 = sbr.rel (%p401) target = $region64
        $region63: #{tpu_custom_call.1} parent=59 // pred_region
          %s404 = sand.u32 %s36, 1
          %s405 = scalar_lea.sflag [#allocation3], %s404
          %s406 = sand.u32 %s36, 1
          %s407 = smul.addr %s406, 8
          %s408 = scalar_lea.vmem [#allocation2], %s407
          %s410 = ssub.s32 128, 128
          %411 = vsyncadd %s405, %s410
          %s412 = smul.addr %s26, 128
          %s413 = scalar_lea.hbm %s0, %s412
          %s415 = sshll.u32 %s408, 4
          %s416 = int_to_ptr.vmem [resolvable:$true] %s415
          %418 = dma.hbm_to_vmem [thread:$0]  %s413, 128, %s416, %s405
        $region64: #{tpu_custom_call.1} parent=59 // pred_fallthru
          _
      $region60: #{tpu_custom_call.1} parent=5 // pred_fallthru
        _
      %p419 = scmp.le.s32.totalorder 1, %s26
      %p420 = scmp.lt.s32.totalorder %s26, 3
      %p421 = pnand %p419, %p420
      %p422 = pneg %p421
      // Predicated region
      $region65: #{tpu_custom_call.1} parent=5 // pred_check
        _
      $region66: #{tpu_custom_call.1} parent=5 // pred_check_branch
        %424 = sbr.rel (%p421) target = $region68
      $region67: #{tpu_custom_call.1} parent=5 // pred_region
        %s425 = ssub.s32 %s26, 1
        %s426 = sand.u32 %s39, 1
        %s427 = scalar_lea.sflag [#allocation3], %s426
        %s428 = sand.u32 %s39, 1
        %s429 = smul.addr %s428, 8
        %s430 = scalar_lea.vmem [#allocation2], %s429
        // Predicated region
        $region69: #{tpu_custom_call.1} parent=67 // pred_check
          %p431 = pneg %p52
        $region70: #{tpu_custom_call.1} parent=67 // pred_check_branch
          %433 = sbr.rel (%p431) target = $region72
        $region71: #{tpu_custom_call.1} parent=67 // pred_region
          %434 = dma.done %s427, 128
        $region72: #{tpu_custom_call.1} parent=67 // pred_fallthru
          _
        // Predicated region
        $region73: #{tpu_custom_call.1} parent=67 // pred_check
          %p435 = pneg %p115
        $region74: #{tpu_custom_call.1} parent=67 // pred_check_branch
          %437 = sbr.rel (%p435) target = $region76
        $region75: #{tpu_custom_call.1} parent=67 // pred_region
          %438 = dma.done [#allocation6], 3072
        $region76: #{tpu_custom_call.1} parent=67 // pred_fallthru
          _
        // Predicated region
        $region77: #{tpu_custom_call.1} parent=67 // pred_check
          %p439 = pneg %p136
        $region78: #{tpu_custom_call.1} parent=67 // pred_check_branch
          %441 = sbr.rel (%p439) target = $region80
        $region79: #{tpu_custom_call.1} parent=67 // pred_region
          %442 = dma.done [#allocation6], 1024
        $region80: #{tpu_custom_call.1} parent=67 // pred_fallthru
          _
        // Predicated region
        $region81: #{tpu_custom_call.1} parent=67 // pred_check
          %p443 = pneg %p220
        $region82: #{tpu_custom_call.1} parent=67 // pred_check_branch
          %445 = sbr.rel (%p443) target = $region84
        $region83: #{tpu_custom_call.1} parent=67 // pred_region
          %446 = dma.done [#allocation9], 4096
        $region84: #{tpu_custom_call.1} parent=67 // pred_fallthru
          _
        // Predicated region
        $region85: #{tpu_custom_call.1} parent=67 // pred_check
          %p447 = pneg %p262
        $region86: #{tpu_custom_call.1} parent=67 // pred_check_branch
          %449 = sbr.rel (%p447) target = $region88
        $region87: #{tpu_custom_call.1} parent=67 // pred_region
          %450 = dma.done [#allocation9], 4096
        $region88: #{tpu_custom_call.1} parent=67 // pred_fallthru
          _
        %s451 = sand.u32 %s39, 1
        %s452 = scalar_lea.sflag [#allocation3], %s451
        %s453 = sand.u32 %s39, 1
        %s454 = smul.addr %s453, 8
        %s455 = scalar_lea.vmem [#allocation2], %s454
        %p456 = pneg %p52
        %p457 = pneg %p49
        %p458 = pneg %p73
        %p459 = pneg %p70
        %p460 = pneg %p94
        %p461 = pneg %p91
        %p462 = pneg %p115
        %p463 = pneg %p112
        %p464 = pneg %p136
        %p465 = pneg %p133
        %p466 = pneg %p157
        %p467 = pneg %p154
        %p468 = pneg %p178
        %p469 = pneg %p175
        %p470 = pneg %p199
        %p471 = pneg %p196
        %p472 = pneg %p220
        %p473 = pneg %p217
        %p474 = pneg %p241
        %p475 = pneg %p238
        %p476 = pneg %p262
        %p477 = pneg %p259
        %p478 = pneg %p283
        %p479 = pneg %p280
        %p480 = pneg %p309
        %p481 = pneg %p306
        %s482 = sand.u32 %s296, 1
        %s483 = scalar_lea.sflag [#allocation4], %s482
        %s484 = sand.u32 %s296, 1
        %s485 = smul.addr %s484, 8
        %s486 = scalar_lea.vmem [#allocation11], %s485
        %v488 = vld [vmem:[%s430] sm:$0xff]
        %v489 = vld [vmem:[%s1] sm:$0x1]
        %v490 = vld [vmem:[%s2] sm:$0x1]
        %491 = vadd.xlane.f32.xlu0 %v488
        %v492 = vpop.xlane.xlu0 %491
        %v493 = vrcp.pop 128.0
        %v494 = vmul.f32 %v492, %v493
        %v495 = vsub.f32 %v488, %v494
        %v496 = vmul.f32 %v495, %v495
        %497 = vadd.xlane.f32.xlu0 %v496
        %v498 = vpop.xlane.xlu0 %497
        %v499 = vmul.f32 %v498, %v493
        %v500 = vadd.f32 %v499, 1e-05
        %v501 = vrsqrt.pop %v500
        %v502 = vmul.f32 %v495, %v501
        %v504 = vlaneseq
        %v505 = vshrl.u32 %v504, 7
        %v506 = vsub.s32 0, %v505
        %v507 = vrot.slane %v489, %v506
        %v509 = vmul.f32 %v502, %v507
        %v511 = vlaneseq
        %v512 = vshrl.u32 %v511, 7
        %v513 = vsub.s32 0, %v512
        %v514 = vrot.slane %v490, %v513
        %v516 = vadd.f32 %v509, %v514
        %v517 = vpack.c.bf16 %v516, %v516
        %v518 = vld [vmem:[#allocation5] sm:$0xff]
        %v519 = vld [vmem:[#allocation5 + $0x8] sm:$0xf]
        %v520 = vld [vmem:[#allocation5 + $0xc] sm:$0xff]
        %v521 = vld [vmem:[#allocation5 + $0x14] sm:$0xf]
        %v522 = vld [vmem:[#allocation5 + $0x18] sm:$0xff]
        %v523 = vld [vmem:[#allocation5 + $0x20] sm:$0xf]
        %v524 = vld [vmem:[#allocation5 + $0x24] sm:$0xff]
        %v525 = vld [vmem:[#allocation5 + $0x2c] sm:$0xf]
        %v526 = vld [vmem:[#allocation5 + $0x30] sm:$0xff]
        %v527 = vld [vmem:[#allocation5 + $0x38] sm:$0xf]
        %v528 = vld [vmem:[#allocation5 + $0x3c] sm:$0xff]
        %v529 = vld [vmem:[#allocation5 + $0x44] sm:$0xf]
        %v530 = vld [vmem:[#allocation5 + $0x48] sm:$0xff]
        %v531 = vld [vmem:[#allocation5 + $0x50] sm:$0xf]
        %v532 = vld [vmem:[#allocation5 + $0x54] sm:$0xff]
        %v533 = vld [vmem:[#allocation5 + $0x5c] sm:$0xf]
        %v534 = vld [vmem:[#allocation5 + $0x60] sm:$0xff]
        %v535 = vld [vmem:[#allocation5 + $0x68] sm:$0xf]
        %v536 = vld [vmem:[#allocation5 + $0x6c] sm:$0xff]
        %v537 = vld [vmem:[#allocation5 + $0x74] sm:$0xf]
        %v538 = vld [vmem:[#allocation5 + $0x78] sm:$0xff]
        %v539 = vld [vmem:[#allocation5 + $0x80] sm:$0xf]
        %v540 = vld [vmem:[#allocation5 + $0x84] sm:$0xff]
        %v541 = vld [vmem:[#allocation5 + $0x8c] sm:$0xf]
        %v542 = vld [vmem:[#allocation5 + $0x90] sm:$0xff]
        %v543 = vld [vmem:[#allocation5 + $0x98] sm:$0xf]
        %v544 = vld [vmem:[#allocation5 + $0x9c] sm:$0xff]
        %v545 = vld [vmem:[#allocation5 + $0xa4] sm:$0xf]
        %v546 = vld [vmem:[#allocation5 + $0xa8] sm:$0xff]
        %v547 = vld [vmem:[#allocation5 + $0xb0] sm:$0xf]
        %v548 = vld [vmem:[#allocation5 + $0xb4] sm:$0xff]
        %v549 = vld [vmem:[#allocation5 + $0xbc] sm:$0xf]
        %v582 = vunpack.c.l.b16 %v518
        %v583 = vunpack.c.h.b16 %v518
        %v584 = vunpack.c.l.b16 %v519
        %v585 = vunpack.c.l.b16 %v520
        %v586 = vunpack.c.h.b16 %v520
        %v587 = vunpack.c.l.b16 %v521
        %v588 = vunpack.c.l.b16 %v522
        %v589 = vunpack.c.h.b16 %v522
        %v590 = vunpack.c.l.b16 %v523
        %v591 = vunpack.c.l.b16 %v524
        %v592 = vunpack.c.h.b16 %v524
        %v593 = vunpack.c.l.b16 %v525
        %v594 = vunpack.c.l.b16 %v526
        %v595 = vunpack.c.h.b16 %v526
        %v596 = vunpack.c.l.b16 %v527
        %v597 = vunpack.c.l.b16 %v528
        %v598 = vunpack.c.h.b16 %v528
        %v599 = vunpack.c.l.b16 %v529
        %v600 = vunpack.c.l.b16 %v530
        %v601 = vunpack.c.h.b16 %v530
        %v602 = vunpack.c.l.b16 %v531
        %v603 = vunpack.c.l.b16 %v532
        %v604 = vunpack.c.h.b16 %v532
        %v605 = vunpack.c.l.b16 %v533
        %v606 = vunpack.c.l.b16 %v534
        %v607 = vunpack.c.h.b16 %v534
        %v608 = vunpack.c.l.b16 %v535
        %v609 = vunpack.c.l.b16 %v536
        %v610 = vunpack.c.h.b16 %v536
        %v611 = vunpack.c.l.b16 %v537
        %v612 = vunpack.c.l.b16 %v538
        %v613 = vunpack.c.h.b16 %v538
        %v614 = vunpack.c.l.b16 %v539
        %v615 = vunpack.c.l.b16 %v540
        %v616 = vunpack.c.h.b16 %v540
        %v617 = vunpack.c.l.b16 %v541
        %v618 = vunpack.c.l.b16 %v542
        %v619 = vunpack.c.h.b16 %v542
        %v620 = vunpack.c.l.b16 %v543
        %v621 = vunpack.c.l.b16 %v544
        %v622 = vunpack.c.h.b16 %v544
        %v623 = vunpack.c.l.b16 %v545
        %v624 = vunpack.c.l.b16 %v546
        %v625 = vunpack.c.h.b16 %v546
        %v626 = vunpack.c.l.b16 %v547
        %v627 = vunpack.c.l.b16 %v548
        %v628 = vunpack.c.h.b16 %v548
        %v629 = vunpack.c.l.b16 %v549
        %v630 = vpack.c.b16 %v585, %v582
        %v631 = vpack.c.b16 %v586, %v583
        %v632 = vpack.c.b16 %v587, %v584
        %v633 = vpack.c.b16 %v591, %v588
        %v634 = vpack.c.b16 %v592, %v589
        %v635 = vpack.c.b16 %v593, %v590
        %v636 = vpack.c.b16 %v597, %v594
        %v637 = vpack.c.b16 %v598, %v595
        %v638 = vpack.c.b16 %v599, %v596
        %v639 = vpack.c.b16 %v603, %v600
        %v640 = vpack.c.b16 %v604, %v601
        %v641 = vpack.c.b16 %v605, %v602
        %v642 = vpack.c.b16 %v609, %v606
        %v643 = vpack.c.b16 %v610, %v607
        %v644 = vpack.c.b16 %v611, %v608
        %v645 = vpack.c.b16 %v615, %v612
        %v646 = vpack.c.b16 %v616, %v613
        %v647 = vpack.c.b16 %v617, %v614
        %v648 = vpack.c.b16 %v621, %v618
        %v649 = vpack.c.b16 %v622, %v619
        %v650 = vpack.c.b16 %v623, %v620
        %v651 = vpack.c.b16 %v627, %v624
        %v652 = vpack.c.b16 %v628, %v625
        %v653 = vpack.c.b16 %v629, %v626
        %678 = vmatprep.subr.bf16.mxu0 %v631
        %679 = vmatpush1.bf16.msra.mxu0 %v630
        %680 = vmatprep.subr.bf16.mxu0 %v634
        %681 = vmatpush1.bf16.msra.mxu0 %v633
        %682 = vmatprep.subr.bf16.mxu0 %v637
        %683 = vmatpush1.bf16.msra.mxu0 %v636
        %684 = vmatprep.subr.bf16.mxu0 %v640
        %685 = vmatpush1.bf16.msra.mxu0 %v639
        %686 = vmatprep.subr.bf16.mxu0 %v643
        %687 = vmatpush1.bf16.msra.mxu0 %v642
        %688 = vmatprep.subr.bf16.mxu0 %v646
        %689 = vmatpush1.bf16.msra.mxu0 %v645
        %690 = vmatprep.subr.bf16.mxu0 %v649
        %691 = vmatpush1.bf16.msra.mxu0 %v648
        %692 = vmatprep.subr.bf16.mxu0 %v652
        %693 = vmatpush1.bf16.msra.mxu0 %v651
        %694 = vmatprep.subr.bf16.mxu0 0
        %695 = vmatpush1.bf16.msra.mxu0 0
        %696 = vmatprep.subr.bf16.mxu0 0
        %697 = vmatpush1.bf16.msra.mxu0 0
        %698 = vmatprep.subr.bf16.mxu0 0
        %699 = vmatpush1.bf16.msra.mxu0 0
        %700 = vmatprep.subr.bf16.mxu0 0
        %701 = vmatpush1.bf16.msra.mxu0 0
        %702 = vmatprep.subr.bf16.mxu0 0
        %703 = vmatpush1.bf16.msra.mxu0 0
        %704 = vmatprep.subr.bf16.mxu0 0
        %705 = vmatpush1.bf16.msra.mxu0 0
        %706 = vmatprep.subr.bf16.mxu0 0
        %707 = vmatpush1.bf16.msra.mxu0 0
        %708 = vmatprep.subr.bf16.mxu0 0
        %709 = vmatpush1.bf16.msra.mxu0 0
        %710 = vmatprep.mubr.bf16.mxu0 0
        %711 = vmatmul.mubr.bf16.gmra.mrb[0].mxu0 %v517
        %v712 = vpop.f32.mrb[0].mxu0
        %v713 = vadd.f32 0.0, %v712
        %v714 = vpop.f32.mrb[0].mxu0
        %v715 = vadd.f32 0.0, %v714
        %v716 = vpop.f32.mrb[0].mxu0
        %v717 = vpop.f32.mrb[0].mxu0
        %718 = vdwg.mxu0
        %719 = vmatprep.subr.bf16.mxu0 0
        %720 = vmatpush1.bf16.msra.mxu0 %v632
        %721 = vmatprep.subr.bf16.mxu0 0
        %722 = vmatpush1.bf16.msra.mxu0 %v635
        %723 = vmatprep.subr.bf16.mxu0 0
        %724 = vmatpush1.bf16.msra.mxu0 %v638
        %725 = vmatprep.subr.bf16.mxu0 0
        %726 = vmatpush1.bf16.msra.mxu0 %v641
        %727 = vmatprep.subr.bf16.mxu0 0
        %728 = vmatpush1.bf16.msra.mxu0 %v644
        %729 = vmatprep.subr.bf16.mxu0 0
        %730 = vmatpush1.bf16.msra.mxu0 %v647
        %731 = vmatprep.subr.bf16.mxu0 0
        %732 = vmatpush1.bf16.msra.mxu0 %v650
        %733 = vmatprep.subr.bf16.mxu0 0
        %734 = vmatpush1.bf16.msra.mxu0 %v653
        %735 = vmatprep.subr.bf16.mxu0 0
        %736 = vmatpush1.bf16.msra.mxu0 0
        %737 = vmatprep.subr.bf16.mxu0 0
        %738 = vmatpush1.bf16.msra.mxu0 0
        %739 = vmatprep.subr.bf16.mxu0 0
        %740 = vmatpush1.bf16.msra.mxu0 0
        %741 = vmatprep.subr.bf16.mxu0 0
        %742 = vmatpush1.bf16.msra.mxu0 0
        %743 = vmatprep.subr.bf16.mxu0 0
        %744 = vmatpush1.bf16.msra.mxu0 0
        %745 = vmatprep.subr.bf16.mxu0 0
        %746 = vmatpush1.bf16.msra.mxu0 0
        %747 = vmatprep.subr.bf16.mxu0 0
        %748 = vmatpush1.bf16.msra.mxu0 0
        %749 = vmatprep.subr.bf16.mxu0 0
        %750 = vmatpush1.bf16.msra.mxu0 0
        %751 = vmatprep.mubr.bf16.mxu0 0
        %752 = vmatmul.mubr.bf16.gmra.mrb[0].mxu0 %v517
        %v753 = vpop.f32.mrb[0].mxu0
        %v754 = vadd.f32 0.0, %v753
        %v755 = vpop.f32.mrb[0].mxu0
        %v756 = vpop.f32.mrb[0].mxu0
        %v757 = vpop.f32.mrb[0].mxu0
        %758 = vdwg.mxu0
        %v759 = vpack.c.bf16 %v713, %v713
        %v760 = vpack.c.bf16 %v715, %v715
        %v761 = vpack.c.bf16 %v754, %v754
        %763 = vrot.lane.b32.xlu0 %v759, 96
        %v764 = vpop.permute.xlu0 %763
        %765 = vrot.lane.b32.xlu0 %v759, 64
        %v766 = vpop.permute.xlu0 %765
        %767 = vrot.lane.b32.xlu0 %v759, 32
        %v768 = vpop.permute.xlu0 %767
        %v770 = vunpack.c.l.s4 1983009808
        %v771 = vunpack.c.0.s8 %v770
        %v772 = vlaneseq
        %v773 = vshrl.u32 %v772, 7
        %v774 = vsub.s32 %v771, %v773
        %v775 = vrot.slane %v759, %v774
        %v778 = vunpack.c.l.s4 1983009808
        %v779 = vunpack.c.0.s8 %v778
        %v780 = vlaneseq
        %v781 = vshrl.u32 %v780, 7
        %v782 = vsub.s32 %v779, %v781
        %v783 = vrot.slane %v766, %v782
        %v784 = vcombine.low %v775, %v783
        %v785 = vcombine.high %v775, %v783
        %v787 = vunpack.c.l.s4 1934713408
        %v788 = vunpack.c.0.s8 %v787
        %v789 = vlaneseq
        %v790 = vshrl.u32 %v789, 7
        %v791 = vsub.s32 %v788, %v790
        %v792 = vrot.slane %v784, %v791
        %v794 = vunpack.c.l.s4 1934713408
        %v795 = vunpack.c.0.s8 %v794
        %v796 = vlaneseq
        %v797 = vshrl.u32 %v796, 7
        %v798 = vsub.s32 %v795, %v797
        %v799 = vrot.slane %v785, %v798
        %v800 = vcombine.high %v792, 0
        %v801 = vcombine.high %v799, 0
        %v804 = vunpack.c.l.s4 1983009808
        %v805 = vunpack.c.0.s8 %v804
        %v806 = vlaneseq
        %v807 = vshrl.u32 %v806, 7
        %v808 = vsub.s32 %v805, %v807
        %v809 = vrot.slane %v764, %v808
        %v812 = vunpack.c.l.s4 1983009808
        %v813 = vunpack.c.0.s8 %v812
        %v814 = vlaneseq
        %v815 = vshrl.u32 %v814, 7
        %v816 = vsub.s32 %v813, %v815
        %v817 = vrot.slane %v768, %v816
        %v818 = vcombine.low %v809, %v817
        %v819 = vcombine.high %v809, %v817
        %v821 = vunpack.c.l.s4 1934713408
        %v822 = vunpack.c.0.s8 %v821
        %v823 = vlaneseq
        %v824 = vshrl.u32 %v823, 7
        %v825 = vsub.s32 %v822, %v824
        %v826 = vrot.slane %v818, %v825
        %v828 = vunpack.c.l.s4 1934713408
        %v829 = vunpack.c.0.s8 %v828
        %v830 = vlaneseq
        %v831 = vshrl.u32 %v830, 7
        %v832 = vsub.s32 %v829, %v831
        %v833 = vrot.slane %v819, %v832
        %v834 = vcombine.high %v826, 0
        %v835 = vcombine.high %v833, 0
        %v838 = vpack.i.b16 %v826, %v792
        %v840 = vshrl.u32 %v792, 16
        %v841 = vshrl.u32 %v826, 16
        %v842 = vpack.i.b16 %v841, %v840
        %v846 = vpack.i.b16 %v834, %v800
        %v848 = vshrl.u32 %v800, 16
        %v849 = vshrl.u32 %v834, 16
        %v850 = vpack.i.b16 %v849, %v848
        %v854 = vpack.i.b16 %v833, %v799
        %v856 = vshrl.u32 %v799, 16
        %v857 = vshrl.u32 %v833, 16
        %v858 = vpack.i.b16 %v857, %v856
        %v862 = vpack.i.b16 %v835, %v801
        %v864 = vshrl.u32 %v801, 16
        %v865 = vshrl.u32 %v835, 16
        %v866 = vpack.i.b16 %v865, %v864
        %v868 = vcombine.low %v838, %v854
        %v870 = vunpack.c.l.s4 1983009808
        %v871 = vunpack.c.0.s8 %v870
        %v872 = vlaneseq
        %v873 = vshrl.u32 %v872, 7
        %v874 = vsub.s32 %v871, %v873
        %v875 = vrot.slane %v868, %v874
        %v876 = vcombine.low %v846, %v862
        %v878 = vunpack.c.l.s4 1983009808
        %v879 = vunpack.c.0.s8 %v878
        %v880 = vlaneseq
        %v881 = vshrl.u32 %v880, 7
        %v882 = vsub.s32 %v879, %v881
        %v883 = vrot.slane %v876, %v882
        %v884 = vcombine.low %v875, %v883
        %v886 = vunpack.c.l.s4 1934713408
        %v887 = vunpack.c.0.s8 %v886
        %v888 = vlaneseq
        %v889 = vshrl.u32 %v888, 7
        %v890 = vsub.s32 %v887, %v889
        %v891 = vrot.slane %v884, %v890
        %v892 = vcombine.high %v891, 0
        %v893 = vcombine.low %v842, %v858
        %v895 = vunpack.c.l.s4 1983009808
        %v896 = vunpack.c.0.s8 %v895
        %v897 = vlaneseq
        %v898 = vshrl.u32 %v897, 7
        %v899 = vsub.s32 %v896, %v898
        %v900 = vrot.slane %v893, %v899
        %v901 = vcombine.low %v850, %v866
        %v903 = vunpack.c.l.s4 1983009808
        %v904 = vunpack.c.0.s8 %v903
        %v905 = vlaneseq
        %v906 = vshrl.u32 %v905, 7
        %v907 = vsub.s32 %v904, %v906
        %v908 = vrot.slane %v901, %v907
        %v909 = vcombine.low %v900, %v908
        %v911 = vunpack.c.l.s4 1934713408
        %v912 = vunpack.c.0.s8 %v911
        %v913 = vlaneseq
        %v914 = vshrl.u32 %v913, 7
        %v915 = vsub.s32 %v912, %v914
        %v916 = vrot.slane %v909, %v915
        %v917 = vcombine.high %v916, 0
        %v920 = vpack.i.b16 %v916, %v891
        %v921 = vshrl.u32 %v891, 16
        %v922 = vshrl.u32 %v916, 16
        %v923 = vpack.i.b16 %v922, %v921
        %v926 = vpack.i.b16 %v917, %v892
        %v927 = vshrl.u32 %v892, 16
        %v928 = vshrl.u32 %v917, 16
        %v929 = vpack.i.b16 %v928, %v927
        %931 = vrot.lane.b32.xlu0 %v760, 96
        %v932 = vpop.permute.xlu0 %931
        %933 = vrot.lane.b32.xlu0 %v760, 64
        %v934 = vpop.permute.xlu0 %933
        %935 = vrot.lane.b32.xlu0 %v760, 32
        %v936 = vpop.permute.xlu0 %935
        %v938 = vunpack.c.l.s4 1983009808
        %v939 = vunpack.c.0.s8 %v938
        %v940 = vlaneseq
        %v941 = vshrl.u32 %v940, 7
        %v942 = vsub.s32 %v939, %v941
        %v943 = vrot.slane %v760, %v942
        %v946 = vunpack.c.l.s4 1983009808
        %v947 = vunpack.c.0.s8 %v946
        %v948 = vlaneseq
        %v949 = vshrl.u32 %v948, 7
        %v950 = vsub.s32 %v947, %v949
        %v951 = vrot.slane %v934, %v950
        %v952 = vcombine.low %v943, %v951
        %v953 = vcombine.high %v943, %v951
        %v955 = vunpack.c.l.s4 1934713408
        %v956 = vunpack.c.0.s8 %v955
        %v957 = vlaneseq
        %v958 = vshrl.u32 %v957, 7
        %v959 = vsub.s32 %v956, %v958
        %v960 = vrot.slane %v952, %v959
        %v962 = vunpack.c.l.s4 1934713408
        %v963 = vunpack.c.0.s8 %v962
        %v964 = vlaneseq
        %v965 = vshrl.u32 %v964, 7
        %v966 = vsub.s32 %v963, %v965
        %v967 = vrot.slane %v953, %v966
        %v968 = vcombine.high %v960, 0
        %v969 = vcombine.high %v967, 0
        %v972 = vunpack.c.l.s4 1983009808
        %v973 = vunpack.c.0.s8 %v972
        %v974 = vlaneseq
        %v975 = vshrl.u32 %v974, 7
        %v976 = vsub.s32 %v973, %v975
        %v977 = vrot.slane %v932, %v976
        %v980 = vunpack.c.l.s4 1983009808
        %v981 = vunpack.c.0.s8 %v980
        %v982 = vlaneseq
        %v983 = vshrl.u32 %v982, 7
        %v984 = vsub.s32 %v981, %v983
        %v985 = vrot.slane %v936, %v984
        %v986 = vcombine.low %v977, %v985
        %v987 = vcombine.high %v977, %v985
        %v989 = vunpack.c.l.s4 1934713408
        %v990 = vunpack.c.0.s8 %v989
        %v991 = vlaneseq
        %v992 = vshrl.u32 %v991, 7
        %v993 = vsub.s32 %v990, %v992
        %v994 = vrot.slane %v986, %v993
        %v996 = vunpack.c.l.s4 1934713408
        %v997 = vunpack.c.0.s8 %v996
        %v998 = vlaneseq
        %v999 = vshrl.u32 %v998, 7
        %v1000 = vsub.s32 %v997, %v999
        %v1001 = vrot.slane %v987, %v1000
        %v1002 = vcombine.high %v994, 0
        %v1003 = vcombine.high %v1001, 0
        %v1006 = vpack.i.b16 %v994, %v960
        %v1008 = vshrl.u32 %v960, 16
        %v1009 = vshrl.u32 %v994, 16
        %v1010 = vpack.i.b16 %v1009, %v1008
        %v1014 = vpack.i.b16 %v1002, %v968
        %v1016 = vshrl.u32 %v968, 16
        %v1017 = vshrl.u32 %v1002, 16
        %v1018 = vpack.i.b16 %v1017, %v1016
        %v1022 = vpack.i.b16 %v1001, %v967
        %v1024 = vshrl.u32 %v967, 16
        %v1025 = vshrl.u32 %v1001, 16
        %v1026 = vpack.i.b16 %v1025, %v1024
        %v1030 = vpack.i.b16 %v1003, %v969
        %v1032 = vshrl.u32 %v969, 16
        %v1033 = vshrl.u32 %v1003, 16
        %v1034 = vpack.i.b16 %v1033, %v1032
        %v1036 = vcombine.low %v1006, %v1022
        %v1038 = vunpack.c.l.s4 1983009808
        %v1039 = vunpack.c.0.s8 %v1038
        %v1040 = vlaneseq
        %v1041 = vshrl.u32 %v1040, 7
        %v1042 = vsub.s32 %v1039, %v1041
        %v1043 = vrot.slane %v1036, %v1042
        %v1044 = vcombine.low %v1014, %v1030
        %v1046 = vunpack.c.l.s4 1983009808
        %v1047 = vunpack.c.0.s8 %v1046
        %v1048 = vlaneseq
        %v1049 = vshrl.u32 %v1048, 7
        %v1050 = vsub.s32 %v1047, %v1049
        %v1051 = vrot.slane %v1044, %v1050
        %v1052 = vcombine.low %v1043, %v1051
        %v1054 = vunpack.c.l.s4 1934713408
        %v1055 = vunpack.c.0.s8 %v1054
        %v1056 = vlaneseq
        %v1057 = vshrl.u32 %v1056, 7
        %v1058 = vsub.s32 %v1055, %v1057
        %v1059 = vrot.slane %v1052, %v1058
        %v1060 = vcombine.high %v1059, 0
        %v1061 = vcombine.low %v1010, %v1026
        %v1063 = vunpack.c.l.s4 1983009808
        %v1064 = vunpack.c.0.s8 %v1063
        %v1065 = vlaneseq
        %v1066 = vshrl.u32 %v1065, 7
        %v1067 = vsub.s32 %v1064, %v1066
        %v1068 = vrot.slane %v1061, %v1067
        %v1069 = vcombine.low %v1018, %v1034
        %v1071 = vunpack.c.l.s4 1983009808
        %v1072 = vunpack.c.0.s8 %v1071
        %v1073 = vlaneseq
        %v1074 = vshrl.u32 %v1073, 7
        %v1075 = vsub.s32 %v1072, %v1074
        %v1076 = vrot.slane %v1069, %v1075
        %v1077 = vcombine.low %v1068, %v1076
        %v1079 = vunpack.c.l.s4 1934713408
        %v1080 = vunpack.c.0.s8 %v1079
        %v1081 = vlaneseq
        %v1082 = vshrl.u32 %v1081, 7
        %v1083 = vsub.s32 %v1080, %v1082
        %v1084 = vrot.slane %v1077, %v1083
        %v1085 = vcombine.high %v1084, 0
        %v1088 = vpack.i.b16 %v1084, %v1059
        %v1089 = vshrl.u32 %v1059, 16
        %v1090 = vshrl.u32 %v1084, 16
        %v1091 = vpack.i.b16 %v1090, %v1089
        %v1094 = vpack.i.b16 %v1085, %v1060
        %v1095 = vshrl.u32 %v1060, 16
        %v1096 = vshrl.u32 %v1085, 16
        %v1097 = vpack.i.b16 %v1096, %v1095
        %1099 = vrot.lane.b32.xlu0 %v761, 96
        %v1100 = vpop.permute.xlu0 %1099
        %1101 = vrot.lane.b32.xlu0 %v761, 64
        %v1102 = vpop.permute.xlu0 %1101
        %1103 = vrot.lane.b32.xlu0 %v761, 32
        %v1104 = vpop.permute.xlu0 %1103
        %v1106 = vunpack.c.l.s4 1983009808
        %v1107 = vunpack.c.0.s8 %v1106
        %v1108 = vlaneseq
        %v1109 = vshrl.u32 %v1108, 7
        %v1110 = vsub.s32 %v1107, %v1109
        %v1111 = vrot.slane %v761, %v1110
        %v1114 = vunpack.c.l.s4 1983009808
        %v1115 = vunpack.c.0.s8 %v1114
        %v1116 = vlaneseq
        %v1117 = vshrl.u32 %v1116, 7
        %v1118 = vsub.s32 %v1115, %v1117
        %v1119 = vrot.slane %v1102, %v1118
        %v1120 = vcombine.low %v1111, %v1119
        %v1121 = vcombine.high %v1111, %v1119
        %v1123 = vunpack.c.l.s4 1934713408
        %v1124 = vunpack.c.0.s8 %v1123
        %v1125 = vlaneseq
        %v1126 = vshrl.u32 %v1125, 7
        %v1127 = vsub.s32 %v1124, %v1126
        %v1128 = vrot.slane %v1120, %v1127
        %v1130 = vunpack.c.l.s4 1934713408
        %v1131 = vunpack.c.0.s8 %v1130
        %v1132 = vlaneseq
        %v1133 = vshrl.u32 %v1132, 7
        %v1134 = vsub.s32 %v1131, %v1133
        %v1135 = vrot.slane %v1121, %v1134
        %v1136 = vcombine.high %v1128, 0
        %v1137 = vcombine.high %v1135, 0
        %v1140 = vunpack.c.l.s4 1983009808
        %v1141 = vunpack.c.0.s8 %v1140
        %v1142 = vlaneseq
        %v1143 = vshrl.u32 %v1142, 7
        %v1144 = vsub.s32 %v1141, %v1143
        %v1145 = vrot.slane %v1100, %v1144
        %v1148 = vunpack.c.l.s4 1983009808
        %v1149 = vunpack.c.0.s8 %v1148
        %v1150 = vlaneseq
        %v1151 = vshrl.u32 %v1150, 7
        %v1152 = vsub.s32 %v1149, %v1151
        %v1153 = vrot.slane %v1104, %v1152
        %v1154 = vcombine.low %v1145, %v1153
        %v1155 = vcombine.high %v1145, %v1153
        %v1157 = vunpack.c.l.s4 1934713408
        %v1158 = vunpack.c.0.s8 %v1157
        %v1159 = vlaneseq
        %v1160 = vshrl.u32 %v1159, 7
        %v1161 = vsub.s32 %v1158, %v1160
        %v1162 = vrot.slane %v1154, %v1161
        %v1164 = vunpack.c.l.s4 1934713408
        %v1165 = vunpack.c.0.s8 %v1164
        %v1166 = vlaneseq
        %v1167 = vshrl.u32 %v1166, 7
        %v1168 = vsub.s32 %v1165, %v1167
        %v1169 = vrot.slane %v1155, %v1168
        %v1170 = vcombine.high %v1162, 0
        %v1171 = vcombine.high %v1169, 0
        %v1174 = vpack.i.b16 %v1162, %v1128
        %v1176 = vshrl.u32 %v1128, 16
        %v1177 = vshrl.u32 %v1162, 16
        %v1178 = vpack.i.b16 %v1177, %v1176
        %v1182 = vpack.i.b16 %v1170, %v1136
        %v1184 = vshrl.u32 %v1136, 16
        %v1185 = vshrl.u32 %v1170, 16
        %v1186 = vpack.i.b16 %v1185, %v1184
        %v1190 = vpack.i.b16 %v1169, %v1135
        %v1192 = vshrl.u32 %v1135, 16
        %v1193 = vshrl.u32 %v1169, 16
        %v1194 = vpack.i.b16 %v1193, %v1192
        %v1198 = vpack.i.b16 %v1171, %v1137
        %v1200 = vshrl.u32 %v1137, 16
        %v1201 = vshrl.u32 %v1171, 16
        %v1202 = vpack.i.b16 %v1201, %v1200
        %v1204 = vcombine.low %v1174, %v1190
        %v1206 = vunpack.c.l.s4 1983009808
        %v1207 = vunpack.c.0.s8 %v1206
        %v1208 = vlaneseq
        %v1209 = vshrl.u32 %v1208, 7
        %v1210 = vsub.s32 %v1207, %v1209
        %v1211 = vrot.slane %v1204, %v1210
        %v1212 = vcombine.low %v1182, %v1198
        %v1214 = vunpack.c.l.s4 1983009808
        %v1215 = vunpack.c.0.s8 %v1214
        %v1216 = vlaneseq
        %v1217 = vshrl.u32 %v1216, 7
        %v1218 = vsub.s32 %v1215, %v1217
        %v1219 = vrot.slane %v1212, %v1218
        %v1220 = vcombine.low %v1211, %v1219
        %v1222 = vunpack.c.l.s4 1934713408
        %v1223 = vunpack.c.0.s8 %v1222
        %v1224 = vlaneseq
        %v1225 = vshrl.u32 %v1224, 7
        %v1226 = vsub.s32 %v1223, %v1225
        %v1227 = vrot.slane %v1220, %v1226
        %v1228 = vcombine.high %v1227, 0
        %v1229 = vcombine.low %v1178, %v1194
        %v1231 = vunpack.c.l.s4 1983009808
        %v1232 = vunpack.c.0.s8 %v1231
        %v1233 = vlaneseq
        %v1234 = vshrl.u32 %v1233, 7
        %v1235 = vsub.s32 %v1232, %v1234
        %v1236 = vrot.slane %v1229, %v1235
        %v1237 = vcombine.low %v1186, %v1202
        %v1239 = vunpack.c.l.s4 1983009808
        %v1240 = vunpack.c.0.s8 %v1239
        %v1241 = vlaneseq
        %v1242 = vshrl.u32 %v1241, 7
        %v1243 = vsub.s32 %v1240, %v1242
        %v1244 = vrot.slane %v1237, %v1243
        %v1245 = vcombine.low %v1236, %v1244
        %v1247 = vunpack.c.l.s4 1934713408
        %v1248 = vunpack.c.0.s8 %v1247
        %v1249 = vlaneseq
        %v1250 = vshrl.u32 %v1249, 7
        %v1251 = vsub.s32 %v1248, %v1250
        %v1252 = vrot.slane %v1245, %v1251
        %v1253 = vcombine.high %v1252, 0
        %v1256 = vpack.i.b16 %v1252, %v1227
        %v1257 = vshrl.u32 %v1227, 16
        %v1258 = vshrl.u32 %v1252, 16
        %v1259 = vpack.i.b16 %v1258, %v1257
        %v1262 = vpack.i.b16 %v1253, %v1228
        %v1263 = vshrl.u32 %v1228, 16
        %v1264 = vshrl.u32 %v1253, 16
        %v1265 = vpack.i.b16 %v1264, %v1263
        %vm1266 = vcmask 261120
        %v1268 = vsel %vm1266, %v920, 0
        %v1271 = vsel %vm1266, %v1088, 0
        %1273 = vmatprep.subr.bf16.mxu0 0
        %1274 = vmatpush1.bf16.xpose.msra.mxu0 %v1271
        %1275 = vmatprep.subr.bf16.mxu0 0
        %1276 = vmatpush1.bf16.xpose.msra.mxu0 0
        %1277 = vmatprep.subr.bf16.mxu0 0
        %1278 = vmatpush1.bf16.xpose.msra.mxu0 0
        %1279 = vmatprep.subr.bf16.mxu0 0
        %1280 = vmatpush1.bf16.xpose.msra.mxu0 0
        %1281 = vmatprep.subr.bf16.mxu0 0
        %1282 = vmatpush1.bf16.xpose.msra.mxu0 0
        %1283 = vmatprep.subr.bf16.mxu0 0
        %1284 = vmatpush1.bf16.xpose.msra.mxu0 0
        %1285 = vmatprep.subr.bf16.mxu0 0
        %1286 = vmatpush1.bf16.xpose.msra.mxu0 0
        %1287 = vmatprep.subr.bf16.mxu0 0
        %1288 = vmatpush1.bf16.xpose.msra.mxu0 0
        %1289 = vmatprep.subr.bf16.mxu0 0
        %1290 = vmatpush1.bf16.xpose.msra.mxu0 0
        %1291 = vmatprep.subr.bf16.mxu0 0
        %1292 = vmatpush1.bf16.xpose.msra.mxu0 0
        %1293 = vmatprep.subr.bf16.mxu0 0
        %1294 = vmatpush1.bf16.xpose.msra.mxu0 0
        %1295 = vmatprep.subr.bf16.mxu0 0
        %1296 = vmatpush1.bf16.xpose.msra.mxu0 0
        %1297 = vmatprep.subr.bf16.mxu0 0
        %1298 = vmatpush1.bf16.xpose.msra.mxu0 0
        %1299 = vmatprep.subr.bf16.mxu0 0
        %1300 = vmatpush1.bf16.xpose.msra.mxu0 0
        %1301 = vmatprep.subr.bf16.mxu0 0
        %1302 = vmatpush1.bf16.xpose.msra.mxu0 0
        %1303 = vmatprep.subr.bf16.mxu0 0
        %1304 = vmatpush1.bf16.xpose.msra.mxu0 0
        %1305 = vmatprep.mubr.bf16.mxu0 0
        %1306 = vmatmul.mubr.bf16.gmra.mrb[0].mxu0 %v1268
        %v1307 = vpop.f32.mrb[0].mxu0
        %v1308 = vadd.f32 0.0, %v1307
        %v1309 = vpop.f32.mrb[0].mxu0
        %v1310 = vpop.f32.mrb[0].mxu0
        %v1311 = vpop.f32.mrb[0].mxu0
        %1312 = vdwg.mxu0
        %v1314 = vsel %vm1266, %v923, 0
        %v1317 = vsel %vm1266, %v1091, 0
        %1319 = vmatprep.subr.bf16.mxu0 0
        %1320 = vmatpush1.bf16.xpose.msra.mxu0 %v1317
        %1321 = vmatprep.subr.bf16.mxu0 0
        %1322 = vmatpush1.bf16.xpose.msra.mxu0 0
        %1323 = vmatprep.subr.bf16.mxu0 0
        %1324 = vmatpush1.bf16.xpose.msra.mxu0 0
        %1325 = vmatprep.subr.bf16.mxu0 0
        %1326 = vmatpush1.bf16.xpose.msra.mxu0 0
        %1327 = vmatprep.subr.bf16.mxu0 0
        %1328 = vmatpush1.bf16.xpose.msra.mxu0 0
        %1329 = vmatprep.subr.bf16.mxu0 0
        %1330 = vmatpush1.bf16.xpose.msra.mxu0 0
        %1331 = vmatprep.subr.bf16.mxu0 0
        %1332 = vmatpush1.bf16.xpose.msra.mxu0 0
        %1333 = vmatprep.subr.bf16.mxu0 0
        %1334 = vmatpush1.bf16.xpose.msra.mxu0 0
        %1335 = vmatprep.subr.bf16.mxu0 0
        %1336 = vmatpush1.bf16.xpose.msra.mxu0 0
        %1337 = vmatprep.subr.bf16.mxu0 0
        %1338 = vmatpush1.bf16.xpose.msra.mxu0 0
        %1339 = vmatprep.subr.bf16.mxu0 0
        %1340 = vmatpush1.bf16.xpose.msra.mxu0 0
        %1341 = vmatprep.subr.bf16.mxu0 0
        %1342 = vmatpush1.bf16.xpose.msra.mxu0 0
        %1343 = vmatprep.subr.bf16.mxu0 0
        %1344 = vmatpush1.bf16.xpose.msra.mxu0 0
        %1345 = vmatprep.subr.bf16.mxu0 0
        %1346 = vmatpush1.bf16.xpose.msra.mxu0 0
        %1347 = vmatprep.subr.bf16.mxu0 0
        %1348 = vmatpush1.bf16.xpose.msra.mxu0 0
        %1349 = vmatprep.subr.bf16.mxu0 0
        %1350 = vmatpush1.bf16.xpose.msra.mxu0 0
        %1351 = vmatprep.mubr.bf16.mxu0 0
        %1352 = vmatmul.mubr.bf16.gmra.mrb[0].mxu0 %v1314
        %v1353 = vpop.f32.mrb[0].mxu0
        %v1354 = vadd.f32 0.0, %v1353
        %v1355 = vpop.f32.mrb[0].mxu0
        %v1356 = vpop.f32.mrb[0].mxu0
        %v1357 = vpop.f32.mrb[0].mxu0
        %1358 = vdwg.mxu0
        %v1360 = vsel %vm1266, %v926, 0
        %v1363 = vsel %vm1266, %v1094, 0
        %1365 = vmatprep.subr.bf16.mxu0 0
        %1366 = vmatpush1.bf16.xpose.msra.mxu0 %v1363
        %1367 = vmatprep.subr.bf16.mxu0 0
        %1368 = vmatpush1.bf16.xpose.msra.mxu0 0
        %1369 = vmatprep.subr.bf16.mxu0 0
        %1370 = vmatpush1.bf16.xpose.msra.mxu0 0
        %1371 = vmatprep.subr.bf16.mxu0 0
        %1372 = vmatpush1.bf16.xpose.msra.mxu0 0
        %1373 = vmatprep.subr.bf16.mxu0 0
        %1374 = vmatpush1.bf16.xpose.msra.mxu0 0
        %1375 = vmatprep.subr.bf16.mxu0 0
        %1376 = vmatpush1.bf16.xpose.msra.mxu0 0
        %1377 = vmatprep.subr.bf16.mxu0 0
        %1378 = vmatpush1.bf16.xpose.msra.mxu0 0
        %1379 = vmatprep.subr.bf16.mxu0 0
        %1380 = vmatpush1.bf16.xpose.msra.mxu0 0
        %1381 = vmatprep.subr.bf16.mxu0 0
        %1382 = vmatpush1.bf16.xpose.msra.mxu0 0
        %1383 = vmatprep.subr.bf16.mxu0 0
        %1384 = vmatpush1.bf16.xpose.msra.mxu0 0
        %1385 = vmatprep.subr.bf16.mxu0 0
        %1386 = vmatpush1.bf16.xpose.msra.mxu0 0
        %1387 = vmatprep.subr.bf16.mxu0 0
        %1388 = vmatpush1.bf16.xpose.msra.mxu0 0
        %1389 = vmatprep.subr.bf16.mxu0 0
        %1390 = vmatpush1.bf16.xpose.msra.mxu0 0
        %1391 = vmatprep.subr.bf16.mxu0 0
        %1392 = vmatpush1.bf16.xpose.msra.mxu0 0
        %1393 = vmatprep.subr.bf16.mxu0 0
        %1394 = vmatpush1.bf16.xpose.msra.mxu0 0
        %1395 = vmatprep.subr.bf16.mxu0 0
        %1396 = vmatpush1.bf16.xpose.msra.mxu0 0
        %1397 = vmatprep.mubr.bf16.mxu0 0
        %1398 = vmatmul.mubr.bf16.gmra.mrb[0].mxu0 %v1360
        %v1399 = vpop.f32.mrb[0].mxu0
        %v1400 = vadd.f32 0.0, %v1399
        %v1401 = vpop.f32.mrb[0].mxu0
        %v1402 = vpop.f32.mrb[0].mxu0
        %v1403 = vpop.f32.mrb[0].mxu0
        %1404 = vdwg.mxu0
        %v1406 = vsel %vm1266, %v929, 0
        %v1409 = vsel %vm1266, %v1097, 0
        %1411 = vmatprep.subr.bf16.mxu0 0
        %1412 = vmatpush1.bf16.xpose.msra.mxu0 %v1409
        %1413 = vmatprep.subr.bf16.mxu0 0
        %1414 = vmatpush1.bf16.xpose.msra.mxu0 0
        %1415 = vmatprep.subr.bf16.mxu0 0
        %1416 = vmatpush1.bf16.xpose.msra.mxu0 0
        %1417 = vmatprep.subr.bf16.mxu0 0
        %1418 = vmatpush1.bf16.xpose.msra.mxu0 0
        %1419 = vmatprep.subr.bf16.mxu0 0
        %1420 = vmatpush1.bf16.xpose.msra.mxu0 0
        %1421 = vmatprep.subr.bf16.mxu0 0
        %1422 = vmatpush1.bf16.xpose.msra.mxu0 0
        %1423 = vmatprep.subr.bf16.mxu0 0
        %1424 = vmatpush1.bf16.xpose.msra.mxu0 0
        %1425 = vmatprep.subr.bf16.mxu0 0
        %1426 = vmatpush1.bf16.xpose.msra.mxu0 0
        %1427 = vmatprep.subr.bf16.mxu0 0
        %1428 = vmatpush1.bf16.xpose.msra.mxu0 0
        %1429 = vmatprep.subr.bf16.mxu0 0
        %1430 = vmatpush1.bf16.xpose.msra.mxu0 0
        %1431 = vmatprep.subr.bf16.mxu0 0
        %1432 = vmatpush1.bf16.xpose.msra.mxu0 0
        %1433 = vmatprep.subr.bf16.mxu0 0
        %1434 = vmatpush1.bf16.xpose.msra.mxu0 0
        %1435 = vmatprep.subr.bf16.mxu0 0
        %1436 = vmatpush1.bf16.xpose.msra.mxu0 0
        %1437 = vmatprep.subr.bf16.mxu0 0
        %1438 = vmatpush1.bf16.xpose.msra.mxu0 0
        %1439 = vmatprep.subr.bf16.mxu0 0
        %1440 = vmatpush1.bf16.xpose.msra.mxu0 0
        %1441 = vmatprep.subr.bf16.mxu0 0
        %1442 = vmatpush1.bf16.xpose.msra.mxu0 0
        %1443 = vmatprep.mubr.bf16.mxu0 0
        %1444 = vmatmul.mubr.bf16.gmra.mrb[0].mxu0 %v1406
        %v1445 = vpop.f32.mrb[0].mxu0
        %v1446 = vadd.f32 0.0, %v1445
        %v1447 = vpop.f32.mrb[0].mxu0
        %v1448 = vpop.f32.mrb[0].mxu0
        %v1449 = vpop.f32.mrb[0].mxu0
        %1450 = vdwg.mxu0
        %vm1451 = vcmask 64512
        %v1452 = vsel %vm1451, %v1308, -inf
        %1453 = vmax.xlane.f32.xlu0 %v1452
        %v1454 = vpop.xlane.xlu0 %1453
        %v1455 = vsel %vm1451, %v1354, -inf
        %1456 = vmax.xlane.f32.xlu0 %v1455
        %v1457 = vpop.xlane.xlu0 %1456
        %v1458 = vsel %vm1451, %v1400, -inf
        %1459 = vmax.xlane.f32.xlu0 %v1458
        %v1460 = vpop.xlane.xlu0 %1459
        %v1461 = vsel %vm1451, %v1446, -inf
        %1462 = vmax.xlane.f32.xlu0 %v1461
        %v1463 = vpop.xlane.xlu0 %1462
        %v1464 = vsub.f32 %v1308, %v1454
        %v1465 = vsub.f32 %v1354, %v1457
        %v1466 = vsub.f32 %v1400, %v1460
        %v1467 = vsub.f32 %v1446, %v1463
        %v1468 = vmul.f32 %v1464, 1.442695
        %v1469 = vpow.pop %v1468
        %v1470 = vmul.f32 %v1465, 1.442695
        %v1471 = vpow.pop %v1470
        %v1472 = vmul.f32 %v1466, 1.442695
        %v1473 = vpow.pop %v1472
        %v1474 = vmul.f32 %v1467, 1.442695
        %v1475 = vpow.pop %v1474
        %v1476 = vsel %vm1451, %v1469, 0.0
        %1477 = vadd.xlane.f32.xlu0 %v1476
        %v1478 = vpop.xlane.xlu0 %1477
        %v1479 = vsel %vm1451, %v1471, 0.0
        %1480 = vadd.xlane.f32.xlu0 %v1479
        %v1481 = vpop.xlane.xlu0 %1480
        %v1482 = vsel %vm1451, %v1473, 0.0
        %1483 = vadd.xlane.f32.xlu0 %v1482
        %v1484 = vpop.xlane.xlu0 %1483
        %v1485 = vsel %vm1451, %v1475, 0.0
        %1486 = vadd.xlane.f32.xlu0 %v1485
        %v1487 = vpop.xlane.xlu0 %1486
        %v1488 = vrcp.pop %v1478
        %v1489 = vrcp.pop %v1481
        %v1490 = vrcp.pop %v1484
        %v1491 = vrcp.pop %v1487
        %v1492 = vmul.f32 %v1469, %v1488
        %v1493 = vmul.f32 %v1471, %v1489
        %v1494 = vmul.f32 %v1473, %v1490
        %v1495 = vmul.f32 %v1475, %v1491
        %v1496 = vpack.c.bf16 %v1492, %v1492
        %v1497 = vpack.c.bf16 %v1493, %v1493
        %v1498 = vpack.c.bf16 %v1494, %v1494
        %v1499 = vpack.c.bf16 %v1495, %v1495
        %v1501 = vsel %vm1451, %v1496, 0
        %vm1503 = vcmask 1043456
        %v1505 = vsel %vm1503, %v1256, 0
        %1507 = vmatprep.subr.bf16.mxu0 0
        %1508 = vmatpush1.bf16.msra.mxu0 %v1505
        %1509 = vmatprep.subr.bf16.mxu0 0
        %1510 = vmatpush1.bf16.msra.mxu0 0
        %1511 = vmatprep.subr.bf16.mxu0 0
        %1512 = vmatpush1.bf16.msra.mxu0 0
        %1513 = vmatprep.subr.bf16.mxu0 0
        %1514 = vmatpush1.bf16.msra.mxu0 0
        %1515 = vmatprep.subr.bf16.mxu0 0
        %1516 = vmatpush1.bf16.msra.mxu0 0
        %1517 = vmatprep.subr.bf16.mxu0 0
        %1518 = vmatpush1.bf16.msra.mxu0 0
        %1519 = vmatprep.subr.bf16.mxu0 0
        %1520 = vmatpush1.bf16.msra.mxu0 0
        %1521 = vmatprep.subr.bf16.mxu0 0
        %1522 = vmatpush1.bf16.msra.mxu0 0
        %1523 = vmatprep.subr.bf16.mxu0 0
        %1524 = vmatpush1.bf16.msra.mxu0 0
        %1525 = vmatprep.subr.bf16.mxu0 0
        %1526 = vmatpush1.bf16.msra.mxu0 0
        %1527 = vmatprep.subr.bf16.mxu0 0
        %1528 = vmatpush1.bf16.msra.mxu0 0
        %1529 = vmatprep.subr.bf16.mxu0 0
        %1530 = vmatpush1.bf16.msra.mxu0 0
        %1531 = vmatprep.subr.bf16.mxu0 0
        %1532 = vmatpush1.bf16.msra.mxu0 0
        %1533 = vmatprep.subr.bf16.mxu0 0
        %1534 = vmatpush1.bf16.msra.mxu0 0
        %1535 = vmatprep.subr.bf16.mxu0 0
        %1536 = vmatpush1.bf16.msra.mxu0 0
        %1537 = vmatprep.subr.bf16.mxu0 0
        %1538 = vmatpush1.bf16.msra.mxu0 0
        %1539 = vmatprep.mubr.bf16.mxu0 0
        %1540 = vmatmul.mubr.bf16.gmra.mrb[0].mxu0 %v1501
        %v1541 = vpop.f32.mrb[0].mxu0
        %v1542 = vadd.f32 0.0, %v1541
        %v1543 = vpop.f32.mrb[0].mxu0
        %v1544 = vpop.f32.mrb[0].mxu0
        %v1545 = vpop.f32.mrb[0].mxu0
        %1546 = vdwg.mxu0
        %v1548 = vsel %vm1451, %v1497, 0
        %v1551 = vsel %vm1503, %v1259, 0
        %1553 = vmatprep.subr.bf16.mxu0 0
        %1554 = vmatpush1.bf16.msra.mxu0 %v1551
        %1555 = vmatprep.subr.bf16.mxu0 0
        %1556 = vmatpush1.bf16.msra.mxu0 0
        %1557 = vmatprep.subr.bf16.mxu0 0
        %1558 = vmatpush1.bf16.msra.mxu0 0
        %1559 = vmatprep.subr.bf16.mxu0 0
        %1560 = vmatpush1.bf16.msra.mxu0 0
        %1561 = vmatprep.subr.bf16.mxu0 0
        %1562 = vmatpush1.bf16.msra.mxu0 0
        %1563 = vmatprep.subr.bf16.mxu0 0
        %1564 = vmatpush1.bf16.msra.mxu0 0
        %1565 = vmatprep.subr.bf16.mxu0 0
        %1566 = vmatpush1.bf16.msra.mxu0 0
        %1567 = vmatprep.subr.bf16.mxu0 0
        %1568 = vmatpush1.bf16.msra.mxu0 0
        %1569 = vmatprep.subr.bf16.mxu0 0
        %1570 = vmatpush1.bf16.msra.mxu0 0
        %1571 = vmatprep.subr.bf16.mxu0 0
        %1572 = vmatpush1.bf16.msra.mxu0 0
        %1573 = vmatprep.subr.bf16.mxu0 0
        %1574 = vmatpush1.bf16.msra.mxu0 0
        %1575 = vmatprep.subr.bf16.mxu0 0
        %1576 = vmatpush1.bf16.msra.mxu0 0
        %1577 = vmatprep.subr.bf16.mxu0 0
        %1578 = vmatpush1.bf16.msra.mxu0 0
        %1579 = vmatprep.subr.bf16.mxu0 0
        %1580 = vmatpush1.bf16.msra.mxu0 0
        %1581 = vmatprep.subr.bf16.mxu0 0
        %1582 = vmatpush1.bf16.msra.mxu0 0
        %1583 = vmatprep.subr.bf16.mxu0 0
        %1584 = vmatpush1.bf16.msra.mxu0 0
        %1585 = vmatprep.mubr.bf16.mxu0 0
        %1586 = vmatmul.mubr.bf16.gmra.mrb[0].mxu0 %v1548
        %v1587 = vpop.f32.mrb[0].mxu0
        %v1588 = vadd.f32 0.0, %v1587
        %v1589 = vpop.f32.mrb[0].mxu0
        %v1590 = vpop.f32.mrb[0].mxu0
        %v1591 = vpop.f32.mrb[0].mxu0
        %1592 = vdwg.mxu0
        %v1594 = vsel %vm1451, %v1498, 0
        %v1597 = vsel %vm1503, %v1262, 0
        %1599 = vmatprep.subr.bf16.mxu0 0
        %1600 = vmatpush1.bf16.msra.mxu0 %v1597
        %1601 = vmatprep.subr.bf16.mxu0 0
        %1602 = vmatpush1.bf16.msra.mxu0 0
        %1603 = vmatprep.subr.bf16.mxu0 0
        %1604 = vmatpush1.bf16.msra.mxu0 0
        %1605 = vmatprep.subr.bf16.mxu0 0
        %1606 = vmatpush1.bf16.msra.mxu0 0
        %1607 = vmatprep.subr.bf16.mxu0 0
        %1608 = vmatpush1.bf16.msra.mxu0 0
        %1609 = vmatprep.subr.bf16.mxu0 0
        %1610 = vmatpush1.bf16.msra.mxu0 0
        %1611 = vmatprep.subr.bf16.mxu0 0
        %1612 = vmatpush1.bf16.msra.mxu0 0
        %1613 = vmatprep.subr.bf16.mxu0 0
        %1614 = vmatpush1.bf16.msra.mxu0 0
        %1615 = vmatprep.subr.bf16.mxu0 0
        %1616 = vmatpush1.bf16.msra.mxu0 0
        %1617 = vmatprep.subr.bf16.mxu0 0
        %1618 = vmatpush1.bf16.msra.mxu0 0
        %1619 = vmatprep.subr.bf16.mxu0 0
        %1620 = vmatpush1.bf16.msra.mxu0 0
        %1621 = vmatprep.subr.bf16.mxu0 0
        %1622 = vmatpush1.bf16.msra.mxu0 0
        %1623 = vmatprep.subr.bf16.mxu0 0
        %1624 = vmatpush1.bf16.msra.mxu0 0
        %1625 = vmatprep.subr.bf16.mxu0 0
        %1626 = vmatpush1.bf16.msra.mxu0 0
        %1627 = vmatprep.subr.bf16.mxu0 0
        %1628 = vmatpush1.bf16.msra.mxu0 0
        %1629 = vmatprep.subr.bf16.mxu0 0
        %1630 = vmatpush1.bf16.msra.mxu0 0
        %1631 = vmatprep.mubr.bf16.mxu0 0
        %1632 = vmatmul.mubr.bf16.gmra.mrb[0].mxu0 %v1594
        %v1633 = vpop.f32.mrb[0].mxu0
        %v1634 = vadd.f32 0.0, %v1633
        %v1635 = vpop.f32.mrb[0].mxu0
        %v1636 = vpop.f32.mrb[0].mxu0
        %v1637 = vpop.f32.mrb[0].mxu0
        %1638 = vdwg.mxu0
        %v1640 = vsel %vm1451, %v1499, 0
        %v1643 = vsel %vm1503, %v1265, 0
        %1645 = vmatprep.subr.bf16.mxu0 0
        %1646 = vmatpush1.bf16.msra.mxu0 %v1643
        %1647 = vmatprep.subr.bf16.mxu0 0
        %1648 = vmatpush1.bf16.msra.mxu0 0
        %1649 = vmatprep.subr.bf16.mxu0 0
        %1650 = vmatpush1.bf16.msra.mxu0 0
        %1651 = vmatprep.subr.bf16.mxu0 0
        %1652 = vmatpush1.bf16.msra.mxu0 0
        %1653 = vmatprep.subr.bf16.mxu0 0
        %1654 = vmatpush1.bf16.msra.mxu0 0
        %1655 = vmatprep.subr.bf16.mxu0 0
        %1656 = vmatpush1.bf16.msra.mxu0 0
        %1657 = vmatprep.subr.bf16.mxu0 0
        %1658 = vmatpush1.bf16.msra.mxu0 0
        %1659 = vmatprep.subr.bf16.mxu0 0
        %1660 = vmatpush1.bf16.msra.mxu0 0
        %1661 = vmatprep.subr.bf16.mxu0 0
        %1662 = vmatpush1.bf16.msra.mxu0 0
        %1663 = vmatprep.subr.bf16.mxu0 0
        %1664 = vmatpush1.bf16.msra.mxu0 0
        %1665 = vmatprep.subr.bf16.mxu0 0
        %1666 = vmatpush1.bf16.msra.mxu0 0
        %1667 = vmatprep.subr.bf16.mxu0 0
        %1668 = vmatpush1.bf16.msra.mxu0 0
        %1669 = vmatprep.subr.bf16.mxu0 0
        %1670 = vmatpush1.bf16.msra.mxu0 0
        %1671 = vmatprep.subr.bf16.mxu0 0
        %1672 = vmatpush1.bf16.msra.mxu0 0
        %1673 = vmatprep.subr.bf16.mxu0 0
        %1674 = vmatpush1.bf16.msra.mxu0 0
        %1675 = vmatprep.subr.bf16.mxu0 0
        %1676 = vmatpush1.bf16.msra.mxu0 0
        %1677 = vmatprep.mubr.bf16.mxu0 0
        %1678 = vmatmul.mubr.bf16.gmra.mrb[0].mxu0 %v1640
        %v1679 = vpop.f32.mrb[0].mxu0
        %v1680 = vadd.f32 0.0, %v1679
        %v1681 = vpop.f32.mrb[0].mxu0
        %v1682 = vpop.f32.mrb[0].mxu0
        %v1683 = vpop.f32.mrb[0].mxu0
        %1684 = vdwg.mxu0
        %v1685 = vpack.c.bf16 %v1542, %v1542
        %v1687 = vunpack.c.l.s4 1983009808
        %v1688 = vunpack.c.0.s8 %v1687
        %v1689 = vlaneseq
        %v1690 = vshrl.u32 %v1689, 7
        %v1691 = vsub.s32 %v1688, %v1690
        %v1692 = vrot.slane %v1685, %v1691
        %v1693 = vpack.c.bf16 %v1634, %v1634
        %v1695 = vunpack.c.l.s4 1983009808
        %v1696 = vunpack.c.0.s8 %v1695
        %v1697 = vlaneseq
        %v1698 = vshrl.u32 %v1697, 7
        %v1699 = vsub.s32 %v1696, %v1698
        %v1700 = vrot.slane %v1693, %v1699
        %v1701 = vcombine.low %v1692, %v1700
        %v1702 = vcombine.high %v1692, %v1700
        %v1704 = vunpack.c.l.s4 1934713408
        %v1705 = vunpack.c.0.s8 %v1704
        %v1706 = vlaneseq
        %v1707 = vshrl.u32 %v1706, 7
        %v1708 = vsub.s32 %v1705, %v1707
        %v1709 = vrot.slane %v1701, %v1708
        %v1711 = vunpack.c.l.s4 1934713408
        %v1712 = vunpack.c.0.s8 %v1711
        %v1713 = vlaneseq
        %v1714 = vshrl.u32 %v1713, 7
        %v1715 = vsub.s32 %v1712, %v1714
        %v1716 = vrot.slane %v1702, %v1715
        %v1717 = vcombine.high %v1709, 0
        %v1718 = vcombine.high %v1716, 0
        %v1719 = vpack.c.bf16 %v1588, %v1588
        %v1721 = vunpack.c.l.s4 1983009808
        %v1722 = vunpack.c.0.s8 %v1721
        %v1723 = vlaneseq
        %v1724 = vshrl.u32 %v1723, 7
        %v1725 = vsub.s32 %v1722, %v1724
        %v1726 = vrot.slane %v1719, %v1725
        %v1727 = vpack.c.bf16 %v1680, %v1680
        %v1729 = vunpack.c.l.s4 1983009808
        %v1730 = vunpack.c.0.s8 %v1729
        %v1731 = vlaneseq
        %v1732 = vshrl.u32 %v1731, 7
        %v1733 = vsub.s32 %v1730, %v1732
        %v1734 = vrot.slane %v1727, %v1733
        %v1735 = vcombine.low %v1726, %v1734
        %v1736 = vcombine.high %v1726, %v1734
        %v1738 = vunpack.c.l.s4 1934713408
        %v1739 = vunpack.c.0.s8 %v1738
        %v1740 = vlaneseq
        %v1741 = vshrl.u32 %v1740, 7
        %v1742 = vsub.s32 %v1739, %v1741
        %v1743 = vrot.slane %v1735, %v1742
        %v1745 = vunpack.c.l.s4 1934713408
        %v1746 = vunpack.c.0.s8 %v1745
        %v1747 = vlaneseq
        %v1748 = vshrl.u32 %v1747, 7
        %v1749 = vsub.s32 %v1746, %v1748
        %v1750 = vrot.slane %v1736, %v1749
        %v1751 = vcombine.high %v1743, 0
        %v1752 = vcombine.high %v1750, 0
        %v1755 = vpack.i.b16 %v1743, %v1709
        %v1757 = vshrl.u32 %v1709, 16
        %v1758 = vshrl.u32 %v1743, 16
        %v1759 = vpack.i.b16 %v1758, %v1757
        %v1763 = vpack.i.b16 %v1751, %v1717
        %v1765 = vshrl.u32 %v1717, 16
        %v1766 = vshrl.u32 %v1751, 16
        %v1767 = vpack.i.b16 %v1766, %v1765
        %v1771 = vpack.i.b16 %v1750, %v1716
        %v1773 = vshrl.u32 %v1716, 16
        %v1774 = vshrl.u32 %v1750, 16
        %v1775 = vpack.i.b16 %v1774, %v1773
        %v1779 = vpack.i.b16 %v1752, %v1718
        %v1781 = vshrl.u32 %v1718, 16
        %v1782 = vshrl.u32 %v1752, 16
        %v1783 = vpack.i.b16 %v1782, %v1781
        %v1785 = vcombine.low %v1755, %v1771
        %v1787 = vunpack.c.l.s4 1983009808
        %v1788 = vunpack.c.0.s8 %v1787
        %v1789 = vlaneseq
        %v1790 = vshrl.u32 %v1789, 7
        %v1791 = vsub.s32 %v1788, %v1790
        %v1792 = vrot.slane %v1785, %v1791
        %v1793 = vcombine.low %v1763, %v1779
        %v1795 = vunpack.c.l.s4 1983009808
        %v1796 = vunpack.c.0.s8 %v1795
        %v1797 = vlaneseq
        %v1798 = vshrl.u32 %v1797, 7
        %v1799 = vsub.s32 %v1796, %v1798
        %v1800 = vrot.slane %v1793, %v1799
        %v1801 = vcombine.low %v1792, %v1800
        %v1803 = vunpack.c.l.s4 1934713408
        %v1804 = vunpack.c.0.s8 %v1803
        %v1805 = vlaneseq
        %v1806 = vshrl.u32 %v1805, 7
        %v1807 = vsub.s32 %v1804, %v1806
        %v1808 = vrot.slane %v1801, %v1807
        %v1809 = vcombine.high %v1808, 0
        %v1810 = vcombine.low %v1759, %v1775
        %v1812 = vunpack.c.l.s4 1983009808
        %v1813 = vunpack.c.0.s8 %v1812
        %v1814 = vlaneseq
        %v1815 = vshrl.u32 %v1814, 7
        %v1816 = vsub.s32 %v1813, %v1815
        %v1817 = vrot.slane %v1810, %v1816
        %v1818 = vcombine.low %v1767, %v1783
        %v1820 = vunpack.c.l.s4 1983009808
        %v1821 = vunpack.c.0.s8 %v1820
        %v1822 = vlaneseq
        %v1823 = vshrl.u32 %v1822, 7
        %v1824 = vsub.s32 %v1821, %v1823
        %v1825 = vrot.slane %v1818, %v1824
        %v1826 = vcombine.low %v1817, %v1825
        %v1828 = vunpack.c.l.s4 1934713408
        %v1829 = vunpack.c.0.s8 %v1828
        %v1830 = vlaneseq
        %v1831 = vshrl.u32 %v1830, 7
        %v1832 = vsub.s32 %v1829, %v1831
        %v1833 = vrot.slane %v1826, %v1832
        %v1834 = vcombine.high %v1833, 0
        %v1837 = vpack.i.b16 %v1833, %v1808
        %v1838 = vshrl.u32 %v1808, 16
        %v1839 = vshrl.u32 %v1833, 16
        %v1840 = vpack.i.b16 %v1839, %v1838
        %v1843 = vpack.i.b16 %v1834, %v1809
        %v1844 = vshrl.u32 %v1809, 16
        %v1845 = vshrl.u32 %v1834, 16
        %v1846 = vpack.i.b16 %v1845, %v1844
        %1847 = vrot.lane.b32.xlu0 %v1840, 32
        %v1848 = vpop.permute.xlu0 %1847
        %1849 = vrot.lane.b32.xlu0 %v1843, 64
        %v1850 = vpop.permute.xlu0 %1849
        %1851 = vrot.lane.b32.xlu0 %v1846, 96
        %v1852 = vpop.permute.xlu0 %1851
        %v1855 = vsel %vm1266, %v1837, %v1848
        %vm1856 = vcmask 523264
        %v1858 = vsel %vm1856, %v1855, %v1850
        %vm1859 = vcmask 785408
        %v1861 = vsel %vm1859, %v1858, %v1852
        %v1863 = vld [vmem:[#allocation7] sm:$0xf]
        %v1864 = vld [vmem:[#allocation7 + $0x4] sm:$0xf]
        %v1865 = vld [vmem:[#allocation7 + $0x8] sm:$0xf]
        %v1866 = vld [vmem:[#allocation7 + $0xc] sm:$0xf]
        %v1867 = vld [vmem:[#allocation7 + $0x10] sm:$0xf]
        %v1868 = vld [vmem:[#allocation7 + $0x14] sm:$0xf]
        %v1869 = vld [vmem:[#allocation7 + $0x18] sm:$0xf]
        %v1870 = vld [vmem:[#allocation7 + $0x1c] sm:$0xf]
        %v1871 = vld [vmem:[#allocation7 + $0x20] sm:$0xf]
        %v1872 = vld [vmem:[#allocation7 + $0x24] sm:$0xf]
        %v1873 = vld [vmem:[#allocation7 + $0x28] sm:$0xf]
        %v1874 = vld [vmem:[#allocation7 + $0x2c] sm:$0xf]
        %v1875 = vld [vmem:[#allocation7 + $0x30] sm:$0xf]
        %v1876 = vld [vmem:[#allocation7 + $0x34] sm:$0xf]
        %v1877 = vld [vmem:[#allocation7 + $0x38] sm:$0xf]
        %v1878 = vld [vmem:[#allocation7 + $0x3c] sm:$0xf]
        %v1879 = vld [vmem:[%s5] sm:$0x1]
        %v1881 = vlaneseq
        %v1882 = vshrl.u32 %v1881, 7
        %v1883 = vsub.s32 0, %v1882
        %v1884 = vrot.slane %v1879, %v1883
        %v1902 = vunpack.c.l.b16 %v1863
        %v1903 = vunpack.c.l.b16 %v1864
        %v1904 = vunpack.c.l.b16 %v1865
        %v1905 = vunpack.c.l.b16 %v1866
        %v1906 = vunpack.c.l.b16 %v1867
        %v1907 = vunpack.c.l.b16 %v1868
        %v1908 = vunpack.c.l.b16 %v1869
        %v1909 = vunpack.c.l.b16 %v1870
        %v1910 = vunpack.c.l.b16 %v1871
        %v1911 = vunpack.c.l.b16 %v1872
        %v1912 = vunpack.c.l.b16 %v1873
        %v1913 = vunpack.c.l.b16 %v1874
        %v1914 = vunpack.c.l.b16 %v1875
        %v1915 = vunpack.c.l.b16 %v1876
        %v1916 = vunpack.c.l.b16 %v1877
        %v1917 = vunpack.c.l.b16 %v1878
        %v1918 = vpack.c.b16 %v1903, %v1902
        %v1919 = vpack.c.b16 %v1905, %v1904
        %v1920 = vpack.c.b16 %v1907, %v1906
        %v1921 = vpack.c.b16 %v1909, %v1908
        %v1922 = vpack.c.b16 %v1911, %v1910
        %v1923 = vpack.c.b16 %v1913, %v1912
        %v1924 = vpack.c.b16 %v1915, %v1914
        %v1925 = vpack.c.b16 %v1917, %v1916
        %1934 = vmatprep.subr.bf16.mxu0 0
        %1935 = vmatpush1.bf16.msra.mxu0 %v1918
        %1936 = vmatprep.subr.bf16.mxu0 0
        %1937 = vmatpush1.bf16.msra.mxu0 %v1919
        %1938 = vmatprep.subr.bf16.mxu0 0
        %1939 = vmatpush1.bf16.msra.mxu0 %v1920
        %1940 = vmatprep.subr.bf16.mxu0 0
        %1941 = vmatpush1.bf16.msra.mxu0 %v1921
        %1942 = vmatprep.subr.bf16.mxu0 0
        %1943 = vmatpush1.bf16.msra.mxu0 %v1922
        %1944 = vmatprep.subr.bf16.mxu0 0
        %1945 = vmatpush1.bf16.msra.mxu0 %v1923
        %1946 = vmatprep.subr.bf16.mxu0 0
        %1947 = vmatpush1.bf16.msra.mxu0 %v1924
        %1948 = vmatprep.subr.bf16.mxu0 0
        %1949 = vmatpush1.bf16.msra.mxu0 %v1925
        %1950 = vmatprep.subr.bf16.mxu0 0
        %1951 = vmatpush1.bf16.msra.mxu0 0
        %1952 = vmatprep.subr.bf16.mxu0 0
        %1953 = vmatpush1.bf16.msra.mxu0 0
        %1954 = vmatprep.subr.bf16.mxu0 0
        %1955 = vmatpush1.bf16.msra.mxu0 0
        %1956 = vmatprep.subr.bf16.mxu0 0
        %1957 = vmatpush1.bf16.msra.mxu0 0
        %1958 = vmatprep.subr.bf16.mxu0 0
        %1959 = vmatpush1.bf16.msra.mxu0 0
        %1960 = vmatprep.subr.bf16.mxu0 0
        %1961 = vmatpush1.bf16.msra.mxu0 0
        %1962 = vmatprep.subr.bf16.mxu0 0
        %1963 = vmatpush1.bf16.msra.mxu0 0
        %1964 = vmatprep.subr.bf16.mxu0 0
        %1965 = vmatpush1.bf16.msra.mxu0 0
        %1966 = vmatprep.mubr.bf16.mxu0 0
        %1967 = vmatmul.mubr.bf16.gmra.mrb[0].mxu0 %v1861
        %v1968 = vpop.f32.mrb[0].mxu0
        %v1969 = vadd.f32 %v1884, %v1968
        %v1970 = vpop.f32.mrb[0].mxu0
        %v1971 = vpop.f32.mrb[0].mxu0
        %v1972 = vpop.f32.mrb[0].mxu0
        %1973 = vdwg.mxu0
        %v1974 = vadd.f32 %v488, %v1969
        %v1975 = vld [vmem:[%s6] sm:$0x1]
        %v1976 = vld [vmem:[%s7] sm:$0x1]
        %1977 = vadd.xlane.f32.xlu0 %v1974
        %v1978 = vpop.xlane.xlu0 %1977
        %v1979 = vmul.f32 %v1978, %v493
        %v1980 = vsub.f32 %v1974, %v1979
        %v1981 = vmul.f32 %v1980, %v1980
        %1982 = vadd.xlane.f32.xlu0 %v1981
        %v1983 = vpop.xlane.xlu0 %1982
        %v1984 = vmul.f32 %v1983, %v493
        %v1985 = vadd.f32 %v1984, 1e-05
        %v1986 = vrsqrt.pop %v1985
        %v1987 = vmul.f32 %v1980, %v1986
        %v1989 = vlaneseq
        %v1990 = vshrl.u32 %v1989, 7
        %v1991 = vsub.s32 0, %v1990
        %v1992 = vrot.slane %v1975, %v1991
        %v1994 = vmul.f32 %v1987, %v1992
        %v1996 = vlaneseq
        %v1997 = vshrl.u32 %v1996, 7
        %v1998 = vsub.s32 0, %v1997
        %v1999 = vrot.slane %v1976, %v1998
        %v2001 = vadd.f32 %v1994, %v1999
        %v2002 = vpack.c.bf16 %v2001, %v2001
        %v2003 = vld [vmem:[#allocation8] sm:$0xff]
        %v2004 = vld [vmem:[#allocation8 + $0x8] sm:$0xff]
        %v2005 = vld [vmem:[#allocation8 + $0x10] sm:$0xff]
        %v2006 = vld [vmem:[#allocation8 + $0x18] sm:$0xff]
        %v2007 = vld [vmem:[#allocation8 + $0x20] sm:$0xff]
        %v2008 = vld [vmem:[#allocation8 + $0x28] sm:$0xff]
        %v2009 = vld [vmem:[#allocation8 + $0x30] sm:$0xff]
        %v2010 = vld [vmem:[#allocation8 + $0x38] sm:$0xff]
        %v2011 = vld [vmem:[#allocation8 + $0x40] sm:$0xff]
        %v2012 = vld [vmem:[#allocation8 + $0x48] sm:$0xff]
        %v2013 = vld [vmem:[#allocation8 + $0x50] sm:$0xff]
        %v2014 = vld [vmem:[#allocation8 + $0x58] sm:$0xff]
        %v2015 = vld [vmem:[#allocation8 + $0x60] sm:$0xff]
        %v2016 = vld [vmem:[#allocation8 + $0x68] sm:$0xff]
        %v2017 = vld [vmem:[#allocation8 + $0x70] sm:$0xff]
        %v2018 = vld [vmem:[#allocation8 + $0x78] sm:$0xff]
        %v2019 = vld [vmem:[#allocation8 + $0x80] sm:$0xff]
        %v2020 = vld [vmem:[#allocation8 + $0x88] sm:$0xff]
        %v2021 = vld [vmem:[#allocation8 + $0x90] sm:$0xff]
        %v2022 = vld [vmem:[#allocation8 + $0x98] sm:$0xff]
        %v2023 = vld [vmem:[#allocation8 + $0xa0] sm:$0xff]
        %v2024 = vld [vmem:[#allocation8 + $0xa8] sm:$0xff]
        %v2025 = vld [vmem:[#allocation8 + $0xb0] sm:$0xff]
        %v2026 = vld [vmem:[#allocation8 + $0xb8] sm:$0xff]
        %v2027 = vld [vmem:[#allocation8 + $0xc0] sm:$0xff]
        %v2028 = vld [vmem:[#allocation8 + $0xc8] sm:$0xff]
        %v2029 = vld [vmem:[#allocation8 + $0xd0] sm:$0xff]
        %v2030 = vld [vmem:[#allocation8 + $0xd8] sm:$0xff]
        %v2031 = vld [vmem:[#allocation8 + $0xe0] sm:$0xff]
        %v2032 = vld [vmem:[#allocation8 + $0xe8] sm:$0xff]
        %v2033 = vld [vmem:[#allocation8 + $0xf0] sm:$0xff]
        %v2034 = vld [vmem:[#allocation8 + $0xf8] sm:$0xff]
        %v2035 = vld [vmem:[%s9] sm:$0xf]
        %v2037 = vlaneseq
        %v2038 = vshrl.u32 %v2037, 7
        %v2039 = vsub.s32 0, %v2038
        %v2040 = vrot.slane %v2035, %v2039
        %v2041 = vlaneseq
        %v2042 = vshrl.u32 %v2041, 7
        %v2043 = vsub.s32 1, %v2042
        %v2044 = vrot.slane %v2035, %v2043
        %v2045 = vlaneseq
        %v2046 = vshrl.u32 %v2045, 7
        %v2047 = vsub.s32 2, %v2046
        %v2048 = vrot.slane %v2035, %v2047
        %v2049 = vlaneseq
        %v2050 = vshrl.u32 %v2049, 7
        %v2051 = vsub.s32 3, %v2050
        %v2052 = vrot.slane %v2035, %v2051
        %v2089 = vunpack.c.l.b16 %v2003
        %v2090 = vunpack.c.h.b16 %v2003
        %v2091 = vunpack.c.l.b16 %v2004
        %v2092 = vunpack.c.h.b16 %v2004
        %v2093 = vunpack.c.l.b16 %v2005
        %v2094 = vunpack.c.h.b16 %v2005
        %v2095 = vunpack.c.l.b16 %v2006
        %v2096 = vunpack.c.h.b16 %v2006
        %v2097 = vunpack.c.l.b16 %v2007
        %v2098 = vunpack.c.h.b16 %v2007
        %v2099 = vunpack.c.l.b16 %v2008
        %v2100 = vunpack.c.h.b16 %v2008
        %v2101 = vunpack.c.l.b16 %v2009
        %v2102 = vunpack.c.h.b16 %v2009
        %v2103 = vunpack.c.l.b16 %v2010
        %v2104 = vunpack.c.h.b16 %v2010
        %v2105 = vunpack.c.l.b16 %v2011
        %v2106 = vunpack.c.h.b16 %v2011
        %v2107 = vunpack.c.l.b16 %v2012
        %v2108 = vunpack.c.h.b16 %v2012
        %v2109 = vunpack.c.l.b16 %v2013
        %v2110 = vunpack.c.h.b16 %v2013
        %v2111 = vunpack.c.l.b16 %v2014
        %v2112 = vunpack.c.h.b16 %v2014
        %v2113 = vunpack.c.l.b16 %v2015
        %v2114 = vunpack.c.h.b16 %v2015
        %v2115 = vunpack.c.l.b16 %v2016
        %v2116 = vunpack.c.h.b16 %v2016
        %v2117 = vunpack.c.l.b16 %v2017
        %v2118 = vunpack.c.h.b16 %v2017
        %v2119 = vunpack.c.l.b16 %v2018
        %v2120 = vunpack.c.h.b16 %v2018
        %v2121 = vunpack.c.l.b16 %v2019
        %v2122 = vunpack.c.h.b16 %v2019
        %v2123 = vunpack.c.l.b16 %v2020
        %v2124 = vunpack.c.h.b16 %v2020
        %v2125 = vunpack.c.l.b16 %v2021
        %v2126 = vunpack.c.h.b16 %v2021
        %v2127 = vunpack.c.l.b16 %v2022
        %v2128 = vunpack.c.h.b16 %v2022
        %v2129 = vunpack.c.l.b16 %v2023
        %v2130 = vunpack.c.h.b16 %v2023
        %v2131 = vunpack.c.l.b16 %v2024
        %v2132 = vunpack.c.h.b16 %v2024
        %v2133 = vunpack.c.l.b16 %v2025
        %v2134 = vunpack.c.h.b16 %v2025
        %v2135 = vunpack.c.l.b16 %v2026
        %v2136 = vunpack.c.h.b16 %v2026
        %v2137 = vunpack.c.l.b16 %v2027
        %v2138 = vunpack.c.h.b16 %v2027
        %v2139 = vunpack.c.l.b16 %v2028
        %v2140 = vunpack.c.h.b16 %v2028
        %v2141 = vunpack.c.l.b16 %v2029
        %v2142 = vunpack.c.h.b16 %v2029
        %v2143 = vunpack.c.l.b16 %v2030
        %v2144 = vunpack.c.h.b16 %v2030
        %v2145 = vunpack.c.l.b16 %v2031
        %v2146 = vunpack.c.h.b16 %v2031
        %v2147 = vunpack.c.l.b16 %v2032
        %v2148 = vunpack.c.h.b16 %v2032
        %v2149 = vunpack.c.l.b16 %v2033
        %v2150 = vunpack.c.h.b16 %v2033
        %v2151 = vunpack.c.l.b16 %v2034
        %v2152 = vunpack.c.h.b16 %v2034
        %v2153 = vpack.c.b16 %v2093, %v2089
        %v2154 = vpack.c.b16 %v2094, %v2090
        %v2155 = vpack.c.b16 %v2095, %v2091
        %v2156 = vpack.c.b16 %v2096, %v2092
        %v2157 = vpack.c.b16 %v2101, %v2097
        %v2158 = vpack.c.b16 %v2102, %v2098
        %v2159 = vpack.c.b16 %v2103, %v2099
        %v2160 = vpack.c.b16 %v2104, %v2100
        %v2161 = vpack.c.b16 %v2109, %v2105
        %v2162 = vpack.c.b16 %v2110, %v2106
        %v2163 = vpack.c.b16 %v2111, %v2107
        %v2164 = vpack.c.b16 %v2112, %v2108
        %v2165 = vpack.c.b16 %v2117, %v2113
        %v2166 = vpack.c.b16 %v2118, %v2114
        %v2167 = vpack.c.b16 %v2119, %v2115
        %v2168 = vpack.c.b16 %v2120, %v2116
        %v2169 = vpack.c.b16 %v2125, %v2121
        %v2170 = vpack.c.b16 %v2126, %v2122
        %v2171 = vpack.c.b16 %v2127, %v2123
        %v2172 = vpack.c.b16 %v2128, %v2124
        %v2173 = vpack.c.b16 %v2133, %v2129
        %v2174 = vpack.c.b16 %v2134, %v2130
        %v2175 = vpack.c.b16 %v2135, %v2131
        %v2176 = vpack.c.b16 %v2136, %v2132
        %v2177 = vpack.c.b16 %v2141, %v2137
        %v2178 = vpack.c.b16 %v2142, %v2138
        %v2179 = vpack.c.b16 %v2143, %v2139
        %v2180 = vpack.c.b16 %v2144, %v2140
        %v2181 = vpack.c.b16 %v2149, %v2145
        %v2182 = vpack.c.b16 %v2150, %v2146
        %v2183 = vpack.c.b16 %v2151, %v2147
        %v2184 = vpack.c.b16 %v2152, %v2148
        %2217 = vmatprep.subr.bf16.mxu0 %v2154
        %2218 = vmatpush1.bf16.msra.mxu0 %v2153
        %2219 = vmatprep.subr.bf16.mxu0 %v2158
        %2220 = vmatpush1.bf16.msra.mxu0 %v2157
        %2221 = vmatprep.subr.bf16.mxu0 %v2162
        %2222 = vmatpush1.bf16.msra.mxu0 %v2161
        %2223 = vmatprep.subr.bf16.mxu0 %v2166
        %2224 = vmatpush1.bf16.msra.mxu0 %v2165
        %2225 = vmatprep.subr.bf16.mxu0 %v2170
        %2226 = vmatpush1.bf16.msra.mxu0 %v2169
        %2227 = vmatprep.subr.bf16.mxu0 %v2174
        %2228 = vmatpush1.bf16.msra.mxu0 %v2173
        %2229 = vmatprep.subr.bf16.mxu0 %v2178
        %2230 = vmatpush1.bf16.msra.mxu0 %v2177
        %2231 = vmatprep.subr.bf16.mxu0 %v2182
        %2232 = vmatpush1.bf16.msra.mxu0 %v2181
        %2233 = vmatprep.subr.bf16.mxu0 0
        %2234 = vmatpush1.bf16.msra.mxu0 0
        %2235 = vmatprep.subr.bf16.mxu0 0
        %2236 = vmatpush1.bf16.msra.mxu0 0
        %2237 = vmatprep.subr.bf16.mxu0 0
        %2238 = vmatpush1.bf16.msra.mxu0 0
        %2239 = vmatprep.subr.bf16.mxu0 0
        %2240 = vmatpush1.bf16.msra.mxu0 0
        %2241 = vmatprep.subr.bf16.mxu0 0
        %2242 = vmatpush1.bf16.msra.mxu0 0
        %2243 = vmatprep.subr.bf16.mxu0 0
        %2244 = vmatpush1.bf16.msra.mxu0 0
        %2245 = vmatprep.subr.bf16.mxu0 0
        %2246 = vmatpush1.bf16.msra.mxu0 0
        %2247 = vmatprep.subr.bf16.mxu0 0
        %2248 = vmatpush1.bf16.msra.mxu0 0
        %2249 = vmatprep.mubr.bf16.mxu0 0
        %2250 = vmatmul.mubr.bf16.gmra.mrb[0].mxu0 %v2002
        %v2251 = vpop.f32.mrb[0].mxu0
        %v2252 = vadd.f32 %v2040, %v2251
        %v2253 = vpop.f32.mrb[0].mxu0
        %v2254 = vadd.f32 %v2044, %v2253
        %v2255 = vpop.f32.mrb[0].mxu0
        %v2256 = vpop.f32.mrb[0].mxu0
        %2257 = vdwg.mxu0
        %2258 = vmatprep.subr.bf16.mxu0 %v2156
        %2259 = vmatpush1.bf16.msra.mxu0 %v2155
        %2260 = vmatprep.subr.bf16.mxu0 %v2160
        %2261 = vmatpush1.bf16.msra.mxu0 %v2159
        %2262 = vmatprep.subr.bf16.mxu0 %v2164
        %2263 = vmatpush1.bf16.msra.mxu0 %v2163
        %2264 = vmatprep.subr.bf16.mxu0 %v2168
        %2265 = vmatpush1.bf16.msra.mxu0 %v2167
        %2266 = vmatprep.subr.bf16.mxu0 %v2172
        %2267 = vmatpush1.bf16.msra.mxu0 %v2171
        %2268 = vmatprep.subr.bf16.mxu0 %v2176
        %2269 = vmatpush1.bf16.msra.mxu0 %v2175
        %2270 = vmatprep.subr.bf16.mxu0 %v2180
        %2271 = vmatpush1.bf16.msra.mxu0 %v2179
        %2272 = vmatprep.subr.bf16.mxu0 %v2184
        %2273 = vmatpush1.bf16.msra.mxu0 %v2183
        %2274 = vmatprep.subr.bf16.mxu0 0
        %2275 = vmatpush1.bf16.msra.mxu0 0
        %2276 = vmatprep.subr.bf16.mxu0 0
        %2277 = vmatpush1.bf16.msra.mxu0 0
        %2278 = vmatprep.subr.bf16.mxu0 0
        %2279 = vmatpush1.bf16.msra.mxu0 0
        %2280 = vmatprep.subr.bf16.mxu0 0
        %2281 = vmatpush1.bf16.msra.mxu0 0
        %2282 = vmatprep.subr.bf16.mxu0 0
        %2283 = vmatpush1.bf16.msra.mxu0 0
        %2284 = vmatprep.subr.bf16.mxu0 0
        %2285 = vmatpush1.bf16.msra.mxu0 0
        %2286 = vmatprep.subr.bf16.mxu0 0
        %2287 = vmatpush1.bf16.msra.mxu0 0
        %2288 = vmatprep.subr.bf16.mxu0 0
        %2289 = vmatpush1.bf16.msra.mxu0 0
        %2290 = vmatprep.mubr.bf16.mxu0 0
        %2291 = vmatmul.mubr.bf16.gmra.mrb[0].mxu0 %v2002
        %v2292 = vpop.f32.mrb[0].mxu0
        %v2293 = vadd.f32 %v2048, %v2292
        %v2294 = vpop.f32.mrb[0].mxu0
        %v2295 = vadd.f32 %v2052, %v2294
        %v2296 = vpop.f32.mrb[0].mxu0
        %v2297 = vpop.f32.mrb[0].mxu0
        %2298 = vdwg.mxu0
        %v2299 = vmul.f32 %v2252, 0.5
        %v2300 = vmul.f32 %v2254, 0.5
        %v2301 = vmul.f32 %v2293, 0.5
        %v2302 = vmul.f32 %v2295, 0.5
        %v2303 = vmul.f32 %v2252, 0.70710677
        %v2304 = vmul.f32 %v2254, 0.70710677
        %v2305 = vmul.f32 %v2293, 0.70710677
        %v2306 = vmul.f32 %v2295, 0.70710677
        %v2307 = verf.f32.pop %v2303
        %v2308 = verf.f32.pop %v2304
        %v2309 = verf.f32.pop %v2305
        %v2310 = verf.f32.pop %v2306
        %v2311 = vadd.f32 %v2307, 1.0
        %v2312 = vadd.f32 %v2308, 1.0
        %v2313 = vadd.f32 %v2309, 1.0
        %v2314 = vadd.f32 %v2310, 1.0
        %v2315 = vmul.f32 %v2299, %v2311
        %v2316 = vmul.f32 %v2300, %v2312
        %v2317 = vmul.f32 %v2301, %v2313
        %v2318 = vmul.f32 %v2302, %v2314
        %v2319 = vpack.c.bf16 %v2315, %v2315
        %v2320 = vpack.c.bf16 %v2316, %v2316
        %v2321 = vpack.c.bf16 %v2317, %v2317
        %v2322 = vpack.c.bf16 %v2318, %v2318
        %v2323 = vld [vmem:[#allocation10] sm:$0xf]
        %v2324 = vld [vmem:[#allocation10 + $0x4] sm:$0xf]
        %v2325 = vld [vmem:[#allocation10 + $0x8] sm:$0xf]
        %v2326 = vld [vmem:[#allocation10 + $0xc] sm:$0xf]
        %v2327 = vld [vmem:[#allocation10 + $0x10] sm:$0xf]
        %v2328 = vld [vmem:[#allocation10 + $0x14] sm:$0xf]
        %v2329 = vld [vmem:[#allocation10 + $0x18] sm:$0xf]
        %v2330 = vld [vmem:[#allocation10 + $0x1c] sm:$0xf]
        %v2331 = vld [vmem:[#allocation10 + $0x20] sm:$0xf]
        %v2332 = vld [vmem:[#allocation10 + $0x24] sm:$0xf]
        %v2333 = vld [vmem:[#allocation10 + $0x28] sm:$0xf]
        %v2334 = vld [vmem:[#allocation10 + $0x2c] sm:$0xf]
        %v2335 = vld [vmem:[#allocation10 + $0x30] sm:$0xf]
        %v2336 = vld [vmem:[#allocation10 + $0x34] sm:$0xf]
        %v2337 = vld [vmem:[#allocation10 + $0x38] sm:$0xf]
        %v2338 = vld [vmem:[#allocation10 + $0x3c] sm:$0xf]
        %v2339 = vld [vmem:[#allocation10 + $0x40] sm:$0xf]
        %v2340 = vld [vmem:[#allocation10 + $0x44] sm:$0xf]
        %v2341 = vld [vmem:[#allocation10 + $0x48] sm:$0xf]
        %v2342 = vld [vmem:[#allocation10 + $0x4c] sm:$0xf]
        %v2343 = vld [vmem:[#allocation10 + $0x50] sm:$0xf]
        %v2344 = vld [vmem:[#allocation10 + $0x54] sm:$0xf]
        %v2345 = vld [vmem:[#allocation10 + $0x58] sm:$0xf]
        %v2346 = vld [vmem:[#allocation10 + $0x5c] sm:$0xf]
        %v2347 = vld [vmem:[#allocation10 + $0x60] sm:$0xf]
        %v2348 = vld [vmem:[#allocation10 + $0x64] sm:$0xf]
        %v2349 = vld [vmem:[#allocation10 + $0x68] sm:$0xf]
        %v2350 = vld [vmem:[#allocation10 + $0x6c] sm:$0xf]
        %v2351 = vld [vmem:[#allocation10 + $0x70] sm:$0xf]
        %v2352 = vld [vmem:[#allocation10 + $0x74] sm:$0xf]
        %v2353 = vld [vmem:[#allocation10 + $0x78] sm:$0xf]
        %v2354 = vld [vmem:[#allocation10 + $0x7c] sm:$0xf]
        %v2355 = vld [vmem:[#allocation10 + $0x80] sm:$0xf]
        %v2356 = vld [vmem:[#allocation10 + $0x84] sm:$0xf]
        %v2357 = vld [vmem:[#allocation10 + $0x88] sm:$0xf]
        %v2358 = vld [vmem:[#allocation10 + $0x8c] sm:$0xf]
        %v2359 = vld [vmem:[#allocation10 + $0x90] sm:$0xf]
        %v2360 = vld [vmem:[#allocation10 + $0x94] sm:$0xf]
        %v2361 = vld [vmem:[#allocation10 + $0x98] sm:$0xf]
        %v2362 = vld [vmem:[#allocation10 + $0x9c] sm:$0xf]
        %v2363 = vld [vmem:[#allocation10 + $0xa0] sm:$0xf]
        %v2364 = vld [vmem:[#allocation10 + $0xa4] sm:$0xf]
        %v2365 = vld [vmem:[#allocation10 + $0xa8] sm:$0xf]
        %v2366 = vld [vmem:[#allocation10 + $0xac] sm:$0xf]
        %v2367 = vld [vmem:[#allocation10 + $0xb0] sm:$0xf]
        %v2368 = vld [vmem:[#allocation10 + $0xb4] sm:$0xf]
        %v2369 = vld [vmem:[#allocation10 + $0xb8] sm:$0xf]
        %v2370 = vld [vmem:[#allocation10 + $0xbc] sm:$0xf]
        %v2371 = vld [vmem:[#allocation10 + $0xc0] sm:$0xf]
        %v2372 = vld [vmem:[#allocation10 + $0xc4] sm:$0xf]
        %v2373 = vld [vmem:[#allocation10 + $0xc8] sm:$0xf]
        %v2374 = vld [vmem:[#allocation10 + $0xcc] sm:$0xf]
        %v2375 = vld [vmem:[#allocation10 + $0xd0] sm:$0xf]
        %v2376 = vld [vmem:[#allocation10 + $0xd4] sm:$0xf]
        %v2377 = vld [vmem:[#allocation10 + $0xd8] sm:$0xf]
        %v2378 = vld [vmem:[#allocation10 + $0xdc] sm:$0xf]
        %v2379 = vld [vmem:[#allocation10 + $0xe0] sm:$0xf]
        %v2380 = vld [vmem:[#allocation10 + $0xe4] sm:$0xf]
        %v2381 = vld [vmem:[#allocation10 + $0xe8] sm:$0xf]
        %v2382 = vld [vmem:[#allocation10 + $0xec] sm:$0xf]
        %v2383 = vld [vmem:[#allocation10 + $0xf0] sm:$0xf]
        %v2384 = vld [vmem:[#allocation10 + $0xf4] sm:$0xf]
        %v2385 = vld [vmem:[#allocation10 + $0xf8] sm:$0xf]
        %v2386 = vld [vmem:[#allocation10 + $0xfc] sm:$0xf]
        %v2387 = vld [vmem:[%s11] sm:$0x1]
        %v2389 = vlaneseq
        %v2390 = vshrl.u32 %v2389, 7
        %v2391 = vsub.s32 0, %v2390
        %v2392 = vrot.slane %v2387, %v2391
        %v2458 = vunpack.c.l.b16 %v2323
        %v2459 = vunpack.c.l.b16 %v2324
        %v2460 = vunpack.c.l.b16 %v2325
        %v2461 = vunpack.c.l.b16 %v2326
        %v2462 = vunpack.c.l.b16 %v2327
        %v2463 = vunpack.c.l.b16 %v2328
        %v2464 = vunpack.c.l.b16 %v2329
        %v2465 = vunpack.c.l.b16 %v2330
        %v2466 = vunpack.c.l.b16 %v2331
        %v2467 = vunpack.c.l.b16 %v2332
        %v2468 = vunpack.c.l.b16 %v2333
        %v2469 = vunpack.c.l.b16 %v2334
        %v2470 = vunpack.c.l.b16 %v2335
        %v2471 = vunpack.c.l.b16 %v2336
        %v2472 = vunpack.c.l.b16 %v2337
        %v2473 = vunpack.c.l.b16 %v2338
        %v2474 = vunpack.c.l.b16 %v2339
        %v2475 = vunpack.c.l.b16 %v2340
        %v2476 = vunpack.c.l.b16 %v2341
        %v2477 = vunpack.c.l.b16 %v2342
        %v2478 = vunpack.c.l.b16 %v2343
        %v2479 = vunpack.c.l.b16 %v2344
        %v2480 = vunpack.c.l.b16 %v2345
        %v2481 = vunpack.c.l.b16 %v2346
        %v2482 = vunpack.c.l.b16 %v2347
        %v2483 = vunpack.c.l.b16 %v2348
        %v2484 = vunpack.c.l.b16 %v2349
        %v2485 = vunpack.c.l.b16 %v2350
        %v2486 = vunpack.c.l.b16 %v2351
        %v2487 = vunpack.c.l.b16 %v2352
        %v2488 = vunpack.c.l.b16 %v2353
        %v2489 = vunpack.c.l.b16 %v2354
        %v2490 = vunpack.c.l.b16 %v2355
        %v2491 = vunpack.c.l.b16 %v2356
        %v2492 = vunpack.c.l.b16 %v2357
        %v2493 = vunpack.c.l.b16 %v2358
        %v2494 = vunpack.c.l.b16 %v2359
        %v2495 = vunpack.c.l.b16 %v2360
        %v2496 = vunpack.c.l.b16 %v2361
        %v2497 = vunpack.c.l.b16 %v2362
        %v2498 = vunpack.c.l.b16 %v2363
        %v2499 = vunpack.c.l.b16 %v2364
        %v2500 = vunpack.c.l.b16 %v2365
        %v2501 = vunpack.c.l.b16 %v2366
        %v2502 = vunpack.c.l.b16 %v2367
        %v2503 = vunpack.c.l.b16 %v2368
        %v2504 = vunpack.c.l.b16 %v2369
        %v2505 = vunpack.c.l.b16 %v2370
        %v2506 = vunpack.c.l.b16 %v2371
        %v2507 = vunpack.c.l.b16 %v2372
        %v2508 = vunpack.c.l.b16 %v2373
        %v2509 = vunpack.c.l.b16 %v2374
        %v2510 = vunpack.c.l.b16 %v2375
        %v2511 = vunpack.c.l.b16 %v2376
        %v2512 = vunpack.c.l.b16 %v2377
        %v2513 = vunpack.c.l.b16 %v2378
        %v2514 = vunpack.c.l.b16 %v2379
        %v2515 = vunpack.c.l.b16 %v2380
        %v2516 = vunpack.c.l.b16 %v2381
        %v2517 = vunpack.c.l.b16 %v2382
        %v2518 = vunpack.c.l.b16 %v2383
        %v2519 = vunpack.c.l.b16 %v2384
        %v2520 = vunpack.c.l.b16 %v2385
        %v2521 = vunpack.c.l.b16 %v2386
        %v2522 = vpack.c.b16 %v2459, %v2458
        %v2523 = vpack.c.b16 %v2461, %v2460
        %v2524 = vpack.c.b16 %v2463, %v2462
        %v2525 = vpack.c.b16 %v2465, %v2464
        %v2526 = vpack.c.b16 %v2467, %v2466
        %v2527 = vpack.c.b16 %v2469, %v2468
        %v2528 = vpack.c.b16 %v2471, %v2470
        %v2529 = vpack.c.b16 %v2473, %v2472
        %v2530 = vpack.c.b16 %v2475, %v2474
        %v2531 = vpack.c.b16 %v2477, %v2476
        %v2532 = vpack.c.b16 %v2479, %v2478
        %v2533 = vpack.c.b16 %v2481, %v2480
        %v2534 = vpack.c.b16 %v2483, %v2482
        %v2535 = vpack.c.b16 %v2485, %v2484
        %v2536 = vpack.c.b16 %v2487, %v2486
        %v2537 = vpack.c.b16 %v2489, %v2488
        %v2538 = vpack.c.b16 %v2491, %v2490
        %v2539 = vpack.c.b16 %v2493, %v2492
        %v2540 = vpack.c.b16 %v2495, %v2494
        %v2541 = vpack.c.b16 %v2497, %v2496
        %v2542 = vpack.c.b16 %v2499, %v2498
        %v2543 = vpack.c.b16 %v2501, %v2500
        %v2544 = vpack.c.b16 %v2503, %v2502
        %v2545 = vpack.c.b16 %v2505, %v2504
        %v2546 = vpack.c.b16 %v2507, %v2506
        %v2547 = vpack.c.b16 %v2509, %v2508
        %v2548 = vpack.c.b16 %v2511, %v2510
        %v2549 = vpack.c.b16 %v2513, %v2512
        %v2550 = vpack.c.b16 %v2515, %v2514
        %v2551 = vpack.c.b16 %v2517, %v2516
        %v2552 = vpack.c.b16 %v2519, %v2518
        %v2553 = vpack.c.b16 %v2521, %v2520
        %2586 = vmatprep.subr.bf16.mxu0 0
        %2587 = vmatpush1.bf16.msra.mxu0 %v2522
        %2588 = vmatprep.subr.bf16.mxu0 0
        %2589 = vmatpush1.bf16.msra.mxu0 %v2523
        %2590 = vmatprep.subr.bf16.mxu0 0
        %2591 = vmatpush1.bf16.msra.mxu0 %v2524
        %2592 = vmatprep.subr.bf16.mxu0 0
        %2593 = vmatpush1.bf16.msra.mxu0 %v2525
        %2594 = vmatprep.subr.bf16.mxu0 0
        %2595 = vmatpush1.bf16.msra.mxu0 %v2526
        %2596 = vmatprep.subr.bf16.mxu0 0
        %2597 = vmatpush1.bf16.msra.mxu0 %v2527
        %2598 = vmatprep.subr.bf16.mxu0 0
        %2599 = vmatpush1.bf16.msra.mxu0 %v2528
        %2600 = vmatprep.subr.bf16.mxu0 0
        %2601 = vmatpush1.bf16.msra.mxu0 %v2529
        %2602 = vmatprep.subr.bf16.mxu0 0
        %2603 = vmatpush1.bf16.msra.mxu0 %v2530
        %2604 = vmatprep.subr.bf16.mxu0 0
        %2605 = vmatpush1.bf16.msra.mxu0 %v2531
        %2606 = vmatprep.subr.bf16.mxu0 0
        %2607 = vmatpush1.bf16.msra.mxu0 %v2532
        %2608 = vmatprep.subr.bf16.mxu0 0
        %2609 = vmatpush1.bf16.msra.mxu0 %v2533
        %2610 = vmatprep.subr.bf16.mxu0 0
        %2611 = vmatpush1.bf16.msra.mxu0 %v2534
        %2612 = vmatprep.subr.bf16.mxu0 0
        %2613 = vmatpush1.bf16.msra.mxu0 %v2535
        %2614 = vmatprep.subr.bf16.mxu0 0
        %2615 = vmatpush1.bf16.msra.mxu0 %v2536
        %2616 = vmatprep.subr.bf16.mxu0 0
        %2617 = vmatpush1.bf16.msra.mxu0 %v2537
        %2618 = vmatprep.mubr.bf16.mxu0 %v2320
        %2619 = vmatmul.mubr.bf16.gmra.mrb[0].mxu0 %v2319
        %v2620 = vpop.f32.mrb[0].mxu0
        %v2621 = vadd.f32 %v2392, %v2620
        %v2622 = vpop.f32.mrb[0].mxu0
        %v2623 = vpop.f32.mrb[0].mxu0
        %v2624 = vpop.f32.mrb[0].mxu0
        %2625 = vdwg.mxu0
        %2626 = vmatprep.subr.bf16.mxu0 0
        %2627 = vmatpush1.bf16.msra.mxu0 %v2538
        %2628 = vmatprep.subr.bf16.mxu0 0
        %2629 = vmatpush1.bf16.msra.mxu0 %v2539
        %2630 = vmatprep.subr.bf16.mxu0 0
        %2631 = vmatpush1.bf16.msra.mxu0 %v2540
        %2632 = vmatprep.subr.bf16.mxu0 0
        %2633 = vmatpush1.bf16.msra.mxu0 %v2541
        %2634 = vmatprep.subr.bf16.mxu0 0
        %2635 = vmatpush1.bf16.msra.mxu0 %v2542
        %2636 = vmatprep.subr.bf16.mxu0 0
        %2637 = vmatpush1.bf16.msra.mxu0 %v2543
        %2638 = vmatprep.subr.bf16.mxu0 0
        %2639 = vmatpush1.bf16.msra.mxu0 %v2544
        %2640 = vmatprep.subr.bf16.mxu0 0
        %2641 = vmatpush1.bf16.msra.mxu0 %v2545
        %2642 = vmatprep.subr.bf16.mxu0 0
        %2643 = vmatpush1.bf16.msra.mxu0 %v2546
        %2644 = vmatprep.subr.bf16.mxu0 0
        %2645 = vmatpush1.bf16.msra.mxu0 %v2547
        %2646 = vmatprep.subr.bf16.mxu0 0
        %2647 = vmatpush1.bf16.msra.mxu0 %v2548
        %2648 = vmatprep.subr.bf16.mxu0 0
        %2649 = vmatpush1.bf16.msra.mxu0 %v2549
        %2650 = vmatprep.subr.bf16.mxu0 0
        %2651 = vmatpush1.bf16.msra.mxu0 %v2550
        %2652 = vmatprep.subr.bf16.mxu0 0
        %2653 = vmatpush1.bf16.msra.mxu0 %v2551
        %2654 = vmatprep.subr.bf16.mxu0 0
        %2655 = vmatpush1.bf16.msra.mxu0 %v2552
        %2656 = vmatprep.subr.bf16.mxu0 0
        %2657 = vmatpush1.bf16.msra.mxu0 %v2553
        %2658 = vmatprep.mubr.bf16.mxu0 %v2322
        %2659 = vmatmul.mubr.bf16.gmra.mrb[0].mxu0 %v2321
        %v2660 = vpop.f32.mrb[0].mxu0
        %v2661 = vadd.f32 %v2621, %v2660
        %v2662 = vpop.f32.mrb[0].mxu0
        %v2663 = vpop.f32.mrb[0].mxu0
        %v2664 = vpop.f32.mrb[0].mxu0
        %2665 = vdwg.mxu0
        %v2666 = vadd.f32 %v1974, %v2661
        %2667 = vst [vmem:[%s486] sm:$0xff] %v2666
        %s2668 = sand.u32 %s296, 1
        %s2669 = scalar_lea.sflag [#allocation4], %s2668
        %s2670 = sand.u32 %s296, 1
        %s2671 = smul.addr %s2670, 8
        %s2672 = scalar_lea.vmem [#allocation11], %s2671
        // Predicated region
        $region89: #{tpu_custom_call.1} parent=67 // pred_check
          %p2673 = pneg %p306
        $region90: #{tpu_custom_call.1} parent=67 // pred_check_branch
          %2675 = sbr.rel (%p2673) target = $region92
        $region91: #{tpu_custom_call.1} parent=67 // pred_region
          %s2677 = ssub.s32 128, 128
          %2678 = vsyncadd %s2669, %s2677
          %s2679 = smul.addr %s31, 128
          %s2680 = scalar_lea.hbm %s12, %s2679
          %s2682 = sshll.u32 %s2672, 4
          %s2683 = int_to_ptr.vmem [resolvable:$true] %s2682
          %2685 = dma.vmem_to_hbm [thread:$0]  %s2683, 128, %s2680, %s2669
        $region92: #{tpu_custom_call.1} parent=67 // pred_fallthru
          _
      $region68: #{tpu_custom_call.1} parent=5 // pred_fallthru
        _
      %p2686 = scmp.le.s32.totalorder 2, %s26
      // Predicated region
      $region93: #{tpu_custom_call.1} parent=5 // pred_check
        %p2687 = pneg %p2686
      $region94: #{tpu_custom_call.1} parent=5 // pred_check_branch
        %2689 = sbr.rel (%p2687) target = $region96
      $region95: #{tpu_custom_call.1} parent=5 // pred_region
        %s2690 = ssub.s32 %s26, 2
        // Predicated region
        $region97: #{tpu_custom_call.1} parent=95 // pred_check
          %p2691 = pneg %p312
        $region98: #{tpu_custom_call.1} parent=95 // pred_check_branch
          %2693 = sbr.rel (%p2691) target = $region100
        $region99: #{tpu_custom_call.1} parent=95 // pred_region
          %s2694 = sand.u32 %s297, 1
          %s2695 = scalar_lea.sflag [#allocation4], %s2694
          %s2696 = sand.u32 %s297, 1
          %s2697 = smul.addr %s2696, 8
          %s2698 = scalar_lea.vmem [#allocation11], %s2697
          %2699 = dma.done %s2695, 128
        $region100: #{tpu_custom_call.1} parent=95 // pred_fallthru
          _
      $region96: #{tpu_custom_call.1} parent=5 // pred_fallthru
        _
    $region6: #{tpu_custom_call.1} parent=1 // loop_footer
      %s30 = sadd.s32 1, %s26
    $region7: #{tpu_custom_call.1} parent=1 // loop_footer_branch
      %25 = sbr.rel target = $region3
    $region8: #{tpu_custom_call.1} parent=1 // loop_exit
      _
    %2700 = vsyncpa [#allocation3], 1
    %s2701 = scalar_lea.sflag [#allocation3], 1
    %2702 = vsyncpa %s2701, 1
    %2703 = vsyncpa [#allocation6], 1
    %2704 = vsyncpa [#allocation9], 1
    %2705 = vsyncpa [#allocation4], 1
    %s2706 = scalar_lea.sflag [#allocation4], 1
    %2707 = vsyncpa %s2706, 1

</llo_original>
